<compile_context>
chip_gen: v7x
topology: tpu7x:2x2x1
jax: 0.10.0
libtpu: 0.0.40
codegen_flags: <defaults>
</compile_context>

<pallas_src>
import functools

import jax
import jax.numpy as jnp
from jax import lax
from jax.experimental import pallas as pl
from jax.experimental.pallas import tpu as pltpu


def _round_up(a: int, b: int) -> int:
    return ((a + b - 1) // b) * b


def _fused_forward_kernel(x_ref, w1_ref, b1_ref, w2_ref, b2_ref, w3_ref, b3_ref,
                          o_ref, acc_ref, *, rem, ragged):
    """K-streamed x@W1^T accumulation + fully fused epilogue on the last step."""
    k = pl.program_id(0)
    nk = pl.num_programs(0)

    @pl.when(k == 0)
    def _():
        acc_ref[...] = jnp.zeros_like(acc_ref)

    def accumulate(w_tile, x_tile):
        # (H, tk) contract (B, tk) -> (H, B); only the small x tile needs an
        # XLU transpose for the MXU.  bf16 operands, f32 accumulation.
        acc_ref[...] += lax.dot_general(
            w_tile, x_tile,
            dimension_numbers=(((1,), (1,)), ((), ())),
            preferred_element_type=jnp.float32)

    if ragged:
        @pl.when(k < nk - 1)
        def _():
            accumulate(w1_ref[...], x_ref[...].astype(jnp.bfloat16))

        @pl.when(k == nk - 1)
        def _():
            # Columns >= rem of the last block are undefined (past D_in):
            # zero them with a select (not a multiply, in case the stale VMEM
            # holds NaN/Inf bit patterns).
            col_x = lax.broadcasted_iota(jnp.int32, x_ref.shape, 1)
            x_t = jnp.where(col_x < rem, x_ref[...], 0.0).astype(jnp.bfloat16)
            col_w = lax.broadcasted_iota(jnp.int32, w1_ref.shape, 1)
            w_t = jnp.where(col_w < rem, w1_ref[...],
                            jnp.zeros(w1_ref.shape, w1_ref.dtype))
            accumulate(w_t, x_t)
    else:
        accumulate(w1_ref[...], x_ref[...].astype(jnp.bfloat16))

    @pl.when(k == nk - 1)
    def _():
        # Fused epilogue in transposed (features, batch) space: only canonical
        # (M,K)x(K,N) matmuls, no transposes of large operands.
        h1 = jnp.maximum(acc_ref[...] + b1_ref[...], 0.0)               # (H, B)
        h2 = jnp.dot(w2_ref[...], h1,
                     preferred_element_type=jnp.float32) + b2_ref[...]  # (H, B)
        h2 = jnp.maximum(h2, 0.0)
        logits = jnp.dot(w3_ref[...], h2,
                         preferred_element_type=jnp.float32) + b3_ref[...]  # (O, B)
        o_ref[...] = jax.nn.sigmoid(logits).astype(o_ref.dtype)


def prepare_params(w1, b1, w2, b2, w3, b3):
    """One-time weight prep (call ONCE, outside the jitted forward):
    convert the big W1 to bf16 for streaming and make biases column vectors."""
    return {
        "w1": w1.astype(jnp.bfloat16),                 # (H, D_in), streamed
        "b1": b1.reshape(-1, 1).astype(jnp.float32),   # (H, 1)
        "w2": w2.astype(jnp.float32),                  # (H, H)  PyTorch (out, in)
        "b2": b2.reshape(-1, 1).astype(jnp.float32),   # (H, 1)
        "w3": w3.astype(jnp.float32),                  # (O, H)  PyTorch (out, in)
        "b3": b3.reshape(-1, 1).astype(jnp.float32),   # (O, 1)
    }


@functools.partial(jax.jit, static_argnames=("tk",))
def net_forward(x, params, *, tk=32768):
    """x: (B, D_in) float32; params from prepare_params (PyTorch weight layouts)."""
    w1, b1 = params["w1"], params["b1"]
    w2, b2 = params["w2"], params["b2"]
    w3, b3 = params["w3"], params["b3"]

    B, D_in = x.shape
    H = w1.shape[0]
    O = w3.shape[0]
    assert w1.shape == (H, D_in), "w1 must be (out_features, in_features)"

    # K tile: 128-aligned, never larger than the 128-aligned floor of D_in so
    # a block never exceeds the array; the ragged tail is masked in-kernel.
    tk_cap = max(128, (D_in // 128) * 128)
    tk_eff = min(_round_up(tk, 128), tk_cap)
    steps = pl.cdiv(D_in, tk_eff)
    rem = D_in - (steps - 1) * tk_eff        # valid columns in the last block
    ragged = rem != tk_eff

    kernel = functools.partial(_fused_forward_kernel, rem=rem, ragged=ragged)

    itemsize = jnp.dtype(x.dtype).itemsize
    cost = pl.CostEstimate(
        flops=int(2 * B * D_in * H + 2 * B * H * H + 2 * B * H * O),
        transcendentals=int(B * O),
        bytes_accessed=int(x.size * itemsize
                           + w1.size * jnp.dtype(w1.dtype).itemsize
                           + (w2.size + w3.size + b1.size + b2.size + b3.size) * 4
                           + B * O * 4))

    out_t = pl.pallas_call(
        kernel,
        out_shape=jax.ShapeDtypeStruct((O, B), jnp.float32),
        grid_spec=pltpu.PrefetchScalarGridSpec(
            num_scalar_prefetch=0,
            grid=(steps,),
            in_specs=[
                pl.BlockSpec((B, tk_eff), lambda k: (0, k)),   # x, K-streamed
                pl.BlockSpec((H, tk_eff), lambda k: (0, k)),   # W1 (bf16), K-streamed
                pl.BlockSpec((H, 1), lambda k: (0, 0)),        # b1
                pl.BlockSpec((H, H), lambda k: (0, 0)),        # W2
                pl.BlockSpec((H, 1), lambda k: (0, 0)),        # b2
                pl.BlockSpec((O, H), lambda k: (0, 0)),        # W3
                pl.BlockSpec((O, 1), lambda k: (0, 0)),        # b3
            ],
            out_specs=pl.BlockSpec((O, B), lambda k: (0, 0)),
            scratch_shapes=[pltpu.VMEM((H, B), jnp.float32)],  # resident acc
        ),
        compiler_params=pltpu.CompilerParams(
            dimension_semantics=("arbitrary",),
            vmem_limit_bytes=32 * 1024 * 1024),
        cost_estimate=cost,
    )(x, w1, b1, w2, b2, w3, b3)

    return out_t.T                                             # (B, O)


def reference_forward(x, w1, b1, w2, b2, w3, b3):
    h1 = jnp.maximum(x @ w1.T + b1, 0.0)
    h2 = jnp.maximum(h1 @ w2.T + b2, 0.0)
    return jax.nn.sigmoid(h2 @ w3.T + b3)


if __name__ == "__main__":
    # Small shapes consistent with the module structure
    # (real module: input_size=451632, hidden_size=64, output_size=2).
    B = 8
    D_IN = 3000   # small stand-in for input_size; deliberately NOT a multiple
                  # of 128 so the masked ragged-K-tail path is exercised.
    H = 64        # hidden_size
    O = 2         # output_size

    key = jax.random.PRNGKey(0)
    kx, k1, kb1, k2, kb2, k3, kb3 = jax.random.split(key, 7)

    def uinit(k, shape, fan_in):
        bound = 1.0 / jnp.sqrt(jnp.float32(fan_in))
        return jax.random.uniform(k, shape, jnp.float32, -bound, bound)

    x = jax.random.normal(kx, (B, D_IN), dtype=jnp.float32)
    w1 = uinit(k1, (H, D_IN), D_IN)      # PyTorch (out, in) layout
    b1 = uinit(kb1, (H,), D_IN)
    w2 = uinit(k2, (H, H), H)            # PyTorch (out, in) layout
    b2 = uinit(kb2, (H,), H)
    w3 = uinit(k3, (O, H), H)            # PyTorch (out, in) layout
    b3 = uinit(kb3, (O,), H)

    params = prepare_params(w1, b1, w2, b2, w3, b3)   # one-time bf16 W1 convert

    out = net_forward(x, params)
    out = jax.block_until_ready(out)
    assert out.shape == (B, O)

    # bf16 W1 streaming (f32 accumulation) -> intentionally relaxed tolerance
    # versus the all-f32 reference.
    ref = reference_forward(x, w1, b1, w2, b2, w3, b3)
    assert jnp.allclose(out, ref, atol=1e-2, rtol=1e-2), (
        "mismatch vs reference: max abs err = "
        f"{float(jnp.max(jnp.abs(out - ref)))}")

    print("KERNEL_OK")
</pallas_src>

<mosaic_0001>
module attributes {stable_mosaic.version = 11 : i64} {
  func.func @_fused_forward_kernel(%arg0: i32, %arg1: memref<8x2944xf32, #tpu.memory_space<vmem>>, %arg2: memref<64x2944xbf16, #tpu.memory_space<vmem>>, %arg3: memref<64x1xf32, #tpu.memory_space<vmem>>, %arg4: memref<64x64xf32, #tpu.memory_space<vmem>>, %arg5: memref<64x1xf32, #tpu.memory_space<vmem>>, %arg6: memref<2x64xf32, #tpu.memory_space<vmem>>, %arg7: memref<2x1xf32, #tpu.memory_space<vmem>>, %arg8: memref<2x8xf32, #tpu.memory_space<vmem>>, %arg9: memref<64x8xf32, #tpu.memory_space<vmem>>) attributes {dimension_semantics = [#tpu.dimension_semantics<arbitrary>], iteration_bounds = array<i64: 2>, scalar_prefetch = 0 : i64, scratch_operands = 1 : i64, tpu.core_type = #tpu.core_type<tc>, window_params = [{transform_indices = @transform_0, window_bounds = array<i64: 8, 2944>}, {transform_indices = @transform_1, window_bounds = array<i64: 64, 2944>}, {pipeline_mode = #tpu.pipeline_mode<synchronous>, transform_indices = @transform_2, window_bounds = array<i64: 64, 1>}, {pipeline_mode = #tpu.pipeline_mode<synchronous>, transform_indices = @transform_3, window_bounds = array<i64: 64, 64>}, {pipeline_mode = #tpu.pipeline_mode<synchronous>, transform_indices = @transform_4, window_bounds = array<i64: 64, 1>}, {pipeline_mode = #tpu.pipeline_mode<synchronous>, transform_indices = @transform_5, window_bounds = array<i64: 2, 64>}, {pipeline_mode = #tpu.pipeline_mode<synchronous>, transform_indices = @transform_6, window_bounds = array<i64: 2, 1>}, {pipeline_mode = #tpu.pipeline_mode<synchronous>, transform_indices = @transform_7, window_bounds = array<i64: 2, 8>}]} {
    %c0_i32 = arith.constant 0 : i32
    %0 = arith.cmpi eq, %arg0, %c0_i32 : i32
    %1 = arith.extui %0 : i1 to i32
    %c0_i32_0 = arith.constant 0 : i32
    %2 = arith.cmpi ne, %1, %c0_i32_0 : i32
    scf.if %2 {
      %cst = arith.constant 0.000000e+00 : f32
      %12 = vector.broadcast %cst : f32 to vector<64x8xf32>
      %c0 = arith.constant 0 : index
      %c0_6 = arith.constant 0 : index
      %13 = vector.load %arg9[%c0, %c0_6] : memref<64x8xf32, #tpu.memory_space<vmem>>, vector<64x8xf32>
      tpu.vector_store %arg9[%c0, %c0_6], %12 {strides = array<i32>} : memref<64x8xf32, #tpu.memory_space<vmem>>, vector<64x8xf32>,
    } else {
    }
    %c1_i32 = arith.constant 1 : i32
    %3 = arith.cmpi slt, %arg0, %c1_i32 : i32
    %4 = arith.extui %3 : i1 to i32
    %c0_i32_1 = arith.constant 0 : i32
    %5 = arith.cmpi ne, %4, %c0_i32_1 : i32
    scf.if %5 {
      %c0 = arith.constant 0 : index
      %c0_6 = arith.constant 0 : index
      %12 = vector.load %arg2[%c0, %c0_6] : memref<64x2944xbf16, #tpu.memory_space<vmem>>, vector<64x2944xbf16>
      %c0_7 = arith.constant 0 : index
      %c0_8 = arith.constant 0 : index
      %13 = vector.load %arg1[%c0_7, %c0_8] : memref<8x2944xf32, #tpu.memory_space<vmem>>, vector<8x2944xf32>
      %14 = arith.truncf %13 : vector<8x2944xf32> to vector<8x2944xbf16>
      %c0_9 = arith.constant 0 : index
      %c0_10 = arith.constant 0 : index
      %15 = vector.load %arg9[%c0_9, %c0_10] : memref<64x8xf32, #tpu.memory_space<vmem>>, vector<64x8xf32>
      %cst = arith.constant dense<0.000000e+00> : vector<64x8xf32>
      %16 = tpu.matmul %12, %14, %cst {dimension_numbers = #tpu.dot_dimension_numbers<[1], [1], [0], [0], [0, 0, 1, 0], [], []>} : vector<64x2944xbf16>, vector<8x2944xbf16>, vector<64x8xf32> -> vector<64x8xf32>
      %17 = arith.addf %15, %16 : vector<64x8xf32>
      %c0_11 = arith.constant 0 : index
      %c0_12 = arith.constant 0 : index
      %18 = vector.load %arg9[%c0_11, %c0_12] : memref<64x8xf32, #tpu.memory_space<vmem>>, vector<64x8xf32>
      tpu.vector_store %arg9[%c0_11, %c0_12], %17 {strides = array<i32>} : memref<64x8xf32, #tpu.memory_space<vmem>>, vector<64x8xf32>,
    } else {
    }
    %c1_i32_2 = arith.constant 1 : i32
    %6 = arith.cmpi eq, %arg0, %c1_i32_2 : i32
    %7 = arith.extui %6 : i1 to i32
    %c0_i32_3 = arith.constant 0 : i32
    %8 = arith.cmpi ne, %7, %c0_i32_3 : i32
    scf.if %8 {
      %12 = tpu.iota {dimensions = array<i32: 1>} : vector<8x2944xi32>
      %c56_i32 = arith.constant 56 : i32
      %13 = vector.broadcast %c56_i32 : i32 to vector<8x2944xi32>
      %14 = arith.cmpi slt, %12, %13 : vector<8x2944xi32>
      %c0 = arith.constant 0 : index
      %c0_6 = arith.constant 0 : index
      %15 = vector.load %arg1[%c0, %c0_6] : memref<8x2944xf32, #tpu.memory_space<vmem>>, vector<8x2944xf32>
      %cst = arith.constant 0.000000e+00 : f32
      %16 = vector.broadcast %cst : f32 to vector<8x2944xf32>
      %17 = arith.select %14, %15, %16 : vector<8x2944xi1>, vector<8x2944xf32>
      %18 = arith.truncf %17 : vector<8x2944xf32> to vector<8x2944xbf16>
      %19 = tpu.iota {dimensions = array<i32: 1>} : vector<64x2944xi32>
      %c56_i32_7 = arith.constant 56 : i32
      %20 = vector.broadcast %c56_i32_7 : i32 to vector<64x2944xi32>
      %21 = arith.cmpi slt, %19, %20 : vector<64x2944xi32>
      %c0_8 = arith.constant 0 : index
      %c0_9 = arith.constant 0 : index
      %22 = vector.load %arg2[%c0_8, %c0_9] : memref<64x2944xbf16, #tpu.memory_space<vmem>>, vector<64x2944xbf16>
      %cst_10 = arith.constant 0.000000e+00 : bf16
      %23 = vector.broadcast %cst_10 : bf16 to vector<64x2944xbf16>
      %24 = arith.select %21, %22, %23 : vector<64x2944xi1>, vector<64x2944xbf16>
      %c0_11 = arith.constant 0 : index
      %c0_12 = arith.constant 0 : index
      %25 = vector.load %arg9[%c0_11, %c0_12] : memref<64x8xf32, #tpu.memory_space<vmem>>, vector<64x8xf32>
      %cst_13 = arith.constant dense<0.000000e+00> : vector<64x8xf32>
      %26 = tpu.matmul %24, %18, %cst_13 {dimension_numbers = #tpu.dot_dimension_numbers<[1], [1], [0], [0], [0, 0, 1, 0], [], []>} : vector<64x2944xbf16>, vector<8x2944xbf16>, vector<64x8xf32> -> vector<64x8xf32>
      %27 = arith.addf %25, %26 : vector<64x8xf32>
      %c0_14 = arith.constant 0 : index
      %c0_15 = arith.constant 0 : index
      %28 = vector.load %arg9[%c0_14, %c0_15] : memref<64x8xf32, #tpu.memory_space<vmem>>, vector<64x8xf32>
      tpu.vector_store %arg9[%c0_14, %c0_15], %27 {strides = array<i32>} : memref<64x8xf32, #tpu.memory_space<vmem>>, vector<64x8xf32>,
    } else {
    }
    %c1_i32_4 = arith.constant 1 : i32
    %9 = arith.cmpi eq, %arg0, %c1_i32_4 : i32
    %10 = arith.extui %9 : i1 to i32
    %c0_i32_5 = arith.constant 0 : i32
    %11 = arith.cmpi ne, %10, %c0_i32_5 : i32
    scf.if %11 {
      %c0 = arith.constant 0 : index
      %c0_6 = arith.constant 0 : index
      %12 = vector.load %arg9[%c0, %c0_6] : memref<64x8xf32, #tpu.memory_space<vmem>>, vector<64x8xf32>
      %c0_7 = arith.constant 0 : index
      %c0_8 = arith.constant 0 : index
      %13 = vector.load %arg3[%c0_7, %c0_8] : memref<64x1xf32, #tpu.memory_space<vmem>>, vector<64x1xf32>
      %14 = vector.broadcast %13 : vector<64x1xf32> to vector<64x8xf32>
      %15 = arith.addf %12, %14 : vector<64x8xf32>
      %cst = arith.constant 0.000000e+00 : f32
      %16 = vector.broadcast %cst : f32 to vector<64x8xf32>
      %17 = arith.maximumf %15, %16 : vector<64x8xf32>
      %c0_9 = arith.constant 0 : index
      %c0_10 = arith.constant 0 : index
      %18 = vector.load %arg4[%c0_9, %c0_10] : memref<64x64xf32, #tpu.memory_space<vmem>>, vector<64x64xf32>
      %cst_11 = arith.constant dense<0.000000e+00> : vector<64x8xf32>
      %19 = tpu.matmul %18, %17, %cst_11 {dimension_numbers = #tpu.dot_dimension_numbers<[1], [0], [0], [1], [0, 0, 1, 1], [], []>} : vector<64x64xf32>, vector<64x8xf32>, vector<64x8xf32> -> vector<64x8xf32>
      %c0_12 = arith.constant 0 : index
      %c0_13 = arith.constant 0 : index
      %20 = vector.load %arg5[%c0_12, %c0_13] : memref<64x1xf32, #tpu.memory_space<vmem>>, vector<64x1xf32>
      %21 = vector.broadcast %20 : vector<64x1xf32> to vector<64x8xf32>
      %22 = arith.addf %19, %21 : vector<64x8xf32>
      %cst_14 = arith.constant 0.000000e+00 : f32
      %23 = vector.broadcast %cst_14 : f32 to vector<64x8xf32>
      %24 = arith.maximumf %22, %23 : vector<64x8xf32>
      %c0_15 = arith.constant 0 : index
      %c0_16 = arith.constant 0 : index
      %25 = vector.load %arg6[%c0_15, %c0_16] : memref<2x64xf32, #tpu.memory_space<vmem>>, vector<2x64xf32>
      %cst_17 = arith.constant dense<0.000000e+00> : vector<2x8xf32>
      %26 = tpu.matmul %25, %24, %cst_17 {dimension_numbers = #tpu.dot_dimension_numbers<[1], [0], [0], [1], [0, 0, 1, 1], [], []>} : vector<2x64xf32>, vector<64x8xf32>, vector<2x8xf32> -> vector<2x8xf32>
      %c0_18 = arith.constant 0 : index
      %c0_19 = arith.constant 0 : index
      %27 = vector.load %arg7[%c0_18, %c0_19] : memref<2x1xf32, #tpu.memory_space<vmem>>, vector<2x1xf32>
      %28 = vector.broadcast %27 : vector<2x1xf32> to vector<2x8xf32>
      %29 = arith.addf %26, %28 : vector<2x8xf32>
      %30 = arith.negf %29 : vector<2x8xf32>
      %31 = math.exp %30 : vector<2x8xf32>
      %cst_20 = arith.constant 1.000000e+00 : f32
      %32 = vector.broadcast %cst_20 : f32 to vector<2x8xf32>
      %33 = arith.addf %32, %31 : vector<2x8xf32>
      %34 = arith.divf %32, %33 : vector<2x8xf32>
      %c0_21 = arith.constant 0 : index
      %c0_22 = arith.constant 0 : index
      %35 = vector.load %arg8[%c0_21, %c0_22] : memref<2x8xf32, #tpu.memory_space<vmem>>, vector<2x8xf32>
      tpu.vector_store %arg8[%c0_21, %c0_22], %34 {strides = array<i32>} : memref<2x8xf32, #tpu.memory_space<vmem>>, vector<2x8xf32>,
    } else {
    }
    return
  }
  func.func @transform_0(%arg0: i32) -> (i32, i32) {
    %c0_i32 = arith.constant 0 : i32
    %c0_i32_0 = arith.constant 0 : i32
    return %c0_i32, %arg0 : i32, i32
  }
  func.func @transform_1(%arg0: i32) -> (i32, i32) {
    %c0_i32 = arith.constant 0 : i32
    %c0_i32_0 = arith.constant 0 : i32
    return %c0_i32, %arg0 : i32, i32
  }
  func.func @transform_2(%arg0: i32) -> (i32, i32) {
    %c0_i32 = arith.constant 0 : i32
    %c0_i32_0 = arith.constant 0 : i32
    %c0_i32_1 = arith.constant 0 : i32
    return %c0_i32, %c0_i32_0 : i32, i32
  }
  func.func @transform_3(%arg0: i32) -> (i32, i32) {
    %c0_i32 = arith.constant 0 : i32
    %c0_i32_0 = arith.constant 0 : i32
    %c0_i32_1 = arith.constant 0 : i32
    return %c0_i32, %c0_i32_0 : i32, i32
  }
  func.func @transform_4(%arg0: i32) -> (i32, i32) {
    %c0_i32 = arith.constant 0 : i32
    %c0_i32_0 = arith.constant 0 : i32
    %c0_i32_1 = arith.constant 0 : i32
    return %c0_i32, %c0_i32_0 : i32, i32
  }
  func.func @transform_5(%arg0: i32) -> (i32, i32) {
    %c0_i32 = arith.constant 0 : i32
    %c0_i32_0 = arith.constant 0 : i32
    %c0_i32_1 = arith.constant 0 : i32
    return %c0_i32, %c0_i32_0 : i32, i32
  }
  func.func @transform_6(%arg0: i32) -> (i32, i32) {
    %c0_i32 = arith.constant 0 : i32
    %c0_i32_0 = arith.constant 0 : i32
    %c0_i32_1 = arith.constant 0 : i32
    return %c0_i32, %c0_i32_0 : i32, i32
  }
  func.func @transform_7(%arg0: i32) -> (i32, i32) {
    %c0_i32 = arith.constant 0 : i32
    %c0_i32_0 = arith.constant 0 : i32
    %c0_i32_1 = arith.constant 0 : i32
    return %c0_i32, %c0_i32_0 : i32, i32
  }
}

</mosaic_0001>

<llo_original>
// kernel: net_forward.1
$region0: #{net_forward.1}
  #allocation0 [shape = 'u32[]', space=smem, size = 0x4, offset = 0x4, fixed_abs, tag = 'smem constant byte address 0x4 - core index']
  #allocation1 [shape = 'u32[144,128]{1,0:T(1,128)}', space=vmem, size = 0x12000, scoped, tag = 'internal scratch']
  #allocation2 [shape = 'f32[64,8]{1,0:T(8,128)}', space=vmem, size = 0x8000, scoped, tag = 'scratch operand']
  %s0 = inlined_call_operand.hbm [shape: f32[8,3000], index: 0, kind: input, shape index: {}]
  %s1 = inlined_call_operand.hbm [shape: bf16[64,3000], index: 1, kind: input, shape index: {}]
  %s2 = inlined_call_operand.vmem [shape: f32[64,1], index: 2, kind: input, shape index: {}]
  %s3 = inlined_call_operand.vmem [shape: f32[64,64], index: 3, kind: input, shape index: {}]
  %s4 = inlined_call_operand.vmem [shape: f32[64,1], index: 4, kind: input, shape index: {}]
  %s5 = inlined_call_operand.vmem [shape: f32[2,64], index: 5, kind: input, shape index: {}]
  %s6 = inlined_call_operand.vmem [shape: f32[2,1], index: 6, kind: input, shape index: {}]
  %s7 = inlined_call_operand.hbm [shape: f32[2,8], index: 7, kind: output, shape index: {}]
  %s8 = sld [smem:[#allocation0]]
  $region81: #{net_forward.1} parent=0
    _
  %s10 = ssub.s32 1, %s8
  %s11 = scalar_select 0, %s10, %s8
  $region1: #{net_forward.1} parent=0
    #allocation3 [shape = 'u8[188416]{0}', space=vmem, size = 0x2e000, scoped, tag = 'input window, operand 0']
    #allocation4 [shape = 's32[2]{0}', space=sflag, size = 0x8, scoped, tag = 'scoped memory for net_forward.1']
    #allocation5 [shape = 's32[2]{0}', space=sflag, size = 0x8, scoped, tag = 'scoped memory for net_forward.1']
    #allocation6 [shape = 'u8[753664]{0}', space=vmem, size = 0xb8000, scoped, tag = 'input window, operand 1']
    #allocation7 [shape = 's32[2]{0}', space=sflag, size = 0x8, scoped, tag = 'scoped memory for net_forward.1']
    #allocation8 [shape = 'u8[1024]{0}', space=vmem, size = 0x400, scoped, tag = 'output window, operand 0, single buffered']
    %12 = vsyncpa [#allocation4], 0
    %s13 = scalar_lea.sflag [#allocation4], 1
    %14 = vsyncpa %s13, 0
    %15 = vsyncpa [#allocation7], 0
    %s16 = scalar_lea.sflag [#allocation7], 1
    %17 = vsyncpa %s16, 0
    %18 = vsyncpa [#allocation5], 0
    loop: start=0, step=1, limit=4
    $region2: #{net_forward.1} parent=1 // loop_pre_header
      _
    $region3: #{net_forward.1} parent=1 // loop_header
      %s20 = sphi 0, %s24
      %p21 = scmp.ge.s32.totalorder %s20, 4
      %s30 = sphi 0, %s32
      %s33 = sphi 0, %s30
      %s34 = sphi 0, %s33
      %s50 = sphi 0, %s34
      %s56 = sphi 0, %s58
      %s59 = sphi 0, %s56
      %s60 = sphi 0, %s59
      %s76 = sphi 0, %s60
      %s80 = sphi 0, %s80
      %s82 = sphi 0, %s80
      %s83 = sphi 0, %s82
      %s97 = sphi 0, %s83
      %s101 = sphi 0, %s101
      %s103 = sphi 0, %s101
      %s104 = sphi 0, %s103
      %s118 = sphi 0, %s104
      %s122 = sphi 0, %s122
      %s124 = sphi 0, %s122
      %s125 = sphi 0, %s124
      %s139 = sphi 0, %s125
      %s143 = sphi 0, %s143
      %s145 = sphi 0, %s143
      %s146 = sphi 0, %s145
      %s160 = sphi 0, %s146
      %s164 = sphi 0, %s164
      %s166 = sphi 0, %s164
      %s167 = sphi 0, %s166
      %s181 = sphi 0, %s167
      %s185 = sphi 0, %s185
      %s187 = sphi 0, %s185
      %s188 = sphi 0, %s187
      %s202 = sphi 0, %s188
    $region4: #{net_forward.1} parent=1 // loop_header_branch
      %23 = sbr.rel (%p21) target = $region8
    $region5: #{net_forward.1} parent=1 // loop_body
      %s25 = ssub.s32 %s20, 1
      %s26 = ssub.s32 %s20, 2
      %s27 = sadd.s32 %s20, 1
      %s28 = ssub.s32 %s20, %s27
      %p29 = scmp.eq.s32.totalorder %s28, 0
      %s31 = sadd.s32 %s30, 1
      %s32 = scalar_select %p29, %s30, %s31
      %p35 = pneg %p29
      %p36 = scmp.eq.s32.totalorder %s20, 1
      %p37 = por %p35, %p36
      %p38 = scmp.ne.s32.totalorder %s30, %s33
      %p39 = scmp.eq.s32.totalorder %s20, 0
      %p40 = por %p38, %p39
      %p41 = scmp.ne.s32.totalorder %s30, %s33
      %p42 = scmp.eq.s32.totalorder %s25, 1
      %p43 = por %p41, %p42
      %p44 = scmp.ne.s32.totalorder %s33, %s34
      %p45 = scmp.eq.s32.totalorder %s25, 0
      %p46 = por %p44, %p45
      %p47 = scmp.ne.s32.totalorder %s33, %s34
      %p48 = scmp.eq.s32.totalorder %s26, 1
      %p49 = por %p47, %p48
      %p51 = scmp.ne.s32.totalorder %s34, %s50
      %p52 = scmp.eq.s32.totalorder %s26, 0
      %p53 = por %p51, %p52
      %s54 = ssub.s32 %s20, %s27
      %p55 = scmp.eq.s32.totalorder %s54, 0
      %s57 = sadd.s32 %s56, 1
      %s58 = scalar_select %p55, %s56, %s57
      %p61 = pneg %p55
      %p62 = scmp.eq.s32.totalorder %s20, 1
      %p63 = por %p61, %p62
      %p64 = scmp.ne.s32.totalorder %s56, %s59
      %p65 = scmp.eq.s32.totalorder %s20, 0
      %p66 = por %p64, %p65
      %p67 = scmp.ne.s32.totalorder %s56, %s59
      %p68 = scmp.eq.s32.totalorder %s25, 1
      %p69 = por %p67, %p68
      %p70 = scmp.ne.s32.totalorder %s59, %s60
      %p71 = scmp.eq.s32.totalorder %s25, 0
      %p72 = por %p70, %p71
      %p73 = scmp.ne.s32.totalorder %s59, %s60
      %p74 = scmp.eq.s32.totalorder %s26, 1
      %p75 = por %p73, %p74
      %p77 = scmp.ne.s32.totalorder %s60, %s76
      %p78 = scmp.eq.s32.totalorder %s26, 0
      %p79 = por %p77, %p78
      %s81 = sadd.s32 %s80, 1
      %p84 = scmp.eq.s32.totalorder %s20, 1
      %p85 = scmp.ne.s32.totalorder %s80, %s82
      %p86 = scmp.eq.s32.totalorder %s20, 0
      %p87 = por %p85, %p86
      %p88 = scmp.ne.s32.totalorder %s80, %s82
      %p89 = scmp.eq.s32.totalorder %s25, 1
      %p90 = por %p88, %p89
      %p91 = scmp.ne.s32.totalorder %s82, %s83
      %p92 = scmp.eq.s32.totalorder %s25, 0
      %p93 = por %p91, %p92
      %p94 = scmp.ne.s32.totalorder %s82, %s83
      %p95 = scmp.eq.s32.totalorder %s26, 1
      %p96 = por %p94, %p95
      %p98 = scmp.ne.s32.totalorder %s83, %s97
      %p99 = scmp.eq.s32.totalorder %s26, 0
      %p100 = por %p98, %p99
      %s102 = sadd.s32 %s101, 1
      %p105 = scmp.eq.s32.totalorder %s20, 1
      %p106 = scmp.ne.s32.totalorder %s101, %s103
      %p107 = scmp.eq.s32.totalorder %s20, 0
      %p108 = por %p106, %p107
      %p109 = scmp.ne.s32.totalorder %s101, %s103
      %p110 = scmp.eq.s32.totalorder %s25, 1
      %p111 = por %p109, %p110
      %p112 = scmp.ne.s32.totalorder %s103, %s104
      %p113 = scmp.eq.s32.totalorder %s25, 0
      %p114 = por %p112, %p113
      %p115 = scmp.ne.s32.totalorder %s103, %s104
      %p116 = scmp.eq.s32.totalorder %s26, 1
      %p117 = por %p115, %p116
      %p119 = scmp.ne.s32.totalorder %s104, %s118
      %p120 = scmp.eq.s32.totalorder %s26, 0
      %p121 = por %p119, %p120
      %s123 = sadd.s32 %s122, 1
      %p126 = scmp.eq.s32.totalorder %s20, 1
      %p127 = scmp.ne.s32.totalorder %s122, %s124
      %p128 = scmp.eq.s32.totalorder %s20, 0
      %p129 = por %p127, %p128
      %p130 = scmp.ne.s32.totalorder %s122, %s124
      %p131 = scmp.eq.s32.totalorder %s25, 1
      %p132 = por %p130, %p131
      %p133 = scmp.ne.s32.totalorder %s124, %s125
      %p134 = scmp.eq.s32.totalorder %s25, 0
      %p135 = por %p133, %p134
      %p136 = scmp.ne.s32.totalorder %s124, %s125
      %p137 = scmp.eq.s32.totalorder %s26, 1
      %p138 = por %p136, %p137
      %p140 = scmp.ne.s32.totalorder %s125, %s139
      %p141 = scmp.eq.s32.totalorder %s26, 0
      %p142 = por %p140, %p141
      %s144 = sadd.s32 %s143, 1
      %p147 = scmp.eq.s32.totalorder %s20, 1
      %p148 = scmp.ne.s32.totalorder %s143, %s145
      %p149 = scmp.eq.s32.totalorder %s20, 0
      %p150 = por %p148, %p149
      %p151 = scmp.ne.s32.totalorder %s143, %s145
      %p152 = scmp.eq.s32.totalorder %s25, 1
      %p153 = por %p151, %p152
      %p154 = scmp.ne.s32.totalorder %s145, %s146
      %p155 = scmp.eq.s32.totalorder %s25, 0
      %p156 = por %p154, %p155
      %p157 = scmp.ne.s32.totalorder %s145, %s146
      %p158 = scmp.eq.s32.totalorder %s26, 1
      %p159 = por %p157, %p158
      %p161 = scmp.ne.s32.totalorder %s146, %s160
      %p162 = scmp.eq.s32.totalorder %s26, 0
      %p163 = por %p161, %p162
      %s165 = sadd.s32 %s164, 1
      %p168 = scmp.eq.s32.totalorder %s20, 1
      %p169 = scmp.ne.s32.totalorder %s164, %s166
      %p170 = scmp.eq.s32.totalorder %s20, 0
      %p171 = por %p169, %p170
      %p172 = scmp.ne.s32.totalorder %s164, %s166
      %p173 = scmp.eq.s32.totalorder %s25, 1
      %p174 = por %p172, %p173
      %p175 = scmp.ne.s32.totalorder %s166, %s167
      %p176 = scmp.eq.s32.totalorder %s25, 0
      %p177 = por %p175, %p176
      %p178 = scmp.ne.s32.totalorder %s166, %s167
      %p179 = scmp.eq.s32.totalorder %s26, 1
      %p180 = por %p178, %p179
      %p182 = scmp.ne.s32.totalorder %s167, %s181
      %p183 = scmp.eq.s32.totalorder %s26, 0
      %p184 = por %p182, %p183
      %s186 = sadd.s32 %s185, 1
      %p189 = scmp.eq.s32.totalorder %s20, 1
      %p190 = scmp.ne.s32.totalorder %s185, %s187
      %p191 = scmp.eq.s32.totalorder %s20, 0
      %p192 = por %p190, %p191
      %p193 = scmp.ne.s32.totalorder %s185, %s187
      %p194 = scmp.eq.s32.totalorder %s25, 1
      %p195 = por %p193, %p194
      %p196 = scmp.ne.s32.totalorder %s187, %s188
      %p197 = scmp.eq.s32.totalorder %s25, 0
      %p198 = por %p196, %p197
      %p199 = scmp.ne.s32.totalorder %s187, %s188
      %p200 = scmp.eq.s32.totalorder %s26, 1
      %p201 = por %p199, %p200
      %p203 = scmp.ne.s32.totalorder %s188, %s202
      %p204 = scmp.eq.s32.totalorder %s26, 0
      %p205 = por %p203, %p204
      %p206 = scmp.le.s32.totalorder 1, %s20
      %p207 = scmp.lt.s32.totalorder %s20, 3
      %p208 = pnand %p206, %p207
      %p209 = pneg %p208
      // Predicated region
      $region9: #{net_forward.1} parent=5 // pred_check
        _
      $region10: #{net_forward.1} parent=5 // pred_check_branch
        %211 = sbr.rel (%p208) target = $region12
      $region11: #{net_forward.1} parent=5 // pred_region
        %s212 = ssub.s32 %s20, 1
        // Predicated region
        $region13: #{net_forward.1} parent=11 // pred_check
          %p213 = pneg %p93
        $region14: #{net_forward.1} parent=11 // pred_check_branch
          %215 = sbr.rel (%p213) target = $region16
        $region15: #{net_forward.1} parent=11 // pred_region
          _
        $region16: #{net_forward.1} parent=11 // pred_fallthru
          _
        // Predicated region
        $region17: #{net_forward.1} parent=11 // pred_check
          %p216 = pneg %p114
        $region18: #{net_forward.1} parent=11 // pred_check_branch
          %218 = sbr.rel (%p216) target = $region20
        $region19: #{net_forward.1} parent=11 // pred_region
          _
        $region20: #{net_forward.1} parent=11 // pred_fallthru
          _
        // Predicated region
        $region21: #{net_forward.1} parent=11 // pred_check
          %p219 = pneg %p135
        $region22: #{net_forward.1} parent=11 // pred_check_branch
          %221 = sbr.rel (%p219) target = $region24
        $region23: #{net_forward.1} parent=11 // pred_region
          _
        $region24: #{net_forward.1} parent=11 // pred_fallthru
          _
        // Predicated region
        $region25: #{net_forward.1} parent=11 // pred_check
          %p222 = pneg %p156
        $region26: #{net_forward.1} parent=11 // pred_check_branch
          %224 = sbr.rel (%p222) target = $region28
        $region27: #{net_forward.1} parent=11 // pred_region
          _
        $region28: #{net_forward.1} parent=11 // pred_fallthru
          _
        // Predicated region
        $region29: #{net_forward.1} parent=11 // pred_check
          %p225 = pneg %p177
        $region30: #{net_forward.1} parent=11 // pred_check_branch
          %227 = sbr.rel (%p225) target = $region32
        $region31: #{net_forward.1} parent=11 // pred_region
          _
        $region32: #{net_forward.1} parent=11 // pred_fallthru
          _
      $region12: #{net_forward.1} parent=5 // pred_fallthru
        _
      %p228 = scmp.lt.s32.totalorder %s20, 2
      // Predicated region
      $region33: #{net_forward.1} parent=5 // pred_check
        %p229 = pneg %p228
      $region34: #{net_forward.1} parent=5 // pred_check_branch
        %231 = sbr.rel (%p229) target = $region36
      $region35: #{net_forward.1} parent=5 // pred_region
        // Predicated region
        $region37: #{net_forward.1} parent=35 // pred_check
          %p232 = pneg %p40
        $region38: #{net_forward.1} parent=35 // pred_check_branch
          %234 = sbr.rel (%p232) target = $region40
        $region39: #{net_forward.1} parent=35 // pred_region
          %s235 = sand.u32 %s30, 1
          %s236 = scalar_lea.sflag [#allocation4], %s235
          %s237 = sand.u32 %s30, 1
          %s238 = smul.addr %s237, 184
          %s239 = scalar_lea.vmem [#allocation3], %s238
          %s240 = smul.u32 23, %s20
          %s241 = ssub.s32 24, %s240
          %p242 = scmp.lt.s32.totalorder %s241, 23
          %s243 = scalar_select %p242, %s241, 23
          %s244 = smul.u32 128, %s243
          %s246 = ssub.s32 2944, %s244
          %247 = vsyncadd %s236, %s246
          %p248 = scmp.ne.s32.totalorder 0, %s244
          %s249 = smul.addr %s240, 128
          %s250 = scalar_lea.hbm %s0, %s249
          %s251 = smul.u32 %s243, 8
          %s252 = sshll.u32 %s251, 4
          %s253 = sshll.u32 %s239, 4
          %s254 = int_to_ptr.vmem [resolvable:$true] %s253
          %256 = dma.hbm_to_vmem [thread:$0]  (%p248), %s250, %s252, %s254, %s236
        $region40: #{net_forward.1} parent=35 // pred_fallthru
          _
        // Predicated region
        $region41: #{net_forward.1} parent=35 // pred_check
          %p257 = pneg %p66
        $region42: #{net_forward.1} parent=35 // pred_check_branch
          %259 = sbr.rel (%p257) target = $region44
        $region43: #{net_forward.1} parent=35 // pred_region
          %s260 = sand.u32 %s56, 1
          %s261 = scalar_lea.sflag [#allocation7], %s260
          %s262 = sand.u32 %s56, 1
          %s263 = smul.addr %s262, 736
          %s264 = scalar_lea.vmem [#allocation6], %s263
          %s265 = smul.u32 23, %s20
          %s266 = ssub.s32 24, %s265
          %p267 = scmp.lt.s32.totalorder %s266, 23
          %s268 = scalar_select %p267, %s266, 23
          %s269 = smul.u32 512, %s268
          %s271 = ssub.s32 11776, %s269
          %272 = vsyncadd %s261, %s271
          %p273 = scmp.ne.s32.totalorder 0, %s269
          %s274 = smul.addr %s265, 64
          %s275 = scalar_lea.hbm %s1, %s274
          %s276 = smul.u32 %s268, 4
          %s277 = smul.u32 %s276, 8
          %s278 = sshll.u32 %s264, 4
          %s279 = int_to_ptr.vmem [resolvable:$true] %s278
          %s280 = sshll.u32 %s277, 4
          %284 = dma.hbm_to_vmem [thread:$0]  (%p273), %s275, %s280, %s279, %s261, 1536, 1472, %s276
        $region44: #{net_forward.1} parent=35 // pred_fallthru
          _
      $region36: #{net_forward.1} parent=5 // pred_fallthru
        _
      %p285 = scmp.le.s32.totalorder 1, %s20
      %p286 = scmp.lt.s32.totalorder %s20, 3
      %p287 = pnand %p285, %p286
      %p288 = pneg %p287
      // Predicated region
      $region45: #{net_forward.1} parent=5 // pred_check
        _
      $region46: #{net_forward.1} parent=5 // pred_check_branch
        %290 = sbr.rel (%p287) target = $region48
      $region47: #{net_forward.1} parent=5 // pred_region
        %s291 = ssub.s32 %s20, 1
        %s292 = sand.u32 %s33, 1
        %s293 = scalar_lea.sflag [#allocation4], %s292
        %s294 = sand.u32 %s33, 1
        %s295 = smul.addr %s294, 184
        %s296 = scalar_lea.vmem [#allocation3], %s295
        // Predicated region
        $region49: #{net_forward.1} parent=47 // pred_check
          %p297 = pneg %p46
        $region50: #{net_forward.1} parent=47 // pred_check_branch
          %299 = sbr.rel (%p297) target = $region52
        $region51: #{net_forward.1} parent=47 // pred_region
          %300 = dma.done %s293, 2944
        $region52: #{net_forward.1} parent=47 // pred_fallthru
          _
        %s301 = sand.u32 %s59, 1
        %s302 = scalar_lea.sflag [#allocation7], %s301
        %s303 = sand.u32 %s59, 1
        %s304 = smul.addr %s303, 736
        %s305 = scalar_lea.vmem [#allocation6], %s304
        // Predicated region
        $region53: #{net_forward.1} parent=47 // pred_check
          %p306 = pneg %p72
        $region54: #{net_forward.1} parent=47 // pred_check_branch
          %308 = sbr.rel (%p306) target = $region56
        $region55: #{net_forward.1} parent=47 // pred_region
          %309 = dma.done %s302, 11776
        $region56: #{net_forward.1} parent=47 // pred_fallthru
          _
        %s310 = sand.u32 %s33, 1
        %s311 = scalar_lea.sflag [#allocation4], %s310
        %s312 = sand.u32 %s33, 1
        %s313 = smul.addr %s312, 184
        %s314 = scalar_lea.vmem [#allocation3], %s313
        %p315 = pneg %p46
        %p316 = pneg %p43
        %s317 = sand.u32 %s59, 1
        %s318 = scalar_lea.sflag [#allocation7], %s317
        %s319 = sand.u32 %s59, 1
        %s320 = smul.addr %s319, 736
        %s321 = scalar_lea.vmem [#allocation6], %s320
        %p322 = pneg %p72
        %p323 = pneg %p69
        %p324 = pneg %p93
        %p325 = pneg %p90
        %p326 = pneg %p114
        %p327 = pneg %p111
        %p328 = pneg %p135
        %p329 = pneg %p132
        %p330 = pneg %p156
        %p331 = pneg %p153
        %p332 = pneg %p177
        %p333 = pneg %p174
        %p334 = pneg %p198
        %p335 = pneg %p195
        %s336 = smul.u32 23, %s25
        %s337 = ssub.s32 24, %s336
        %p338 = scmp.lt.s32.totalorder %s337, 23
        %s339 = scalar_select %p338, %s337, 23
        %s340 = smul.u32 128, %s339
        %s341 = smul.u32 23, %s25
        %s342 = ssub.s32 24, %s341
        %p343 = scmp.lt.s32.totalorder %s342, 23
        %s344 = scalar_select %p343, %s342, 23
        %s345 = smul.u32 512, %s344
        %p347 = scmp.eq.s32.totalorder %s25, 0
        // Predicated region
        $region57: #{net_forward.1} parent=47 // pred_check
          %p348 = pneg %p347
        $region58: #{net_forward.1} parent=47 // pred_check_branch
          %350 = sbr.rel (%p348) target = $region60
        $region59: #{net_forward.1} parent=47 // pred_region
          %vm351 = vcmask 64512
          %352 = vst.msk [vmem:[#allocation2] sm:$0xff] %vm351, 0.0
          %353 = vst.msk [vmem:[#allocation2 + $0x8] sm:$0xff] %vm351, 0.0
          %354 = vst.msk [vmem:[#allocation2 + $0x10] sm:$0xff] %vm351, 0.0
          %355 = vst.msk [vmem:[#allocation2 + $0x18] sm:$0xff] %vm351, 0.0
          %356 = vst.msk [vmem:[#allocation2 + $0x20] sm:$0xff] %vm351, 0.0
          %357 = vst.msk [vmem:[#allocation2 + $0x28] sm:$0xff] %vm351, 0.0
          %358 = vst.msk [vmem:[#allocation2 + $0x30] sm:$0xff] %vm351, 0.0
          %359 = vst.msk [vmem:[#allocation2 + $0x38] sm:$0xff] %vm351, 0.0
        $region60: #{net_forward.1} parent=47 // pred_fallthru
          _
        %p360 = scmp.lt.s32.totalorder %s25, 1
        // Predicated region
        $region61: #{net_forward.1} parent=47 // pred_check
          %p361 = pneg %p360
        $region62: #{net_forward.1} parent=47 // pred_check_branch
          %363 = sbr.rel (%p361) target = $region64
        $region63: #{net_forward.1} parent=47 // pred_region
          %v364 = vld [vmem:[%s305] sm:$0xff]
          %v365 = vld [vmem:[%s305 + $0x8] sm:$0xff]
          %v366 = vld [vmem:[%s305 + $0x10] sm:$0xff]
          %v367 = vld [vmem:[%s305 + $0x18] sm:$0xff]
          %v368 = vld [vmem:[%s305 + $0x20] sm:$0xff]
          %v369 = vld [vmem:[%s305 + $0x28] sm:$0xff]
          %v370 = vld [vmem:[%s305 + $0x30] sm:$0xff]
          %v371 = vld [vmem:[%s305 + $0x38] sm:$0xff]
          %v372 = vld [vmem:[%s305 + $0x40] sm:$0xff]
          %v373 = vld [vmem:[%s305 + $0x48] sm:$0xff]
          %v374 = vld [vmem:[%s305 + $0x50] sm:$0xff]
          %v375 = vld [vmem:[%s305 + $0x58] sm:$0xf]
          %v376 = vld [vmem:[%s305 + $0x5c] sm:$0xff]
          %v377 = vld [vmem:[%s305 + $0x64] sm:$0xff]
          %v378 = vld [vmem:[%s305 + $0x6c] sm:$0xff]
          %v379 = vld [vmem:[%s305 + $0x74] sm:$0xff]
          %v380 = vld [vmem:[%s305 + $0x7c] sm:$0xff]
          %v381 = vld [vmem:[%s305 + $0x84] sm:$0xff]
          %v382 = vld [vmem:[%s305 + $0x8c] sm:$0xff]
          %v383 = vld [vmem:[%s305 + $0x94] sm:$0xff]
          %v384 = vld [vmem:[%s305 + $0x9c] sm:$0xff]
          %v385 = vld [vmem:[%s305 + $0xa4] sm:$0xff]
          %v386 = vld [vmem:[%s305 + $0xac] sm:$0xff]
          %v387 = vld [vmem:[%s305 + $0xb4] sm:$0xf]
          %v388 = vld [vmem:[%s305 + $0xb8] sm:$0xff]
          %v389 = vld [vmem:[%s305 + $0xc0] sm:$0xff]
          %v390 = vld [vmem:[%s305 + $0xc8] sm:$0xff]
          %v391 = vld [vmem:[%s305 + $0xd0] sm:$0xff]
          %v392 = vld [vmem:[%s305 + $0xd8] sm:$0xff]
          %v393 = vld [vmem:[%s305 + $0xe0] sm:$0xff]
          %v394 = vld [vmem:[%s305 + $0xe8] sm:$0xff]
          %v395 = vld [vmem:[%s305 + $0xf0] sm:$0xff]
          %v396 = vld [vmem:[%s305 + $0xf8] sm:$0xff]
          %v397 = vld [vmem:[%s305 + $0x100] sm:$0xff]
          %v398 = vld [vmem:[%s305 + $0x108] sm:$0xff]
          %v399 = vld [vmem:[%s305 + $0x110] sm:$0xf]
          %v400 = vld [vmem:[%s305 + $0x114] sm:$0xff]
          %v401 = vld [vmem:[%s305 + $0x11c] sm:$0xff]
          %v402 = vld [vmem:[%s305 + $0x124] sm:$0xff]
          %v403 = vld [vmem:[%s305 + $0x12c] sm:$0xff]
          %v404 = vld [vmem:[%s305 + $0x134] sm:$0xff]
          %v405 = vld [vmem:[%s305 + $0x13c] sm:$0xff]
          %v406 = vld [vmem:[%s305 + $0x144] sm:$0xff]
          %v407 = vld [vmem:[%s305 + $0x14c] sm:$0xff]
          %v408 = vld [vmem:[%s305 + $0x154] sm:$0xff]
          %v409 = vld [vmem:[%s305 + $0x15c] sm:$0xff]
          %v410 = vld [vmem:[%s305 + $0x164] sm:$0xff]
          %v411 = vld [vmem:[%s305 + $0x16c] sm:$0xf]
          %v412 = vld [vmem:[%s305 + $0x170] sm:$0xff]
          %v413 = vld [vmem:[%s305 + $0x178] sm:$0xff]
          %v414 = vld [vmem:[%s305 + $0x180] sm:$0xff]
          %v415 = vld [vmem:[%s305 + $0x188] sm:$0xff]
          %v416 = vld [vmem:[%s305 + $0x190] sm:$0xff]
          %v417 = vld [vmem:[%s305 + $0x198] sm:$0xff]
          %v418 = vld [vmem:[%s305 + $0x1a0] sm:$0xff]
          %v419 = vld [vmem:[%s305 + $0x1a8] sm:$0xff]
          %v420 = vld [vmem:[%s305 + $0x1b0] sm:$0xff]
          %v421 = vld [vmem:[%s305 + $0x1b8] sm:$0xff]
          %v422 = vld [vmem:[%s305 + $0x1c0] sm:$0xff]
          %v423 = vld [vmem:[%s305 + $0x1c8] sm:$0xf]
          %v424 = vld [vmem:[%s305 + $0x1cc] sm:$0xff]
          %v425 = vld [vmem:[%s305 + $0x1d4] sm:$0xff]
          %v426 = vld [vmem:[%s305 + $0x1dc] sm:$0xff]
          %v427 = vld [vmem:[%s305 + $0x1e4] sm:$0xff]
          %v428 = vld [vmem:[%s305 + $0x1ec] sm:$0xff]
          %v429 = vld [vmem:[%s305 + $0x1f4] sm:$0xff]
          %v430 = vld [vmem:[%s305 + $0x1fc] sm:$0xff]
          %v431 = vld [vmem:[%s305 + $0x204] sm:$0xff]
          %v432 = vld [vmem:[%s305 + $0x20c] sm:$0xff]
          %v433 = vld [vmem:[%s305 + $0x214] sm:$0xff]
          %v434 = vld [vmem:[%s305 + $0x21c] sm:$0xff]
          %v435 = vld [vmem:[%s305 + $0x224] sm:$0xf]
          %v436 = vld [vmem:[%s305 + $0x228] sm:$0xff]
          %v437 = vld [vmem:[%s305 + $0x230] sm:$0xff]
          %v438 = vld [vmem:[%s305 + $0x238] sm:$0xff]
          %v439 = vld [vmem:[%s305 + $0x240] sm:$0xff]
          %v440 = vld [vmem:[%s305 + $0x248] sm:$0xff]
          %v441 = vld [vmem:[%s305 + $0x250] sm:$0xff]
          %v442 = vld [vmem:[%s305 + $0x258] sm:$0xff]
          %v443 = vld [vmem:[%s305 + $0x260] sm:$0xff]
          %v444 = vld [vmem:[%s305 + $0x268] sm:$0xff]
          %v445 = vld [vmem:[%s305 + $0x270] sm:$0xff]
          %v446 = vld [vmem:[%s305 + $0x278] sm:$0xff]
          %v447 = vld [vmem:[%s305 + $0x280] sm:$0xf]
          %v448 = vld [vmem:[%s305 + $0x284] sm:$0xff]
          %v449 = vld [vmem:[%s305 + $0x28c] sm:$0xff]
          %v450 = vld [vmem:[%s305 + $0x294] sm:$0xff]
          %v451 = vld [vmem:[%s305 + $0x29c] sm:$0xff]
          %v452 = vld [vmem:[%s305 + $0x2a4] sm:$0xff]
          %v453 = vld [vmem:[%s305 + $0x2ac] sm:$0xff]
          %v454 = vld [vmem:[%s305 + $0x2b4] sm:$0xff]
          %v455 = vld [vmem:[%s305 + $0x2bc] sm:$0xff]
          %v456 = vld [vmem:[%s305 + $0x2c4] sm:$0xff]
          %v457 = vld [vmem:[%s305 + $0x2cc] sm:$0xff]
          %v458 = vld [vmem:[%s305 + $0x2d4] sm:$0xff]
          %v459 = vld [vmem:[%s305 + $0x2dc] sm:$0xf]
          %v460 = vld [vmem:[%s296] sm:$0xff]
          %v461 = vld [vmem:[%s296 + $0x8] sm:$0xff]
          %v462 = vld [vmem:[%s296 + $0x10] sm:$0xff]
          %v463 = vld [vmem:[%s296 + $0x18] sm:$0xff]
          %v464 = vld [vmem:[%s296 + $0x20] sm:$0xff]
          %v465 = vld [vmem:[%s296 + $0x28] sm:$0xff]
          %v466 = vld [vmem:[%s296 + $0x30] sm:$0xff]
          %v467 = vld [vmem:[%s296 + $0x38] sm:$0xff]
          %v468 = vld [vmem:[%s296 + $0x40] sm:$0xff]
          %v469 = vld [vmem:[%s296 + $0x48] sm:$0xff]
          %v470 = vld [vmem:[%s296 + $0x50] sm:$0xff]
          %v471 = vld [vmem:[%s296 + $0x58] sm:$0xff]
          %v472 = vld [vmem:[%s296 + $0x60] sm:$0xff]
          %v473 = vld [vmem:[%s296 + $0x68] sm:$0xff]
          %v474 = vld [vmem:[%s296 + $0x70] sm:$0xff]
          %v475 = vld [vmem:[%s296 + $0x78] sm:$0xff]
          %v476 = vld [vmem:[%s296 + $0x80] sm:$0xff]
          %v477 = vld [vmem:[%s296 + $0x88] sm:$0xff]
          %v478 = vld [vmem:[%s296 + $0x90] sm:$0xff]
          %v479 = vld [vmem:[%s296 + $0x98] sm:$0xff]
          %v480 = vld [vmem:[%s296 + $0xa0] sm:$0xff]
          %v481 = vld [vmem:[%s296 + $0xa8] sm:$0xff]
          %v482 = vld [vmem:[%s296 + $0xb0] sm:$0xff]
          %v483 = vpack.c.bf16 %v460, %v460
          %v484 = vpack.c.bf16 %v461, %v461
          %v485 = vpack.c.bf16 %v462, %v462
          %v486 = vpack.c.bf16 %v463, %v463
          %v487 = vpack.c.bf16 %v464, %v464
          %v488 = vpack.c.bf16 %v465, %v465
          %v489 = vpack.c.bf16 %v466, %v466
          %v490 = vpack.c.bf16 %v467, %v467
          %v491 = vpack.c.bf16 %v468, %v468
          %v492 = vpack.c.bf16 %v469, %v469
          %v493 = vpack.c.bf16 %v470, %v470
          %v494 = vpack.c.bf16 %v471, %v471
          %v495 = vpack.c.bf16 %v472, %v472
          %v496 = vpack.c.bf16 %v473, %v473
          %v497 = vpack.c.bf16 %v474, %v474
          %v498 = vpack.c.bf16 %v475, %v475
          %v499 = vpack.c.bf16 %v476, %v476
          %v500 = vpack.c.bf16 %v477, %v477
          %v501 = vpack.c.bf16 %v478, %v478
          %v502 = vpack.c.bf16 %v479, %v479
          %v503 = vpack.c.bf16 %v480, %v480
          %v504 = vpack.c.bf16 %v481, %v481
          %v505 = vpack.c.bf16 %v482, %v482
          %v506 = vld [vmem:[#allocation2] sm:$0xff]
          %v507 = vld [vmem:[#allocation2 + $0x8] sm:$0xff]
          %v508 = vld [vmem:[#allocation2 + $0x10] sm:$0xff]
          %v509 = vld [vmem:[#allocation2 + $0x18] sm:$0xff]
          %v510 = vld [vmem:[#allocation2 + $0x20] sm:$0xff]
          %v511 = vld [vmem:[#allocation2 + $0x28] sm:$0xff]
          %v512 = vld [vmem:[#allocation2 + $0x30] sm:$0xff]
          %v513 = vld [vmem:[#allocation2 + $0x38] sm:$0xff]
          %v610 = vunpack.c.l.b16 %v364
          %v611 = vunpack.c.h.b16 %v364
          %v612 = vunpack.c.l.b16 %v365
          %v613 = vunpack.c.h.b16 %v365
          %v614 = vunpack.c.l.b16 %v366
          %v615 = vunpack.c.h.b16 %v366
          %v616 = vunpack.c.l.b16 %v367
          %v617 = vunpack.c.h.b16 %v367
          %v618 = vunpack.c.l.b16 %v368
          %v619 = vunpack.c.h.b16 %v368
          %v620 = vunpack.c.l.b16 %v369
          %v621 = vunpack.c.h.b16 %v369
          %v622 = vunpack.c.l.b16 %v370
          %v623 = vunpack.c.h.b16 %v370
          %v624 = vunpack.c.l.b16 %v371
          %v625 = vunpack.c.h.b16 %v371
          %v626 = vunpack.c.l.b16 %v372
          %v627 = vunpack.c.h.b16 %v372
          %v628 = vunpack.c.l.b16 %v373
          %v629 = vunpack.c.h.b16 %v373
          %v630 = vunpack.c.l.b16 %v374
          %v631 = vunpack.c.h.b16 %v374
          %v632 = vunpack.c.l.b16 %v375
          %v633 = vunpack.c.l.b16 %v376
          %v634 = vunpack.c.h.b16 %v376
          %v635 = vunpack.c.l.b16 %v377
          %v636 = vunpack.c.h.b16 %v377
          %v637 = vunpack.c.l.b16 %v378
          %v638 = vunpack.c.h.b16 %v378
          %v639 = vunpack.c.l.b16 %v379
          %v640 = vunpack.c.h.b16 %v379
          %v641 = vunpack.c.l.b16 %v380
          %v642 = vunpack.c.h.b16 %v380
          %v643 = vunpack.c.l.b16 %v381
          %v644 = vunpack.c.h.b16 %v381
          %v645 = vunpack.c.l.b16 %v382
          %v646 = vunpack.c.h.b16 %v382
          %v647 = vunpack.c.l.b16 %v383
          %v648 = vunpack.c.h.b16 %v383
          %v649 = vunpack.c.l.b16 %v384
          %v650 = vunpack.c.h.b16 %v384
          %v651 = vunpack.c.l.b16 %v385
          %v652 = vunpack.c.h.b16 %v385
          %v653 = vunpack.c.l.b16 %v386
          %v654 = vunpack.c.h.b16 %v386
          %v655 = vunpack.c.l.b16 %v387
          %v656 = vunpack.c.l.b16 %v388
          %v657 = vunpack.c.h.b16 %v388
          %v658 = vunpack.c.l.b16 %v389
          %v659 = vunpack.c.h.b16 %v389
          %v660 = vunpack.c.l.b16 %v390
          %v661 = vunpack.c.h.b16 %v390
          %v662 = vunpack.c.l.b16 %v391
          %v663 = vunpack.c.h.b16 %v391
          %v664 = vunpack.c.l.b16 %v392
          %v665 = vunpack.c.h.b16 %v392
          %v666 = vunpack.c.l.b16 %v393
          %v667 = vunpack.c.h.b16 %v393
          %v668 = vunpack.c.l.b16 %v394
          %v669 = vunpack.c.h.b16 %v394
          %v670 = vunpack.c.l.b16 %v395
          %v671 = vunpack.c.h.b16 %v395
          %v672 = vunpack.c.l.b16 %v396
          %v673 = vunpack.c.h.b16 %v396
          %v674 = vunpack.c.l.b16 %v397
          %v675 = vunpack.c.h.b16 %v397
          %v676 = vunpack.c.l.b16 %v398
          %v677 = vunpack.c.h.b16 %v398
          %v678 = vunpack.c.l.b16 %v399
          %v679 = vunpack.c.l.b16 %v400
          %v680 = vunpack.c.h.b16 %v400
          %v681 = vunpack.c.l.b16 %v401
          %v682 = vunpack.c.h.b16 %v401
          %v683 = vunpack.c.l.b16 %v402
          %v684 = vunpack.c.h.b16 %v402
          %v685 = vunpack.c.l.b16 %v403
          %v686 = vunpack.c.h.b16 %v403
          %v687 = vunpack.c.l.b16 %v404
          %v688 = vunpack.c.h.b16 %v404
          %v689 = vunpack.c.l.b16 %v405
          %v690 = vunpack.c.h.b16 %v405
          %v691 = vunpack.c.l.b16 %v406
          %v692 = vunpack.c.h.b16 %v406
          %v693 = vunpack.c.l.b16 %v407
          %v694 = vunpack.c.h.b16 %v407
          %v695 = vunpack.c.l.b16 %v408
          %v696 = vunpack.c.h.b16 %v408
          %v697 = vunpack.c.l.b16 %v409
          %v698 = vunpack.c.h.b16 %v409
          %v699 = vunpack.c.l.b16 %v410
          %v700 = vunpack.c.h.b16 %v410
          %v701 = vunpack.c.l.b16 %v411
          %v702 = vunpack.c.l.b16 %v412
          %v703 = vunpack.c.h.b16 %v412
          %v704 = vunpack.c.l.b16 %v413
          %v705 = vunpack.c.h.b16 %v413
          %v706 = vunpack.c.l.b16 %v414
          %v707 = vunpack.c.h.b16 %v414
          %v708 = vunpack.c.l.b16 %v415
          %v709 = vunpack.c.h.b16 %v415
          %v710 = vunpack.c.l.b16 %v416
          %v711 = vunpack.c.h.b16 %v416
          %v712 = vunpack.c.l.b16 %v417
          %v713 = vunpack.c.h.b16 %v417
          %v714 = vunpack.c.l.b16 %v418
          %v715 = vunpack.c.h.b16 %v418
          %v716 = vunpack.c.l.b16 %v419
          %v717 = vunpack.c.h.b16 %v419
          %v718 = vunpack.c.l.b16 %v420
          %v719 = vunpack.c.h.b16 %v420
          %v720 = vunpack.c.l.b16 %v421
          %v721 = vunpack.c.h.b16 %v421
          %v722 = vunpack.c.l.b16 %v422
          %v723 = vunpack.c.h.b16 %v422
          %v724 = vunpack.c.l.b16 %v423
          %v725 = vunpack.c.l.b16 %v424
          %v726 = vunpack.c.h.b16 %v424
          %v727 = vunpack.c.l.b16 %v425
          %v728 = vunpack.c.h.b16 %v425
          %v729 = vunpack.c.l.b16 %v426
          %v730 = vunpack.c.h.b16 %v426
          %v731 = vunpack.c.l.b16 %v427
          %v732 = vunpack.c.h.b16 %v427
          %v733 = vunpack.c.l.b16 %v428
          %v734 = vunpack.c.h.b16 %v428
          %v735 = vunpack.c.l.b16 %v429
          %v736 = vunpack.c.h.b16 %v429
          %v737 = vunpack.c.l.b16 %v430
          %v738 = vunpack.c.h.b16 %v430
          %v739 = vunpack.c.l.b16 %v431
          %v740 = vunpack.c.h.b16 %v431
          %v741 = vunpack.c.l.b16 %v432
          %v742 = vunpack.c.h.b16 %v432
          %v743 = vunpack.c.l.b16 %v433
          %v744 = vunpack.c.h.b16 %v433
          %v745 = vunpack.c.l.b16 %v434
          %v746 = vunpack.c.h.b16 %v434
          %v747 = vunpack.c.l.b16 %v435
          %v748 = vunpack.c.l.b16 %v436
          %v749 = vunpack.c.h.b16 %v436
          %v750 = vunpack.c.l.b16 %v437
          %v751 = vunpack.c.h.b16 %v437
          %v752 = vunpack.c.l.b16 %v438
          %v753 = vunpack.c.h.b16 %v438
          %v754 = vunpack.c.l.b16 %v439
          %v755 = vunpack.c.h.b16 %v439
          %v756 = vunpack.c.l.b16 %v440
          %v757 = vunpack.c.h.b16 %v440
          %v758 = vunpack.c.l.b16 %v441
          %v759 = vunpack.c.h.b16 %v441
          %v760 = vunpack.c.l.b16 %v442
          %v761 = vunpack.c.h.b16 %v442
          %v762 = vunpack.c.l.b16 %v443
          %v763 = vunpack.c.h.b16 %v443
          %v764 = vunpack.c.l.b16 %v444
          %v765 = vunpack.c.h.b16 %v444
          %v766 = vunpack.c.l.b16 %v445
          %v767 = vunpack.c.h.b16 %v445
          %v768 = vunpack.c.l.b16 %v446
          %v769 = vunpack.c.h.b16 %v446
          %v770 = vunpack.c.l.b16 %v447
          %v771 = vunpack.c.l.b16 %v448
          %v772 = vunpack.c.h.b16 %v448
          %v773 = vunpack.c.l.b16 %v449
          %v774 = vunpack.c.h.b16 %v449
          %v775 = vunpack.c.l.b16 %v450
          %v776 = vunpack.c.h.b16 %v450
          %v777 = vunpack.c.l.b16 %v451
          %v778 = vunpack.c.h.b16 %v451
          %v779 = vunpack.c.l.b16 %v452
          %v780 = vunpack.c.h.b16 %v452
          %v781 = vunpack.c.l.b16 %v453
          %v782 = vunpack.c.h.b16 %v453
          %v783 = vunpack.c.l.b16 %v454
          %v784 = vunpack.c.h.b16 %v454
          %v785 = vunpack.c.l.b16 %v455
          %v786 = vunpack.c.h.b16 %v455
          %v787 = vunpack.c.l.b16 %v456
          %v788 = vunpack.c.h.b16 %v456
          %v789 = vunpack.c.l.b16 %v457
          %v790 = vunpack.c.h.b16 %v457
          %v791 = vunpack.c.l.b16 %v458
          %v792 = vunpack.c.h.b16 %v458
          %v793 = vunpack.c.l.b16 %v459
          %v794 = vpack.c.b16 %v633, %v610
          %v795 = vpack.c.b16 %v634, %v611
          %v796 = vpack.c.b16 %v635, %v612
          %v797 = vpack.c.b16 %v636, %v613
          %v798 = vpack.c.b16 %v637, %v614
          %v799 = vpack.c.b16 %v638, %v615
          %v800 = vpack.c.b16 %v639, %v616
          %v801 = vpack.c.b16 %v640, %v617
          %v802 = vpack.c.b16 %v641, %v618
          %v803 = vpack.c.b16 %v642, %v619
          %v804 = vpack.c.b16 %v643, %v620
          %v805 = vpack.c.b16 %v644, %v621
          %v806 = vpack.c.b16 %v645, %v622
          %v807 = vpack.c.b16 %v646, %v623
          %v808 = vpack.c.b16 %v647, %v624
          %v809 = vpack.c.b16 %v648, %v625
          %v810 = vpack.c.b16 %v649, %v626
          %v811 = vpack.c.b16 %v650, %v627
          %v812 = vpack.c.b16 %v651, %v628
          %v813 = vpack.c.b16 %v652, %v629
          %v814 = vpack.c.b16 %v653, %v630
          %v815 = vpack.c.b16 %v654, %v631
          %v816 = vpack.c.b16 %v655, %v632
          %v817 = vpack.c.b16 %v679, %v656
          %v818 = vpack.c.b16 %v680, %v657
          %v819 = vpack.c.b16 %v681, %v658
          %v820 = vpack.c.b16 %v682, %v659
          %v821 = vpack.c.b16 %v683, %v660
          %v822 = vpack.c.b16 %v684, %v661
          %v823 = vpack.c.b16 %v685, %v662
          %v824 = vpack.c.b16 %v686, %v663
          %v825 = vpack.c.b16 %v687, %v664
          %v826 = vpack.c.b16 %v688, %v665
          %v827 = vpack.c.b16 %v689, %v666
          %v828 = vpack.c.b16 %v690, %v667
          %v829 = vpack.c.b16 %v691, %v668
          %v830 = vpack.c.b16 %v692, %v669
          %v831 = vpack.c.b16 %v693, %v670
          %v832 = vpack.c.b16 %v694, %v671
          %v833 = vpack.c.b16 %v695, %v672
          %v834 = vpack.c.b16 %v696, %v673
          %v835 = vpack.c.b16 %v697, %v674
          %v836 = vpack.c.b16 %v698, %v675
          %v837 = vpack.c.b16 %v699, %v676
          %v838 = vpack.c.b16 %v700, %v677
          %v839 = vpack.c.b16 %v701, %v678
          %v840 = vpack.c.b16 %v725, %v702
          %v841 = vpack.c.b16 %v726, %v703
          %v842 = vpack.c.b16 %v727, %v704
          %v843 = vpack.c.b16 %v728, %v705
          %v844 = vpack.c.b16 %v729, %v706
          %v845 = vpack.c.b16 %v730, %v707
          %v846 = vpack.c.b16 %v731, %v708
          %v847 = vpack.c.b16 %v732, %v709
          %v848 = vpack.c.b16 %v733, %v710
          %v849 = vpack.c.b16 %v734, %v711
          %v850 = vpack.c.b16 %v735, %v712
          %v851 = vpack.c.b16 %v736, %v713
          %v852 = vpack.c.b16 %v737, %v714
          %v853 = vpack.c.b16 %v738, %v715
          %v854 = vpack.c.b16 %v739, %v716
          %v855 = vpack.c.b16 %v740, %v717
          %v856 = vpack.c.b16 %v741, %v718
          %v857 = vpack.c.b16 %v742, %v719
          %v858 = vpack.c.b16 %v743, %v720
          %v859 = vpack.c.b16 %v744, %v721
          %v860 = vpack.c.b16 %v745, %v722
          %v861 = vpack.c.b16 %v746, %v723
          %v862 = vpack.c.b16 %v747, %v724
          %v863 = vpack.c.b16 %v771, %v748
          %v864 = vpack.c.b16 %v772, %v749
          %v865 = vpack.c.b16 %v773, %v750
          %v866 = vpack.c.b16 %v774, %v751
          %v867 = vpack.c.b16 %v775, %v752
          %v868 = vpack.c.b16 %v776, %v753
          %v869 = vpack.c.b16 %v777, %v754
          %v870 = vpack.c.b16 %v778, %v755
          %v871 = vpack.c.b16 %v779, %v756
          %v872 = vpack.c.b16 %v780, %v757
          %v873 = vpack.c.b16 %v781, %v758
          %v874 = vpack.c.b16 %v782, %v759
          %v875 = vpack.c.b16 %v783, %v760
          %v876 = vpack.c.b16 %v784, %v761
          %v877 = vpack.c.b16 %v785, %v762
          %v878 = vpack.c.b16 %v786, %v763
          %v879 = vpack.c.b16 %v787, %v764
          %v880 = vpack.c.b16 %v788, %v765
          %v881 = vpack.c.b16 %v789, %v766
          %v882 = vpack.c.b16 %v790, %v767
          %v883 = vpack.c.b16 %v791, %v768
          %v884 = vpack.c.b16 %v792, %v769
          %v885 = vpack.c.b16 %v793, %v770
          %978 = vmatprep.subr.bf16.mxu0 %v484
          %979 = vmatpush1.bf16.xpose.msra.mxu0 %v483
          %980 = vmatprep.subr.bf16.mxu0 0
          %981 = vmatpush1.bf16.xpose.msra.mxu0 0
          %982 = vmatprep.subr.bf16.mxu0 0
          %983 = vmatpush1.bf16.xpose.msra.mxu0 0
          %984 = vmatprep.subr.bf16.mxu0 0
          %985 = vmatpush1.bf16.xpose.msra.mxu0 0
          %986 = vmatprep.subr.bf16.mxu0 0
          %987 = vmatpush1.bf16.xpose.msra.mxu0 0
          %988 = vmatprep.subr.bf16.mxu0 0
          %989 = vmatpush1.bf16.xpose.msra.mxu0 0
          %990 = vmatprep.subr.bf16.mxu0 0
          %991 = vmatpush1.bf16.xpose.msra.mxu0 0
          %992 = vmatprep.subr.bf16.mxu0 0
          %993 = vmatpush1.bf16.xpose.msra.mxu0 0
          %994 = vmatprep.subr.bf16.mxu0 0
          %995 = vmatpush1.bf16.xpose.msra.mxu0 0
          %996 = vmatprep.subr.bf16.mxu0 0
          %997 = vmatpush1.bf16.xpose.msra.mxu0 0
          %998 = vmatprep.subr.bf16.mxu0 0
          %999 = vmatpush1.bf16.xpose.msra.mxu0 0
          %1000 = vmatprep.subr.bf16.mxu0 0
          %1001 = vmatpush1.bf16.xpose.msra.mxu0 0
          %1002 = vmatprep.subr.bf16.mxu0 0
          %1003 = vmatpush1.bf16.xpose.msra.mxu0 0
          %1004 = vmatprep.subr.bf16.mxu0 0
          %1005 = vmatpush1.bf16.xpose.msra.mxu0 0
          %1006 = vmatprep.subr.bf16.mxu0 0
          %1007 = vmatpush1.bf16.xpose.msra.mxu0 0
          %1008 = vmatprep.subr.bf16.mxu0 0
          %1009 = vmatpush1.bf16.xpose.msra.mxu0 0
          %1010 = vmatprep.mubr.bf16.mxu0 %v795
          %1011 = vmatmul.mubr.bf16.gmra.mrb[0].mxu0 %v794
          %v1012 = vpop.f32.mrb[0].mxu0
          %v1013 = vadd.f32 0.0, %v1012
          %v1014 = vpop.f32.mrb[0].mxu0
          %v1015 = vpop.f32.mrb[0].mxu0
          %v1016 = vadd.f32 0.0, %v1015
          %v1017 = vpop.f32.mrb[0].mxu0
          %1018 = vmatprep.mubr.bf16.mxu0 %v818
          %1019 = vmatmul.mubr.bf16.gmra.mrb[0].mxu0 %v817
          %v1020 = vpop.f32.mrb[0].mxu0
          %v1021 = vadd.f32 0.0, %v1020
          %v1022 = vpop.f32.mrb[0].mxu0
          %v1023 = vpop.f32.mrb[0].mxu0
          %v1024 = vadd.f32 0.0, %v1023
          %v1025 = vpop.f32.mrb[0].mxu0
          %1026 = vmatprep.mubr.bf16.mxu0 %v841
          %1027 = vmatmul.mubr.bf16.gmra.mrb[0].mxu0 %v840
          %v1028 = vpop.f32.mrb[0].mxu0
          %v1029 = vadd.f32 0.0, %v1028
          %v1030 = vpop.f32.mrb[0].mxu0
          %v1031 = vpop.f32.mrb[0].mxu0
          %v1032 = vadd.f32 0.0, %v1031
          %v1033 = vpop.f32.mrb[0].mxu0
          %1034 = vmatprep.mubr.bf16.mxu0 %v864
          %1035 = vmatmul.mubr.bf16.gmra.mrb[0].mxu0 %v863
          %v1036 = vpop.f32.mrb[0].mxu0
          %v1037 = vadd.f32 0.0, %v1036
          %v1038 = vpop.f32.mrb[0].mxu0
          %v1039 = vpop.f32.mrb[0].mxu0
          %v1040 = vadd.f32 0.0, %v1039
          %v1041 = vpop.f32.mrb[0].mxu0
          %1042 = vdwg.mxu0
          %1043 = vmatprep.subr.bf16.mxu0 %v486
          %1044 = vmatpush1.bf16.xpose.msra.mxu0 %v485
          %1045 = vmatprep.subr.bf16.mxu0 0
          %1046 = vmatpush1.bf16.xpose.msra.mxu0 0
          %1047 = vmatprep.subr.bf16.mxu0 0
          %1048 = vmatpush1.bf16.xpose.msra.mxu0 0
          %1049 = vmatprep.subr.bf16.mxu0 0
          %1050 = vmatpush1.bf16.xpose.msra.mxu0 0
          %1051 = vmatprep.subr.bf16.mxu0 0
          %1052 = vmatpush1.bf16.xpose.msra.mxu0 0
          %1053 = vmatprep.subr.bf16.mxu0 0
          %1054 = vmatpush1.bf16.xpose.msra.mxu0 0
          %1055 = vmatprep.subr.bf16.mxu0 0
          %1056 = vmatpush1.bf16.xpose.msra.mxu0 0
          %1057 = vmatprep.subr.bf16.mxu0 0
          %1058 = vmatpush1.bf16.xpose.msra.mxu0 0
          %1059 = vmatprep.subr.bf16.mxu0 0
          %1060 = vmatpush1.bf16.xpose.msra.mxu0 0
          %1061 = vmatprep.subr.bf16.mxu0 0
          %1062 = vmatpush1.bf16.xpose.msra.mxu0 0
          %1063 = vmatprep.subr.bf16.mxu0 0
          %1064 = vmatpush1.bf16.xpose.msra.mxu0 0
          %1065 = vmatprep.subr.bf16.mxu0 0
          %1066 = vmatpush1.bf16.xpose.msra.mxu0 0
          %1067 = vmatprep.subr.bf16.mxu0 0
          %1068 = vmatpush1.bf16.xpose.msra.mxu0 0
          %1069 = vmatprep.subr.bf16.mxu0 0
          %1070 = vmatpush1.bf16.xpose.msra.mxu0 0
          %1071 = vmatprep.subr.bf16.mxu0 0
          %1072 = vmatpush1.bf16.xpose.msra.mxu0 0
          %1073 = vmatprep.subr.bf16.mxu0 0
          %1074 = vmatpush1.bf16.xpose.msra.mxu0 0
          %1075 = vmatprep.mubr.bf16.mxu0 %v797
          %1076 = vmatmul.mubr.bf16.gmra.mrb[0].mxu0 %v796
          %v1077 = vpop.f32.mrb[0].mxu0
          %v1078 = vadd.f32 %v1013, %v1077
          %v1079 = vpop.f32.mrb[0].mxu0
          %v1080 = vpop.f32.mrb[0].mxu0
          %v1081 = vadd.f32 %v1016, %v1080
          %v1082 = vpop.f32.mrb[0].mxu0
          %1083 = vmatprep.mubr.bf16.mxu0 %v820
          %1084 = vmatmul.mubr.bf16.gmra.mrb[0].mxu0 %v819
          %v1085 = vpop.f32.mrb[0].mxu0
          %v1086 = vadd.f32 %v1021, %v1085
          %v1087 = vpop.f32.mrb[0].mxu0
          %v1088 = vpop.f32.mrb[0].mxu0
          %v1089 = vadd.f32 %v1024, %v1088
          %v1090 = vpop.f32.mrb[0].mxu0
          %1091 = vmatprep.mubr.bf16.mxu0 %v843
          %1092 = vmatmul.mubr.bf16.gmra.mrb[0].mxu0 %v842
          %v1093 = vpop.f32.mrb[0].mxu0
          %v1094 = vadd.f32 %v1029, %v1093
          %v1095 = vpop.f32.mrb[0].mxu0
          %v1096 = vpop.f32.mrb[0].mxu0
          %v1097 = vadd.f32 %v1032, %v1096
          %v1098 = vpop.f32.mrb[0].mxu0
          %1099 = vmatprep.mubr.bf16.mxu0 %v866
          %1100 = vmatmul.mubr.bf16.gmra.mrb[0].mxu0 %v865
          %v1101 = vpop.f32.mrb[0].mxu0
          %v1102 = vadd.f32 %v1037, %v1101
          %v1103 = vpop.f32.mrb[0].mxu0
          %v1104 = vpop.f32.mrb[0].mxu0
          %v1105 = vadd.f32 %v1040, %v1104
          %v1106 = vpop.f32.mrb[0].mxu0
          %1107 = vdwg.mxu0
          %1108 = vmatprep.subr.bf16.mxu0 %v488
          %1109 = vmatpush1.bf16.xpose.msra.mxu0 %v487
          %1110 = vmatprep.subr.bf16.mxu0 0
          %1111 = vmatpush1.bf16.xpose.msra.mxu0 0
          %1112 = vmatprep.subr.bf16.mxu0 0
          %1113 = vmatpush1.bf16.xpose.msra.mxu0 0
          %1114 = vmatprep.subr.bf16.mxu0 0
          %1115 = vmatpush1.bf16.xpose.msra.mxu0 0
          %1116 = vmatprep.subr.bf16.mxu0 0
          %1117 = vmatpush1.bf16.xpose.msra.mxu0 0
          %1118 = vmatprep.subr.bf16.mxu0 0
          %1119 = vmatpush1.bf16.xpose.msra.mxu0 0
          %1120 = vmatprep.subr.bf16.mxu0 0
          %1121 = vmatpush1.bf16.xpose.msra.mxu0 0
          %1122 = vmatprep.subr.bf16.mxu0 0
          %1123 = vmatpush1.bf16.xpose.msra.mxu0 0
          %1124 = vmatprep.subr.bf16.mxu0 0
          %1125 = vmatpush1.bf16.xpose.msra.mxu0 0
          %1126 = vmatprep.subr.bf16.mxu0 0
          %1127 = vmatpush1.bf16.xpose.msra.mxu0 0
          %1128 = vmatprep.subr.bf16.mxu0 0
          %1129 = vmatpush1.bf16.xpose.msra.mxu0 0
          %1130 = vmatprep.subr.bf16.mxu0 0
          %1131 = vmatpush1.bf16.xpose.msra.mxu0 0
          %1132 = vmatprep.subr.bf16.mxu0 0
          %1133 = vmatpush1.bf16.xpose.msra.mxu0 0
          %1134 = vmatprep.subr.bf16.mxu0 0
          %1135 = vmatpush1.bf16.xpose.msra.mxu0 0
          %1136 = vmatprep.subr.bf16.mxu0 0
          %1137 = vmatpush1.bf16.xpose.msra.mxu0 0
          %1138 = vmatprep.subr.bf16.mxu0 0
          %1139 = vmatpush1.bf16.xpose.msra.mxu0 0
          %1140 = vmatprep.mubr.bf16.mxu0 %v799
          %1141 = vmatmul.mubr.bf16.gmra.mrb[0].mxu0 %v798
          %v1142 = vpop.f32.mrb[0].mxu0
          %v1143 = vadd.f32 %v1078, %v1142
          %v1144 = vpop.f32.mrb[0].mxu0
          %v1145 = vpop.f32.mrb[0].mxu0
          %v1146 = vadd.f32 %v1081, %v1145
          %v1147 = vpop.f32.mrb[0].mxu0
          %1148 = vmatprep.mubr.bf16.mxu0 %v822
          %1149 = vmatmul.mubr.bf16.gmra.mrb[0].mxu0 %v821
          %v1150 = vpop.f32.mrb[0].mxu0
          %v1151 = vadd.f32 %v1086, %v1150
          %v1152 = vpop.f32.mrb[0].mxu0
          %v1153 = vpop.f32.mrb[0].mxu0
          %v1154 = vadd.f32 %v1089, %v1153
          %v1155 = vpop.f32.mrb[0].mxu0
          %1156 = vmatprep.mubr.bf16.mxu0 %v845
          %1157 = vmatmul.mubr.bf16.gmra.mrb[0].mxu0 %v844
          %v1158 = vpop.f32.mrb[0].mxu0
          %v1159 = vadd.f32 %v1094, %v1158
          %v1160 = vpop.f32.mrb[0].mxu0
          %v1161 = vpop.f32.mrb[0].mxu0
          %v1162 = vadd.f32 %v1097, %v1161
          %v1163 = vpop.f32.mrb[0].mxu0
          %1164 = vmatprep.mubr.bf16.mxu0 %v868
          %1165 = vmatmul.mubr.bf16.gmra.mrb[0].mxu0 %v867
          %v1166 = vpop.f32.mrb[0].mxu0
          %v1167 = vadd.f32 %v1102, %v1166
          %v1168 = vpop.f32.mrb[0].mxu0
          %v1169 = vpop.f32.mrb[0].mxu0
          %v1170 = vadd.f32 %v1105, %v1169
          %v1171 = vpop.f32.mrb[0].mxu0
          %1172 = vdwg.mxu0
          %1173 = vmatprep.subr.bf16.mxu0 %v490
          %1174 = vmatpush1.bf16.xpose.msra.mxu0 %v489
          %1175 = vmatprep.subr.bf16.mxu0 0
          %1176 = vmatpush1.bf16.xpose.msra.mxu0 0
          %1177 = vmatprep.subr.bf16.mxu0 0
          %1178 = vmatpush1.bf16.xpose.msra.mxu0 0
          %1179 = vmatprep.subr.bf16.mxu0 0
          %1180 = vmatpush1.bf16.xpose.msra.mxu0 0
          %1181 = vmatprep.subr.bf16.mxu0 0
          %1182 = vmatpush1.bf16.xpose.msra.mxu0 0
          %1183 = vmatprep.subr.bf16.mxu0 0
          %1184 = vmatpush1.bf16.xpose.msra.mxu0 0
          %1185 = vmatprep.subr.bf16.mxu0 0
          %1186 = vmatpush1.bf16.xpose.msra.mxu0 0
          %1187 = vmatprep.subr.bf16.mxu0 0
          %1188 = vmatpush1.bf16.xpose.msra.mxu0 0
          %1189 = vmatprep.subr.bf16.mxu0 0
          %1190 = vmatpush1.bf16.xpose.msra.mxu0 0
          %1191 = vmatprep.subr.bf16.mxu0 0
          %1192 = vmatpush1.bf16.xpose.msra.mxu0 0
          %1193 = vmatprep.subr.bf16.mxu0 0
          %1194 = vmatpush1.bf16.xpose.msra.mxu0 0
          %1195 = vmatprep.subr.bf16.mxu0 0
          %1196 = vmatpush1.bf16.xpose.msra.mxu0 0
          %1197 = vmatprep.subr.bf16.mxu0 0
          %1198 = vmatpush1.bf16.xpose.msra.mxu0 0
          %1199 = vmatprep.subr.bf16.mxu0 0
          %1200 = vmatpush1.bf16.xpose.msra.mxu0 0
          %1201 = vmatprep.subr.bf16.mxu0 0
          %1202 = vmatpush1.bf16.xpose.msra.mxu0 0
          %1203 = vmatprep.subr.bf16.mxu0 0
          %1204 = vmatpush1.bf16.xpose.msra.mxu0 0
          %1205 = vmatprep.mubr.bf16.mxu0 %v801
          %1206 = vmatmul.mubr.bf16.gmra.mrb[0].mxu0 %v800
          %v1207 = vpop.f32.mrb[0].mxu0
          %v1208 = vadd.f32 %v1143, %v1207
          %v1209 = vpop.f32.mrb[0].mxu0
          %v1210 = vpop.f32.mrb[0].mxu0
          %v1211 = vadd.f32 %v1146, %v1210
          %v1212 = vpop.f32.mrb[0].mxu0
          %1213 = vmatprep.mubr.bf16.mxu0 %v824
          %1214 = vmatmul.mubr.bf16.gmra.mrb[0].mxu0 %v823
          %v1215 = vpop.f32.mrb[0].mxu0
          %v1216 = vadd.f32 %v1151, %v1215
          %v1217 = vpop.f32.mrb[0].mxu0
          %v1218 = vpop.f32.mrb[0].mxu0
          %v1219 = vadd.f32 %v1154, %v1218
          %v1220 = vpop.f32.mrb[0].mxu0
          %1221 = vmatprep.mubr.bf16.mxu0 %v847
          %1222 = vmatmul.mubr.bf16.gmra.mrb[0].mxu0 %v846
          %v1223 = vpop.f32.mrb[0].mxu0
          %v1224 = vadd.f32 %v1159, %v1223
          %v1225 = vpop.f32.mrb[0].mxu0
          %v1226 = vpop.f32.mrb[0].mxu0
          %v1227 = vadd.f32 %v1162, %v1226
          %v1228 = vpop.f32.mrb[0].mxu0
          %1229 = vmatprep.mubr.bf16.mxu0 %v870
          %1230 = vmatmul.mubr.bf16.gmra.mrb[0].mxu0 %v869
          %v1231 = vpop.f32.mrb[0].mxu0
          %v1232 = vadd.f32 %v1167, %v1231
          %v1233 = vpop.f32.mrb[0].mxu0
          %v1234 = vpop.f32.mrb[0].mxu0
          %v1235 = vadd.f32 %v1170, %v1234
          %v1236 = vpop.f32.mrb[0].mxu0
          %1237 = vdwg.mxu0
          %1238 = vmatprep.subr.bf16.mxu0 %v492
          %1239 = vmatpush1.bf16.xpose.msra.mxu0 %v491
          %1240 = vmatprep.subr.bf16.mxu0 0
          %1241 = vmatpush1.bf16.xpose.msra.mxu0 0
          %1242 = vmatprep.subr.bf16.mxu0 0
          %1243 = vmatpush1.bf16.xpose.msra.mxu0 0
          %1244 = vmatprep.subr.bf16.mxu0 0
          %1245 = vmatpush1.bf16.xpose.msra.mxu0 0
          %1246 = vmatprep.subr.bf16.mxu0 0
          %1247 = vmatpush1.bf16.xpose.msra.mxu0 0
          %1248 = vmatprep.subr.bf16.mxu0 0
          %1249 = vmatpush1.bf16.xpose.msra.mxu0 0
          %1250 = vmatprep.subr.bf16.mxu0 0
          %1251 = vmatpush1.bf16.xpose.msra.mxu0 0
          %1252 = vmatprep.subr.bf16.mxu0 0
          %1253 = vmatpush1.bf16.xpose.msra.mxu0 0
          %1254 = vmatprep.subr.bf16.mxu0 0
          %1255 = vmatpush1.bf16.xpose.msra.mxu0 0
          %1256 = vmatprep.subr.bf16.mxu0 0
          %1257 = vmatpush1.bf16.xpose.msra.mxu0 0
          %1258 = vmatprep.subr.bf16.mxu0 0
          %1259 = vmatpush1.bf16.xpose.msra.mxu0 0
          %1260 = vmatprep.subr.bf16.mxu0 0
          %1261 = vmatpush1.bf16.xpose.msra.mxu0 0
          %1262 = vmatprep.subr.bf16.mxu0 0
          %1263 = vmatpush1.bf16.xpose.msra.mxu0 0
          %1264 = vmatprep.subr.bf16.mxu0 0
          %1265 = vmatpush1.bf16.xpose.msra.mxu0 0
          %1266 = vmatprep.subr.bf16.mxu0 0
          %1267 = vmatpush1.bf16.xpose.msra.mxu0 0
          %1268 = vmatprep.subr.bf16.mxu0 0
          %1269 = vmatpush1.bf16.xpose.msra.mxu0 0
          %1270 = vmatprep.mubr.bf16.mxu0 %v803
          %1271 = vmatmul.mubr.bf16.gmra.mrb[0].mxu0 %v802
          %v1272 = vpop.f32.mrb[0].mxu0
          %v1273 = vadd.f32 %v1208, %v1272
          %v1274 = vpop.f32.mrb[0].mxu0
          %v1275 = vpop.f32.mrb[0].mxu0
          %v1276 = vadd.f32 %v1211, %v1275
          %v1277 = vpop.f32.mrb[0].mxu0
          %1278 = vmatprep.mubr.bf16.mxu0 %v826
          %1279 = vmatmul.mubr.bf16.gmra.mrb[0].mxu0 %v825
          %v1280 = vpop.f32.mrb[0].mxu0
          %v1281 = vadd.f32 %v1216, %v1280
          %v1282 = vpop.f32.mrb[0].mxu0
          %v1283 = vpop.f32.mrb[0].mxu0
          %v1284 = vadd.f32 %v1219, %v1283
          %v1285 = vpop.f32.mrb[0].mxu0
          %1286 = vmatprep.mubr.bf16.mxu0 %v849
          %1287 = vmatmul.mubr.bf16.gmra.mrb[0].mxu0 %v848
          %v1288 = vpop.f32.mrb[0].mxu0
          %v1289 = vadd.f32 %v1224, %v1288
          %v1290 = vpop.f32.mrb[0].mxu0
          %v1291 = vpop.f32.mrb[0].mxu0
          %v1292 = vadd.f32 %v1227, %v1291
          %v1293 = vpop.f32.mrb[0].mxu0
          %1294 = vmatprep.mubr.bf16.mxu0 %v872
          %1295 = vmatmul.mubr.bf16.gmra.mrb[0].mxu0 %v871
          %v1296 = vpop.f32.mrb[0].mxu0
          %v1297 = vadd.f32 %v1232, %v1296
          %v1298 = vpop.f32.mrb[0].mxu0
          %v1299 = vpop.f32.mrb[0].mxu0
          %v1300 = vadd.f32 %v1235, %v1299
          %v1301 = vpop.f32.mrb[0].mxu0
          %1302 = vdwg.mxu0
          %1303 = vmatprep.subr.bf16.mxu0 %v494
          %1304 = vmatpush1.bf16.xpose.msra.mxu0 %v493
          %1305 = vmatprep.subr.bf16.mxu0 0
          %1306 = vmatpush1.bf16.xpose.msra.mxu0 0
          %1307 = vmatprep.subr.bf16.mxu0 0
          %1308 = vmatpush1.bf16.xpose.msra.mxu0 0
          %1309 = vmatprep.subr.bf16.mxu0 0
          %1310 = vmatpush1.bf16.xpose.msra.mxu0 0
          %1311 = vmatprep.subr.bf16.mxu0 0
          %1312 = vmatpush1.bf16.xpose.msra.mxu0 0
          %1313 = vmatprep.subr.bf16.mxu0 0
          %1314 = vmatpush1.bf16.xpose.msra.mxu0 0
          %1315 = vmatprep.subr.bf16.mxu0 0
          %1316 = vmatpush1.bf16.xpose.msra.mxu0 0
          %1317 = vmatprep.subr.bf16.mxu0 0
          %1318 = vmatpush1.bf16.xpose.msra.mxu0 0
          %1319 = vmatprep.subr.bf16.mxu0 0
          %1320 = vmatpush1.bf16.xpose.msra.mxu0 0
          %1321 = vmatprep.subr.bf16.mxu0 0
          %1322 = vmatpush1.bf16.xpose.msra.mxu0 0
          %1323 = vmatprep.subr.bf16.mxu0 0
          %1324 = vmatpush1.bf16.xpose.msra.mxu0 0
          %1325 = vmatprep.subr.bf16.mxu0 0
          %1326 = vmatpush1.bf16.xpose.msra.mxu0 0
          %1327 = vmatprep.subr.bf16.mxu0 0
          %1328 = vmatpush1.bf16.xpose.msra.mxu0 0
          %1329 = vmatprep.subr.bf16.mxu0 0
          %1330 = vmatpush1.bf16.xpose.msra.mxu0 0
          %1331 = vmatprep.subr.bf16.mxu0 0
          %1332 = vmatpush1.bf16.xpose.msra.mxu0 0
          %1333 = vmatprep.subr.bf16.mxu0 0
          %1334 = vmatpush1.bf16.xpose.msra.mxu0 0
          %1335 = vmatprep.mubr.bf16.mxu0 %v805
          %1336 = vmatmul.mubr.bf16.gmra.mrb[0].mxu0 %v804
          %v1337 = vpop.f32.mrb[0].mxu0
          %v1338 = vadd.f32 %v1273, %v1337
          %v1339 = vpop.f32.mrb[0].mxu0
          %v1340 = vpop.f32.mrb[0].mxu0
          %v1341 = vadd.f32 %v1276, %v1340
          %v1342 = vpop.f32.mrb[0].mxu0
          %1343 = vmatprep.mubr.bf16.mxu0 %v828
          %1344 = vmatmul.mubr.bf16.gmra.mrb[0].mxu0 %v827
          %v1345 = vpop.f32.mrb[0].mxu0
          %v1346 = vadd.f32 %v1281, %v1345
          %v1347 = vpop.f32.mrb[0].mxu0
          %v1348 = vpop.f32.mrb[0].mxu0
          %v1349 = vadd.f32 %v1284, %v1348
          %v1350 = vpop.f32.mrb[0].mxu0
          %1351 = vmatprep.mubr.bf16.mxu0 %v851
          %1352 = vmatmul.mubr.bf16.gmra.mrb[0].mxu0 %v850
          %v1353 = vpop.f32.mrb[0].mxu0
          %v1354 = vadd.f32 %v1289, %v1353
          %v1355 = vpop.f32.mrb[0].mxu0
          %v1356 = vpop.f32.mrb[0].mxu0
          %v1357 = vadd.f32 %v1292, %v1356
          %v1358 = vpop.f32.mrb[0].mxu0
          %1359 = vmatprep.mubr.bf16.mxu0 %v874
          %1360 = vmatmul.mubr.bf16.gmra.mrb[0].mxu0 %v873
          %v1361 = vpop.f32.mrb[0].mxu0
          %v1362 = vadd.f32 %v1297, %v1361
          %v1363 = vpop.f32.mrb[0].mxu0
          %v1364 = vpop.f32.mrb[0].mxu0
          %v1365 = vadd.f32 %v1300, %v1364
          %v1366 = vpop.f32.mrb[0].mxu0
          %1367 = vdwg.mxu0
          %1368 = vmatprep.subr.bf16.mxu0 %v496
          %1369 = vmatpush1.bf16.xpose.msra.mxu0 %v495
          %1370 = vmatprep.subr.bf16.mxu0 0
          %1371 = vmatpush1.bf16.xpose.msra.mxu0 0
          %1372 = vmatprep.subr.bf16.mxu0 0
          %1373 = vmatpush1.bf16.xpose.msra.mxu0 0
          %1374 = vmatprep.subr.bf16.mxu0 0
          %1375 = vmatpush1.bf16.xpose.msra.mxu0 0
          %1376 = vmatprep.subr.bf16.mxu0 0
          %1377 = vmatpush1.bf16.xpose.msra.mxu0 0
          %1378 = vmatprep.subr.bf16.mxu0 0
          %1379 = vmatpush1.bf16.xpose.msra.mxu0 0
          %1380 = vmatprep.subr.bf16.mxu0 0
          %1381 = vmatpush1.bf16.xpose.msra.mxu0 0
          %1382 = vmatprep.subr.bf16.mxu0 0
          %1383 = vmatpush1.bf16.xpose.msra.mxu0 0
          %1384 = vmatprep.subr.bf16.mxu0 0
          %1385 = vmatpush1.bf16.xpose.msra.mxu0 0
          %1386 = vmatprep.subr.bf16.mxu0 0
          %1387 = vmatpush1.bf16.xpose.msra.mxu0 0
          %1388 = vmatprep.subr.bf16.mxu0 0
          %1389 = vmatpush1.bf16.xpose.msra.mxu0 0
          %1390 = vmatprep.subr.bf16.mxu0 0
          %1391 = vmatpush1.bf16.xpose.msra.mxu0 0
          %1392 = vmatprep.subr.bf16.mxu0 0
          %1393 = vmatpush1.bf16.xpose.msra.mxu0 0
          %1394 = vmatprep.subr.bf16.mxu0 0
          %1395 = vmatpush1.bf16.xpose.msra.mxu0 0
          %1396 = vmatprep.subr.bf16.mxu0 0
          %1397 = vmatpush1.bf16.xpose.msra.mxu0 0
          %1398 = vmatprep.subr.bf16.mxu0 0
          %1399 = vmatpush1.bf16.xpose.msra.mxu0 0
          %1400 = vmatprep.mubr.bf16.mxu0 %v807
          %1401 = vmatmul.mubr.bf16.gmra.mrb[0].mxu0 %v806
          %v1402 = vpop.f32.mrb[0].mxu0
          %v1403 = vadd.f32 %v1338, %v1402
          %v1404 = vpop.f32.mrb[0].mxu0
          %v1405 = vpop.f32.mrb[0].mxu0
          %v1406 = vadd.f32 %v1341, %v1405
          %v1407 = vpop.f32.mrb[0].mxu0
          %1408 = vmatprep.mubr.bf16.mxu0 %v830
          %1409 = vmatmul.mubr.bf16.gmra.mrb[0].mxu0 %v829
          %v1410 = vpop.f32.mrb[0].mxu0
          %v1411 = vadd.f32 %v1346, %v1410
          %v1412 = vpop.f32.mrb[0].mxu0
          %v1413 = vpop.f32.mrb[0].mxu0
          %v1414 = vadd.f32 %v1349, %v1413
          %v1415 = vpop.f32.mrb[0].mxu0
          %1416 = vmatprep.mubr.bf16.mxu0 %v853
          %1417 = vmatmul.mubr.bf16.gmra.mrb[0].mxu0 %v852
          %v1418 = vpop.f32.mrb[0].mxu0
          %v1419 = vadd.f32 %v1354, %v1418
          %v1420 = vpop.f32.mrb[0].mxu0
          %v1421 = vpop.f32.mrb[0].mxu0
          %v1422 = vadd.f32 %v1357, %v1421
          %v1423 = vpop.f32.mrb[0].mxu0
          %1424 = vmatprep.mubr.bf16.mxu0 %v876
          %1425 = vmatmul.mubr.bf16.gmra.mrb[0].mxu0 %v875
          %v1426 = vpop.f32.mrb[0].mxu0
          %v1427 = vadd.f32 %v1362, %v1426
          %v1428 = vpop.f32.mrb[0].mxu0
          %v1429 = vpop.f32.mrb[0].mxu0
          %v1430 = vadd.f32 %v1365, %v1429
          %v1431 = vpop.f32.mrb[0].mxu0
          %1432 = vdwg.mxu0
          %1433 = vmatprep.subr.bf16.mxu0 %v498
          %1434 = vmatpush1.bf16.xpose.msra.mxu0 %v497
          %1435 = vmatprep.subr.bf16.mxu0 0
          %1436 = vmatpush1.bf16.xpose.msra.mxu0 0
          %1437 = vmatprep.subr.bf16.mxu0 0
          %1438 = vmatpush1.bf16.xpose.msra.mxu0 0
          %1439 = vmatprep.subr.bf16.mxu0 0
          %1440 = vmatpush1.bf16.xpose.msra.mxu0 0
          %1441 = vmatprep.subr.bf16.mxu0 0
          %1442 = vmatpush1.bf16.xpose.msra.mxu0 0
          %1443 = vmatprep.subr.bf16.mxu0 0
          %1444 = vmatpush1.bf16.xpose.msra.mxu0 0
          %1445 = vmatprep.subr.bf16.mxu0 0
          %1446 = vmatpush1.bf16.xpose.msra.mxu0 0
          %1447 = vmatprep.subr.bf16.mxu0 0
          %1448 = vmatpush1.bf16.xpose.msra.mxu0 0
          %1449 = vmatprep.subr.bf16.mxu0 0
          %1450 = vmatpush1.bf16.xpose.msra.mxu0 0
          %1451 = vmatprep.subr.bf16.mxu0 0
          %1452 = vmatpush1.bf16.xpose.msra.mxu0 0
          %1453 = vmatprep.subr.bf16.mxu0 0
          %1454 = vmatpush1.bf16.xpose.msra.mxu0 0
          %1455 = vmatprep.subr.bf16.mxu0 0
          %1456 = vmatpush1.bf16.xpose.msra.mxu0 0
          %1457 = vmatprep.subr.bf16.mxu0 0
          %1458 = vmatpush1.bf16.xpose.msra.mxu0 0
          %1459 = vmatprep.subr.bf16.mxu0 0
          %1460 = vmatpush1.bf16.xpose.msra.mxu0 0
          %1461 = vmatprep.subr.bf16.mxu0 0
          %1462 = vmatpush1.bf16.xpose.msra.mxu0 0
          %1463 = vmatprep.subr.bf16.mxu0 0
          %1464 = vmatpush1.bf16.xpose.msra.mxu0 0
          %1465 = vmatprep.mubr.bf16.mxu0 %v809
          %1466 = vmatmul.mubr.bf16.gmra.mrb[0].mxu0 %v808
          %v1467 = vpop.f32.mrb[0].mxu0
          %v1468 = vadd.f32 %v1403, %v1467
          %v1469 = vpop.f32.mrb[0].mxu0
          %v1470 = vpop.f32.mrb[0].mxu0
          %v1471 = vadd.f32 %v1406, %v1470
          %v1472 = vpop.f32.mrb[0].mxu0
          %1473 = vmatprep.mubr.bf16.mxu0 %v832
          %1474 = vmatmul.mubr.bf16.gmra.mrb[0].mxu0 %v831
          %v1475 = vpop.f32.mrb[0].mxu0
          %v1476 = vadd.f32 %v1411, %v1475
          %v1477 = vpop.f32.mrb[0].mxu0
          %v1478 = vpop.f32.mrb[0].mxu0
          %v1479 = vadd.f32 %v1414, %v1478
          %v1480 = vpop.f32.mrb[0].mxu0
          %1481 = vmatprep.mubr.bf16.mxu0 %v855
          %1482 = vmatmul.mubr.bf16.gmra.mrb[0].mxu0 %v854
          %v1483 = vpop.f32.mrb[0].mxu0
          %v1484 = vadd.f32 %v1419, %v1483
          %v1485 = vpop.f32.mrb[0].mxu0
          %v1486 = vpop.f32.mrb[0].mxu0
          %v1487 = vadd.f32 %v1422, %v1486
          %v1488 = vpop.f32.mrb[0].mxu0
          %1489 = vmatprep.mubr.bf16.mxu0 %v878
          %1490 = vmatmul.mubr.bf16.gmra.mrb[0].mxu0 %v877
          %v1491 = vpop.f32.mrb[0].mxu0
          %v1492 = vadd.f32 %v1427, %v1491
          %v1493 = vpop.f32.mrb[0].mxu0
          %v1494 = vpop.f32.mrb[0].mxu0
          %v1495 = vadd.f32 %v1430, %v1494
          %v1496 = vpop.f32.mrb[0].mxu0
          %1497 = vdwg.mxu0
          %1498 = vmatprep.subr.bf16.mxu0 %v500
          %1499 = vmatpush1.bf16.xpose.msra.mxu0 %v499
          %1500 = vmatprep.subr.bf16.mxu0 0
          %1501 = vmatpush1.bf16.xpose.msra.mxu0 0
          %1502 = vmatprep.subr.bf16.mxu0 0
          %1503 = vmatpush1.bf16.xpose.msra.mxu0 0
          %1504 = vmatprep.subr.bf16.mxu0 0
          %1505 = vmatpush1.bf16.xpose.msra.mxu0 0
          %1506 = vmatprep.subr.bf16.mxu0 0
          %1507 = vmatpush1.bf16.xpose.msra.mxu0 0
          %1508 = vmatprep.subr.bf16.mxu0 0
          %1509 = vmatpush1.bf16.xpose.msra.mxu0 0
          %1510 = vmatprep.subr.bf16.mxu0 0
          %1511 = vmatpush1.bf16.xpose.msra.mxu0 0
          %1512 = vmatprep.subr.bf16.mxu0 0
          %1513 = vmatpush1.bf16.xpose.msra.mxu0 0
          %1514 = vmatprep.subr.bf16.mxu0 0
          %1515 = vmatpush1.bf16.xpose.msra.mxu0 0
          %1516 = vmatprep.subr.bf16.mxu0 0
          %1517 = vmatpush1.bf16.xpose.msra.mxu0 0
          %1518 = vmatprep.subr.bf16.mxu0 0
          %1519 = vmatpush1.bf16.xpose.msra.mxu0 0
          %1520 = vmatprep.subr.bf16.mxu0 0
          %1521 = vmatpush1.bf16.xpose.msra.mxu0 0
          %1522 = vmatprep.subr.bf16.mxu0 0
          %1523 = vmatpush1.bf16.xpose.msra.mxu0 0
          %1524 = vmatprep.subr.bf16.mxu0 0
          %1525 = vmatpush1.bf16.xpose.msra.mxu0 0
          %1526 = vmatprep.subr.bf16.mxu0 0
          %1527 = vmatpush1.bf16.xpose.msra.mxu0 0
          %1528 = vmatprep.subr.bf16.mxu0 0
          %1529 = vmatpush1.bf16.xpose.msra.mxu0 0
          %1530 = vmatprep.mubr.bf16.mxu0 %v811
          %1531 = vmatmul.mubr.bf16.gmra.mrb[0].mxu0 %v810
          %v1532 = vpop.f32.mrb[0].mxu0
          %v1533 = vadd.f32 %v1468, %v1532
          %v1534 = vpop.f32.mrb[0].mxu0
          %v1535 = vpop.f32.mrb[0].mxu0
          %v1536 = vadd.f32 %v1471, %v1535
          %v1537 = vpop.f32.mrb[0].mxu0
          %1538 = vmatprep.mubr.bf16.mxu0 %v834
          %1539 = vmatmul.mubr.bf16.gmra.mrb[0].mxu0 %v833
          %v1540 = vpop.f32.mrb[0].mxu0
          %v1541 = vadd.f32 %v1476, %v1540
          %v1542 = vpop.f32.mrb[0].mxu0
          %v1543 = vpop.f32.mrb[0].mxu0
          %v1544 = vadd.f32 %v1479, %v1543
          %v1545 = vpop.f32.mrb[0].mxu0
          %1546 = vmatprep.mubr.bf16.mxu0 %v857
          %1547 = vmatmul.mubr.bf16.gmra.mrb[0].mxu0 %v856
          %v1548 = vpop.f32.mrb[0].mxu0
          %v1549 = vadd.f32 %v1484, %v1548
          %v1550 = vpop.f32.mrb[0].mxu0
          %v1551 = vpop.f32.mrb[0].mxu0
          %v1552 = vadd.f32 %v1487, %v1551
          %v1553 = vpop.f32.mrb[0].mxu0
          %1554 = vmatprep.mubr.bf16.mxu0 %v880
          %1555 = vmatmul.mubr.bf16.gmra.mrb[0].mxu0 %v879
          %v1556 = vpop.f32.mrb[0].mxu0
          %v1557 = vadd.f32 %v1492, %v1556
          %v1558 = vpop.f32.mrb[0].mxu0
          %v1559 = vpop.f32.mrb[0].mxu0
          %v1560 = vadd.f32 %v1495, %v1559
          %v1561 = vpop.f32.mrb[0].mxu0
          %1562 = vdwg.mxu0
          %1563 = vmatprep.subr.bf16.mxu0 %v502
          %1564 = vmatpush1.bf16.xpose.msra.mxu0 %v501
          %1565 = vmatprep.subr.bf16.mxu0 0
          %1566 = vmatpush1.bf16.xpose.msra.mxu0 0
          %1567 = vmatprep.subr.bf16.mxu0 0
          %1568 = vmatpush1.bf16.xpose.msra.mxu0 0
          %1569 = vmatprep.subr.bf16.mxu0 0
          %1570 = vmatpush1.bf16.xpose.msra.mxu0 0
          %1571 = vmatprep.subr.bf16.mxu0 0
          %1572 = vmatpush1.bf16.xpose.msra.mxu0 0
          %1573 = vmatprep.subr.bf16.mxu0 0
          %1574 = vmatpush1.bf16.xpose.msra.mxu0 0
          %1575 = vmatprep.subr.bf16.mxu0 0
          %1576 = vmatpush1.bf16.xpose.msra.mxu0 0
          %1577 = vmatprep.subr.bf16.mxu0 0
          %1578 = vmatpush1.bf16.xpose.msra.mxu0 0
          %1579 = vmatprep.subr.bf16.mxu0 0
          %1580 = vmatpush1.bf16.xpose.msra.mxu0 0
          %1581 = vmatprep.subr.bf16.mxu0 0
          %1582 = vmatpush1.bf16.xpose.msra.mxu0 0
          %1583 = vmatprep.subr.bf16.mxu0 0
          %1584 = vmatpush1.bf16.xpose.msra.mxu0 0
          %1585 = vmatprep.subr.bf16.mxu0 0
          %1586 = vmatpush1.bf16.xpose.msra.mxu0 0
          %1587 = vmatprep.subr.bf16.mxu0 0
          %1588 = vmatpush1.bf16.xpose.msra.mxu0 0
          %1589 = vmatprep.subr.bf16.mxu0 0
          %1590 = vmatpush1.bf16.xpose.msra.mxu0 0
          %1591 = vmatprep.subr.bf16.mxu0 0
          %1592 = vmatpush1.bf16.xpose.msra.mxu0 0
          %1593 = vmatprep.subr.bf16.mxu0 0
          %1594 = vmatpush1.bf16.xpose.msra.mxu0 0
          %1595 = vmatprep.mubr.bf16.mxu0 %v813
          %1596 = vmatmul.mubr.bf16.gmra.mrb[0].mxu0 %v812
          %v1597 = vpop.f32.mrb[0].mxu0
          %v1598 = vadd.f32 %v1533, %v1597
          %v1599 = vpop.f32.mrb[0].mxu0
          %v1600 = vpop.f32.mrb[0].mxu0
          %v1601 = vadd.f32 %v1536, %v1600
          %v1602 = vpop.f32.mrb[0].mxu0
          %1603 = vmatprep.mubr.bf16.mxu0 %v836
          %1604 = vmatmul.mubr.bf16.gmra.mrb[0].mxu0 %v835
          %v1605 = vpop.f32.mrb[0].mxu0
          %v1606 = vadd.f32 %v1541, %v1605
          %v1607 = vpop.f32.mrb[0].mxu0
          %v1608 = vpop.f32.mrb[0].mxu0
          %v1609 = vadd.f32 %v1544, %v1608
          %v1610 = vpop.f32.mrb[0].mxu0
          %1611 = vmatprep.mubr.bf16.mxu0 %v859
          %1612 = vmatmul.mubr.bf16.gmra.mrb[0].mxu0 %v858
          %v1613 = vpop.f32.mrb[0].mxu0
          %v1614 = vadd.f32 %v1549, %v1613
          %v1615 = vpop.f32.mrb[0].mxu0
          %v1616 = vpop.f32.mrb[0].mxu0
          %v1617 = vadd.f32 %v1552, %v1616
          %v1618 = vpop.f32.mrb[0].mxu0
          %1619 = vmatprep.mubr.bf16.mxu0 %v882
          %1620 = vmatmul.mubr.bf16.gmra.mrb[0].mxu0 %v881
          %v1621 = vpop.f32.mrb[0].mxu0
          %v1622 = vadd.f32 %v1557, %v1621
          %v1623 = vpop.f32.mrb[0].mxu0
          %v1624 = vpop.f32.mrb[0].mxu0
          %v1625 = vadd.f32 %v1560, %v1624
          %v1626 = vpop.f32.mrb[0].mxu0
          %1627 = vdwg.mxu0
          %1628 = vmatprep.subr.bf16.mxu0 %v504
          %1629 = vmatpush1.bf16.xpose.msra.mxu0 %v503
          %1630 = vmatprep.subr.bf16.mxu0 0
          %1631 = vmatpush1.bf16.xpose.msra.mxu0 0
          %1632 = vmatprep.subr.bf16.mxu0 0
          %1633 = vmatpush1.bf16.xpose.msra.mxu0 0
          %1634 = vmatprep.subr.bf16.mxu0 0
          %1635 = vmatpush1.bf16.xpose.msra.mxu0 0
          %1636 = vmatprep.subr.bf16.mxu0 0
          %1637 = vmatpush1.bf16.xpose.msra.mxu0 0
          %1638 = vmatprep.subr.bf16.mxu0 0
          %1639 = vmatpush1.bf16.xpose.msra.mxu0 0
          %1640 = vmatprep.subr.bf16.mxu0 0
          %1641 = vmatpush1.bf16.xpose.msra.mxu0 0
          %1642 = vmatprep.subr.bf16.mxu0 0
          %1643 = vmatpush1.bf16.xpose.msra.mxu0 0
          %1644 = vmatprep.subr.bf16.mxu0 0
          %1645 = vmatpush1.bf16.xpose.msra.mxu0 0
          %1646 = vmatprep.subr.bf16.mxu0 0
          %1647 = vmatpush1.bf16.xpose.msra.mxu0 0
          %1648 = vmatprep.subr.bf16.mxu0 0
          %1649 = vmatpush1.bf16.xpose.msra.mxu0 0
          %1650 = vmatprep.subr.bf16.mxu0 0
          %1651 = vmatpush1.bf16.xpose.msra.mxu0 0
          %1652 = vmatprep.subr.bf16.mxu0 0
          %1653 = vmatpush1.bf16.xpose.msra.mxu0 0
          %1654 = vmatprep.subr.bf16.mxu0 0
          %1655 = vmatpush1.bf16.xpose.msra.mxu0 0
          %1656 = vmatprep.subr.bf16.mxu0 0
          %1657 = vmatpush1.bf16.xpose.msra.mxu0 0
          %1658 = vmatprep.subr.bf16.mxu0 0
          %1659 = vmatpush1.bf16.xpose.msra.mxu0 0
          %1660 = vmatprep.mubr.bf16.mxu0 %v815
          %1661 = vmatmul.mubr.bf16.gmra.mrb[0].mxu0 %v814
          %v1662 = vpop.f32.mrb[0].mxu0
          %v1663 = vadd.f32 %v1598, %v1662
          %v1664 = vpop.f32.mrb[0].mxu0
          %v1665 = vpop.f32.mrb[0].mxu0
          %v1666 = vadd.f32 %v1601, %v1665
          %v1667 = vpop.f32.mrb[0].mxu0
          %1668 = vmatprep.mubr.bf16.mxu0 %v838
          %1669 = vmatmul.mubr.bf16.gmra.mrb[0].mxu0 %v837
          %v1670 = vpop.f32.mrb[0].mxu0
          %v1671 = vadd.f32 %v1606, %v1670
          %v1672 = vpop.f32.mrb[0].mxu0
          %v1673 = vpop.f32.mrb[0].mxu0
          %v1674 = vadd.f32 %v1609, %v1673
          %v1675 = vpop.f32.mrb[0].mxu0
          %1676 = vmatprep.mubr.bf16.mxu0 %v861
          %1677 = vmatmul.mubr.bf16.gmra.mrb[0].mxu0 %v860
          %v1678 = vpop.f32.mrb[0].mxu0
          %v1679 = vadd.f32 %v1614, %v1678
          %v1680 = vpop.f32.mrb[0].mxu0
          %v1681 = vpop.f32.mrb[0].mxu0
          %v1682 = vadd.f32 %v1617, %v1681
          %v1683 = vpop.f32.mrb[0].mxu0
          %1684 = vmatprep.mubr.bf16.mxu0 %v884
          %1685 = vmatmul.mubr.bf16.gmra.mrb[0].mxu0 %v883
          %v1686 = vpop.f32.mrb[0].mxu0
          %v1687 = vadd.f32 %v1622, %v1686
          %v1688 = vpop.f32.mrb[0].mxu0
          %v1689 = vpop.f32.mrb[0].mxu0
          %v1690 = vadd.f32 %v1625, %v1689
          %v1691 = vpop.f32.mrb[0].mxu0
          %1692 = vdwg.mxu0
          %1693 = vmatprep.subr.bf16.mxu0 0
          %1694 = vmatpush1.bf16.xpose.msra.mxu0 %v505
          %1695 = vmatprep.subr.bf16.mxu0 0
          %1696 = vmatpush1.bf16.xpose.msra.mxu0 0
          %1697 = vmatprep.subr.bf16.mxu0 0
          %1698 = vmatpush1.bf16.xpose.msra.mxu0 0
          %1699 = vmatprep.subr.bf16.mxu0 0
          %1700 = vmatpush1.bf16.xpose.msra.mxu0 0
          %1701 = vmatprep.subr.bf16.mxu0 0
          %1702 = vmatpush1.bf16.xpose.msra.mxu0 0
          %1703 = vmatprep.subr.bf16.mxu0 0
          %1704 = vmatpush1.bf16.xpose.msra.mxu0 0
          %1705 = vmatprep.subr.bf16.mxu0 0
          %1706 = vmatpush1.bf16.xpose.msra.mxu0 0
          %1707 = vmatprep.subr.bf16.mxu0 0
          %1708 = vmatpush1.bf16.xpose.msra.mxu0 0
          %1709 = vmatprep.subr.bf16.mxu0 0
          %1710 = vmatpush1.bf16.xpose.msra.mxu0 0
          %1711 = vmatprep.subr.bf16.mxu0 0
          %1712 = vmatpush1.bf16.xpose.msra.mxu0 0
          %1713 = vmatprep.subr.bf16.mxu0 0
          %1714 = vmatpush1.bf16.xpose.msra.mxu0 0
          %1715 = vmatprep.subr.bf16.mxu0 0
          %1716 = vmatpush1.bf16.xpose.msra.mxu0 0
          %1717 = vmatprep.subr.bf16.mxu0 0
          %1718 = vmatpush1.bf16.xpose.msra.mxu0 0
          %1719 = vmatprep.subr.bf16.mxu0 0
          %1720 = vmatpush1.bf16.xpose.msra.mxu0 0
          %1721 = vmatprep.subr.bf16.mxu0 0
          %1722 = vmatpush1.bf16.xpose.msra.mxu0 0
          %1723 = vmatprep.subr.bf16.mxu0 0
          %1724 = vmatpush1.bf16.xpose.msra.mxu0 0
          %1725 = vmatprep.mubr.bf16.mxu0 0
          %1726 = vmatmul.mubr.bf16.gmra.mrb[0].mxu0 %v816
          %v1727 = vpop.f32.mrb[0].mxu0
          %v1728 = vadd.f32 %v1663, %v1727
          %v1729 = vpop.f32.mrb[0].mxu0
          %v1730 = vpop.f32.mrb[0].mxu0
          %v1731 = vadd.f32 %v1666, %v1730
          %v1732 = vpop.f32.mrb[0].mxu0
          %1733 = vmatprep.mubr.bf16.mxu0 0
          %1734 = vmatmul.mubr.bf16.gmra.mrb[0].mxu0 %v839
          %v1735 = vpop.f32.mrb[0].mxu0
          %v1736 = vadd.f32 %v1671, %v1735
          %v1737 = vpop.f32.mrb[0].mxu0
          %v1738 = vpop.f32.mrb[0].mxu0
          %v1739 = vadd.f32 %v1674, %v1738
          %v1740 = vpop.f32.mrb[0].mxu0
          %1741 = vmatprep.mubr.bf16.mxu0 0
          %1742 = vmatmul.mubr.bf16.gmra.mrb[0].mxu0 %v862
          %v1743 = vpop.f32.mrb[0].mxu0
          %v1744 = vadd.f32 %v1679, %v1743
          %v1745 = vpop.f32.mrb[0].mxu0
          %v1746 = vpop.f32.mrb[0].mxu0
          %v1747 = vadd.f32 %v1682, %v1746
          %v1748 = vpop.f32.mrb[0].mxu0
          %1749 = vmatprep.mubr.bf16.mxu0 0
          %1750 = vmatmul.mubr.bf16.gmra.mrb[0].mxu0 %v885
          %v1751 = vpop.f32.mrb[0].mxu0
          %v1752 = vadd.f32 %v1687, %v1751
          %v1753 = vpop.f32.mrb[0].mxu0
          %v1754 = vpop.f32.mrb[0].mxu0
          %v1755 = vadd.f32 %v1690, %v1754
          %v1756 = vpop.f32.mrb[0].mxu0
          %1757 = vdwg.mxu0
          %v1758 = vadd.f32 %v506, %v1728
          %v1759 = vadd.f32 %v507, %v1731
          %v1760 = vadd.f32 %v508, %v1736
          %v1761 = vadd.f32 %v509, %v1739
          %v1762 = vadd.f32 %v510, %v1744
          %v1763 = vadd.f32 %v511, %v1747
          %v1764 = vadd.f32 %v512, %v1752
          %v1765 = vadd.f32 %v513, %v1755
          %vm1766 = vcmask 64512
          %1767 = vst.msk [vmem:[#allocation2] sm:$0xff] %vm1766, %v1758
          %1768 = vst.msk [vmem:[#allocation2 + $0x8] sm:$0xff] %vm1766, %v1759
          %1769 = vst.msk [vmem:[#allocation2 + $0x10] sm:$0xff] %vm1766, %v1760
          %1770 = vst.msk [vmem:[#allocation2 + $0x18] sm:$0xff] %vm1766, %v1761
          %1771 = vst.msk [vmem:[#allocation2 + $0x20] sm:$0xff] %vm1766, %v1762
          %1772 = vst.msk [vmem:[#allocation2 + $0x28] sm:$0xff] %vm1766, %v1763
          %1773 = vst.msk [vmem:[#allocation2 + $0x30] sm:$0xff] %vm1766, %v1764
          %1774 = vst.msk [vmem:[#allocation2 + $0x38] sm:$0xff] %vm1766, %v1765
        $region64: #{net_forward.1} parent=47 // pred_fallthru
          _
        %p1775 = scmp.eq.s32.totalorder %s25, 1
        // Predicated region
        $region65: #{net_forward.1} parent=47 // pred_check
          %p1776 = pneg %p1775
        $region66: #{net_forward.1} parent=47 // pred_check_branch
          %1778 = sbr.rel (%p1776) target = $region68
        $region67: #{net_forward.1} parent=47 // pred_region
          %v1779 = vlaneseq
          %v1780 = vand.u32 %v1779, 127
          %v1781 = vadd.s32 %v1780, 128
          %v1782 = vadd.s32 %v1780, 256
          %v1783 = vadd.s32 %v1780, 384
          %v1784 = vadd.s32 %v1780, 512
          %v1785 = vadd.s32 %v1780, 640
          %v1786 = vadd.s32 %v1780, 768
          %v1787 = vadd.s32 %v1780, 896
          %v1788 = vadd.s32 %v1780, 1024
          %v1789 = vadd.s32 %v1780, 1152
          %v1790 = vadd.s32 %v1780, 1280
          %v1791 = vadd.s32 %v1780, 1408
          %v1792 = vadd.s32 %v1780, 1536
          %v1793 = vadd.s32 %v1780, 1664
          %v1794 = vadd.s32 %v1780, 1792
          %v1795 = vadd.s32 %v1780, 1920
          %v1796 = vadd.s32 %v1780, 2048
          %v1797 = vadd.s32 %v1780, 2176
          %v1798 = vadd.s32 %v1780, 2304
          %v1799 = vadd.s32 %v1780, 2432
          %v1800 = vadd.s32 %v1780, 2560
          %v1801 = vadd.s32 %v1780, 2688
          %v1802 = vadd.s32 %v1780, 2816
          %vm1803 = vcmp.lt.s32.totalorder %v1780, 56
          %vm1804 = vcmp.lt.s32.totalorder %v1781, 56
          %vm1805 = vcmp.lt.s32.totalorder %v1782, 56
          %vm1806 = vcmp.lt.s32.totalorder %v1783, 56
          %vm1807 = vcmp.lt.s32.totalorder %v1784, 56
          %vm1808 = vcmp.lt.s32.totalorder %v1785, 56
          %vm1809 = vcmp.lt.s32.totalorder %v1786, 56
          %vm1810 = vcmp.lt.s32.totalorder %v1787, 56
          %vm1811 = vcmp.lt.s32.totalorder %v1788, 56
          %vm1812 = vcmp.lt.s32.totalorder %v1789, 56
          %vm1813 = vcmp.lt.s32.totalorder %v1790, 56
          %vm1814 = vcmp.lt.s32.totalorder %v1791, 56
          %vm1815 = vcmp.lt.s32.totalorder %v1792, 56
          %vm1816 = vcmp.lt.s32.totalorder %v1793, 56
          %vm1817 = vcmp.lt.s32.totalorder %v1794, 56
          %vm1818 = vcmp.lt.s32.totalorder %v1795, 56
          %vm1819 = vcmp.lt.s32.totalorder %v1796, 56
          %vm1820 = vcmp.lt.s32.totalorder %v1797, 56
          %vm1821 = vcmp.lt.s32.totalorder %v1798, 56
          %vm1822 = vcmp.lt.s32.totalorder %v1799, 56
          %vm1823 = vcmp.lt.s32.totalorder %v1800, 56
          %vm1824 = vcmp.lt.s32.totalorder %v1801, 56
          %vm1825 = vcmp.lt.s32.totalorder %v1802, 56
          %v1826 = vld [vmem:[%s296] sm:$0xff]
          %v1827 = vld [vmem:[%s296 + $0x8] sm:$0xff]
          %v1828 = vld [vmem:[%s296 + $0x10] sm:$0xff]
          %v1829 = vld [vmem:[%s296 + $0x18] sm:$0xff]
          %v1830 = vld [vmem:[%s296 + $0x20] sm:$0xff]
          %v1831 = vld [vmem:[%s296 + $0x28] sm:$0xff]
          %v1832 = vld [vmem:[%s296 + $0x30] sm:$0xff]
          %v1833 = vld [vmem:[%s296 + $0x38] sm:$0xff]
          %v1834 = vld [vmem:[%s296 + $0x40] sm:$0xff]
          %v1835 = vld [vmem:[%s296 + $0x48] sm:$0xff]
          %v1836 = vld [vmem:[%s296 + $0x50] sm:$0xff]
          %v1837 = vld [vmem:[%s296 + $0x58] sm:$0xff]
          %v1838 = vld [vmem:[%s296 + $0x60] sm:$0xff]
          %v1839 = vld [vmem:[%s296 + $0x68] sm:$0xff]
          %v1840 = vld [vmem:[%s296 + $0x70] sm:$0xff]
          %v1841 = vld [vmem:[%s296 + $0x78] sm:$0xff]
          %v1842 = vld [vmem:[%s296 + $0x80] sm:$0xff]
          %v1843 = vld [vmem:[%s296 + $0x88] sm:$0xff]
          %v1844 = vld [vmem:[%s296 + $0x90] sm:$0xff]
          %v1845 = vld [vmem:[%s296 + $0x98] sm:$0xff]
          %v1846 = vld [vmem:[%s296 + $0xa0] sm:$0xff]
          %v1847 = vld [vmem:[%s296 + $0xa8] sm:$0xff]
          %v1848 = vld [vmem:[%s296 + $0xb0] sm:$0xff]
          %v1849 = vsel %vm1803, %v1826, 0.0
          %v1850 = vsel %vm1804, %v1827, 0.0
          %v1851 = vsel %vm1805, %v1828, 0.0
          %v1852 = vsel %vm1806, %v1829, 0.0
          %v1853 = vsel %vm1807, %v1830, 0.0
          %v1854 = vsel %vm1808, %v1831, 0.0
          %v1855 = vsel %vm1809, %v1832, 0.0
          %v1856 = vsel %vm1810, %v1833, 0.0
          %v1857 = vsel %vm1811, %v1834, 0.0
          %v1858 = vsel %vm1812, %v1835, 0.0
          %v1859 = vsel %vm1813, %v1836, 0.0
          %v1860 = vsel %vm1814, %v1837, 0.0
          %v1861 = vsel %vm1815, %v1838, 0.0
          %v1862 = vsel %vm1816, %v1839, 0.0
          %v1863 = vsel %vm1817, %v1840, 0.0
          %v1864 = vsel %vm1818, %v1841, 0.0
          %v1865 = vsel %vm1819, %v1842, 0.0
          %v1866 = vsel %vm1820, %v1843, 0.0
          %v1867 = vsel %vm1821, %v1844, 0.0
          %v1868 = vsel %vm1822, %v1845, 0.0
          %v1869 = vsel %vm1823, %v1846, 0.0
          %v1870 = vsel %vm1824, %v1847, 0.0
          %v1871 = vsel %vm1825, %v1848, 0.0
          %v1872 = vpack.c.bf16 %v1849, %v1849
          %v1873 = vpack.c.bf16 %v1850, %v1850
          %v1874 = vpack.c.bf16 %v1851, %v1851
          %v1875 = vpack.c.bf16 %v1852, %v1852
          %v1876 = vpack.c.bf16 %v1853, %v1853
          %v1877 = vpack.c.bf16 %v1854, %v1854
          %v1878 = vpack.c.bf16 %v1855, %v1855
          %v1879 = vpack.c.bf16 %v1856, %v1856
          %v1880 = vpack.c.bf16 %v1857, %v1857
          %v1881 = vpack.c.bf16 %v1858, %v1858
          %v1882 = vpack.c.bf16 %v1859, %v1859
          %v1883 = vpack.c.bf16 %v1860, %v1860
          %v1884 = vpack.c.bf16 %v1861, %v1861
          %v1885 = vpack.c.bf16 %v1862, %v1862
          %v1886 = vpack.c.bf16 %v1863, %v1863
          %v1887 = vpack.c.bf16 %v1864, %v1864
          %v1888 = vpack.c.bf16 %v1865, %v1865
          %v1889 = vpack.c.bf16 %v1866, %v1866
          %v1890 = vpack.c.bf16 %v1867, %v1867
          %v1891 = vpack.c.bf16 %v1868, %v1868
          %v1892 = vpack.c.bf16 %v1869, %v1869
          %v1893 = vpack.c.bf16 %v1870, %v1870
          %v1894 = vpack.c.bf16 %v1871, %v1871
          %v1895 = vld [vmem:[%s305] sm:$0xff]
          %v1896 = vld [vmem:[%s305 + $0x8] sm:$0xff]
          %v1897 = vld [vmem:[%s305 + $0x10] sm:$0xff]
          %v1898 = vld [vmem:[%s305 + $0x18] sm:$0xff]
          %v1899 = vld [vmem:[%s305 + $0x20] sm:$0xff]
          %v1900 = vld [vmem:[%s305 + $0x28] sm:$0xff]
          %v1901 = vld [vmem:[%s305 + $0x30] sm:$0xff]
          %v1902 = vld [vmem:[%s305 + $0x38] sm:$0xff]
          %v1903 = vld [vmem:[%s305 + $0x40] sm:$0xff]
          %v1904 = vld [vmem:[%s305 + $0x48] sm:$0xff]
          %v1905 = vld [vmem:[%s305 + $0x50] sm:$0xff]
          %v1906 = vld [vmem:[%s305 + $0x58] sm:$0xf]
          %v1907 = vld [vmem:[%s305 + $0x5c] sm:$0xff]
          %v1908 = vld [vmem:[%s305 + $0x64] sm:$0xff]
          %v1909 = vld [vmem:[%s305 + $0x6c] sm:$0xff]
          %v1910 = vld [vmem:[%s305 + $0x74] sm:$0xff]
          %v1911 = vld [vmem:[%s305 + $0x7c] sm:$0xff]
          %v1912 = vld [vmem:[%s305 + $0x84] sm:$0xff]
          %v1913 = vld [vmem:[%s305 + $0x8c] sm:$0xff]
          %v1914 = vld [vmem:[%s305 + $0x94] sm:$0xff]
          %v1915 = vld [vmem:[%s305 + $0x9c] sm:$0xff]
          %v1916 = vld [vmem:[%s305 + $0xa4] sm:$0xff]
          %v1917 = vld [vmem:[%s305 + $0xac] sm:$0xff]
          %v1918 = vld [vmem:[%s305 + $0xb4] sm:$0xf]
          %v1919 = vld [vmem:[%s305 + $0xb8] sm:$0xff]
          %v1920 = vld [vmem:[%s305 + $0xc0] sm:$0xff]
          %v1921 = vld [vmem:[%s305 + $0xc8] sm:$0xff]
          %v1922 = vld [vmem:[%s305 + $0xd0] sm:$0xff]
          %v1923 = vld [vmem:[%s305 + $0xd8] sm:$0xff]
          %v1924 = vld [vmem:[%s305 + $0xe0] sm:$0xff]
          %v1925 = vld [vmem:[%s305 + $0xe8] sm:$0xff]
          %v1926 = vld [vmem:[%s305 + $0xf0] sm:$0xff]
          %v1927 = vld [vmem:[%s305 + $0xf8] sm:$0xff]
          %v1928 = vld [vmem:[%s305 + $0x100] sm:$0xff]
          %v1929 = vld [vmem:[%s305 + $0x108] sm:$0xff]
          %v1930 = vld [vmem:[%s305 + $0x110] sm:$0xf]
          %v1931 = vld [vmem:[%s305 + $0x114] sm:$0xff]
          %v1932 = vld [vmem:[%s305 + $0x11c] sm:$0xff]
          %v1933 = vld [vmem:[%s305 + $0x124] sm:$0xff]
          %v1934 = vld [vmem:[%s305 + $0x12c] sm:$0xff]
          %v1935 = vld [vmem:[%s305 + $0x134] sm:$0xff]
          %v1936 = vld [vmem:[%s305 + $0x13c] sm:$0xff]
          %v1937 = vld [vmem:[%s305 + $0x144] sm:$0xff]
          %v1938 = vld [vmem:[%s305 + $0x14c] sm:$0xff]
          %v1939 = vld [vmem:[%s305 + $0x154] sm:$0xff]
          %v1940 = vld [vmem:[%s305 + $0x15c] sm:$0xff]
          %v1941 = vld [vmem:[%s305 + $0x164] sm:$0xff]
          %v1942 = vld [vmem:[%s305 + $0x16c] sm:$0xf]
          %v1943 = vld [vmem:[%s305 + $0x170] sm:$0xff]
          %v1944 = vld [vmem:[%s305 + $0x178] sm:$0xff]
          %v1945 = vld [vmem:[%s305 + $0x180] sm:$0xff]
          %v1946 = vld [vmem:[%s305 + $0x188] sm:$0xff]
          %v1947 = vld [vmem:[%s305 + $0x190] sm:$0xff]
          %v1948 = vld [vmem:[%s305 + $0x198] sm:$0xff]
          %v1949 = vld [vmem:[%s305 + $0x1a0] sm:$0xff]
          %v1950 = vld [vmem:[%s305 + $0x1a8] sm:$0xff]
          %v1951 = vld [vmem:[%s305 + $0x1b0] sm:$0xff]
          %v1952 = vld [vmem:[%s305 + $0x1b8] sm:$0xff]
          %v1953 = vld [vmem:[%s305 + $0x1c0] sm:$0xff]
          %v1954 = vld [vmem:[%s305 + $0x1c8] sm:$0xf]
          %v1955 = vld [vmem:[%s305 + $0x1cc] sm:$0xff]
          %v1956 = vld [vmem:[%s305 + $0x1d4] sm:$0xff]
          %v1957 = vld [vmem:[%s305 + $0x1dc] sm:$0xff]
          %v1958 = vld [vmem:[%s305 + $0x1e4] sm:$0xff]
          %v1959 = vld [vmem:[%s305 + $0x1ec] sm:$0xff]
          %v1960 = vld [vmem:[%s305 + $0x1f4] sm:$0xff]
          %v1961 = vld [vmem:[%s305 + $0x1fc] sm:$0xff]
          %v1962 = vld [vmem:[%s305 + $0x204] sm:$0xff]
          %v1963 = vld [vmem:[%s305 + $0x20c] sm:$0xff]
          %v1964 = vld [vmem:[%s305 + $0x214] sm:$0xff]
          %v1965 = vld [vmem:[%s305 + $0x21c] sm:$0xff]
          %v1966 = vld [vmem:[%s305 + $0x224] sm:$0xf]
          %v1967 = vld [vmem:[%s305 + $0x228] sm:$0xff]
          %v1968 = vld [vmem:[%s305 + $0x230] sm:$0xff]
          %v1969 = vld [vmem:[%s305 + $0x238] sm:$0xff]
          %v1970 = vld [vmem:[%s305 + $0x240] sm:$0xff]
          %v1971 = vld [vmem:[%s305 + $0x248] sm:$0xff]
          %v1972 = vld [vmem:[%s305 + $0x250] sm:$0xff]
          %v1973 = vld [vmem:[%s305 + $0x258] sm:$0xff]
          %v1974 = vld [vmem:[%s305 + $0x260] sm:$0xff]
          %v1975 = vld [vmem:[%s305 + $0x268] sm:$0xff]
          %v1976 = vld [vmem:[%s305 + $0x270] sm:$0xff]
          %v1977 = vld [vmem:[%s305 + $0x278] sm:$0xff]
          %v1978 = vld [vmem:[%s305 + $0x280] sm:$0xf]
          %v1979 = vld [vmem:[%s305 + $0x284] sm:$0xff]
          %v1980 = vld [vmem:[%s305 + $0x28c] sm:$0xff]
          %v1981 = vld [vmem:[%s305 + $0x294] sm:$0xff]
          %v1982 = vld [vmem:[%s305 + $0x29c] sm:$0xff]
          %v1983 = vld [vmem:[%s305 + $0x2a4] sm:$0xff]
          %v1984 = vld [vmem:[%s305 + $0x2ac] sm:$0xff]
          %v1985 = vld [vmem:[%s305 + $0x2b4] sm:$0xff]
          %v1986 = vld [vmem:[%s305 + $0x2bc] sm:$0xff]
          %v1987 = vld [vmem:[%s305 + $0x2c4] sm:$0xff]
          %v1988 = vld [vmem:[%s305 + $0x2cc] sm:$0xff]
          %v1989 = vld [vmem:[%s305 + $0x2d4] sm:$0xff]
          %v1990 = vld [vmem:[%s305 + $0x2dc] sm:$0xf]
          %vm1991 = vmpackc.low %vm1804, %vm1803
          %vm1992 = vmpackc.low %vm1806, %vm1805
          %vm1993 = vmpackc.low %vm1808, %vm1807
          %vm1994 = vmpackc.low %vm1810, %vm1809
          %vm1995 = vmpackc.low %vm1812, %vm1811
          %vm1996 = vmpackc.low %vm1814, %vm1813
          %vm1997 = vmpackc.low %vm1816, %vm1815
          %vm1998 = vmpackc.low %vm1818, %vm1817
          %vm1999 = vmpackc.low %vm1820, %vm1819
          %vm2000 = vmpackc.low %vm1822, %vm1821
          %vm2001 = vmpackc.low %vm1824, %vm1823
          %vm2002 = vmpackc.low %vm1825, %vm1825
          %v2003 = vsel %vm1991, %v1895, 0
          %v2004 = vsel %vm1992, %v1896, 0
          %v2005 = vsel %vm1993, %v1897, 0
          %v2006 = vsel %vm1994, %v1898, 0
          %v2007 = vsel %vm1995, %v1899, 0
          %v2008 = vsel %vm1996, %v1900, 0
          %v2009 = vsel %vm1997, %v1901, 0
          %v2010 = vsel %vm1998, %v1902, 0
          %v2011 = vsel %vm1999, %v1903, 0
          %v2012 = vsel %vm2000, %v1904, 0
          %v2013 = vsel %vm2001, %v1905, 0
          %v2014 = vsel %vm2002, %v1906, 0
          %v2015 = vsel %vm1991, %v1907, 0
          %v2016 = vsel %vm1992, %v1908, 0
          %v2017 = vsel %vm1993, %v1909, 0
          %v2018 = vsel %vm1994, %v1910, 0
          %v2019 = vsel %vm1995, %v1911, 0
          %v2020 = vsel %vm1996, %v1912, 0
          %v2021 = vsel %vm1997, %v1913, 0
          %v2022 = vsel %vm1998, %v1914, 0
          %v2023 = vsel %vm1999, %v1915, 0
          %v2024 = vsel %vm2000, %v1916, 0
          %v2025 = vsel %vm2001, %v1917, 0
          %v2026 = vsel %vm2002, %v1918, 0
          %v2027 = vsel %vm1991, %v1919, 0
          %v2028 = vsel %vm1992, %v1920, 0
          %v2029 = vsel %vm1993, %v1921, 0
          %v2030 = vsel %vm1994, %v1922, 0
          %v2031 = vsel %vm1995, %v1923, 0
          %v2032 = vsel %vm1996, %v1924, 0
          %v2033 = vsel %vm1997, %v1925, 0
          %v2034 = vsel %vm1998, %v1926, 0
          %v2035 = vsel %vm1999, %v1927, 0
          %v2036 = vsel %vm2000, %v1928, 0
          %v2037 = vsel %vm2001, %v1929, 0
          %v2038 = vsel %vm2002, %v1930, 0
          %v2039 = vsel %vm1991, %v1931, 0
          %v2040 = vsel %vm1992, %v1932, 0
          %v2041 = vsel %vm1993, %v1933, 0
          %v2042 = vsel %vm1994, %v1934, 0
          %v2043 = vsel %vm1995, %v1935, 0
          %v2044 = vsel %vm1996, %v1936, 0
          %v2045 = vsel %vm1997, %v1937, 0
          %v2046 = vsel %vm1998, %v1938, 0
          %v2047 = vsel %vm1999, %v1939, 0
          %v2048 = vsel %vm2000, %v1940, 0
          %v2049 = vsel %vm2001, %v1941, 0
          %v2050 = vsel %vm2002, %v1942, 0
          %v2051 = vsel %vm1991, %v1943, 0
          %v2052 = vsel %vm1992, %v1944, 0
          %v2053 = vsel %vm1993, %v1945, 0
          %v2054 = vsel %vm1994, %v1946, 0
          %v2055 = vsel %vm1995, %v1947, 0
          %v2056 = vsel %vm1996, %v1948, 0
          %v2057 = vsel %vm1997, %v1949, 0
          %v2058 = vsel %vm1998, %v1950, 0
          %v2059 = vsel %vm1999, %v1951, 0
          %v2060 = vsel %vm2000, %v1952, 0
          %v2061 = vsel %vm2001, %v1953, 0
          %v2062 = vsel %vm2002, %v1954, 0
          %v2063 = vsel %vm1991, %v1955, 0
          %v2064 = vsel %vm1992, %v1956, 0
          %v2065 = vsel %vm1993, %v1957, 0
          %v2066 = vsel %vm1994, %v1958, 0
          %v2067 = vsel %vm1995, %v1959, 0
          %v2068 = vsel %vm1996, %v1960, 0
          %v2069 = vsel %vm1997, %v1961, 0
          %v2070 = vsel %vm1998, %v1962, 0
          %v2071 = vsel %vm1999, %v1963, 0
          %v2072 = vsel %vm2000, %v1964, 0
          %v2073 = vsel %vm2001, %v1965, 0
          %v2074 = vsel %vm2002, %v1966, 0
          %v2075 = vsel %vm1991, %v1967, 0
          %v2076 = vsel %vm1992, %v1968, 0
          %v2077 = vsel %vm1993, %v1969, 0
          %v2078 = vsel %vm1994, %v1970, 0
          %v2079 = vsel %vm1995, %v1971, 0
          %v2080 = vsel %vm1996, %v1972, 0
          %v2081 = vsel %vm1997, %v1973, 0
          %v2082 = vsel %vm1998, %v1974, 0
          %v2083 = vsel %vm1999, %v1975, 0
          %v2084 = vsel %vm2000, %v1976, 0
          %v2085 = vsel %vm2001, %v1977, 0
          %v2086 = vsel %vm2002, %v1978, 0
          %v2087 = vsel %vm1991, %v1979, 0
          %v2088 = vsel %vm1992, %v1980, 0
          %v2089 = vsel %vm1993, %v1981, 0
          %v2090 = vsel %vm1994, %v1982, 0
          %v2091 = vsel %vm1995, %v1983, 0
          %v2092 = vsel %vm1996, %v1984, 0
          %v2093 = vsel %vm1997, %v1985, 0
          %v2094 = vsel %vm1998, %v1986, 0
          %v2095 = vsel %vm1999, %v1987, 0
          %v2096 = vsel %vm2000, %v1988, 0
          %v2097 = vsel %vm2001, %v1989, 0
          %v2098 = vsel %vm2002, %v1990, 0
          %v2099 = vld [vmem:[#allocation2] sm:$0xff]
          %v2100 = vld [vmem:[#allocation2 + $0x8] sm:$0xff]
          %v2101 = vld [vmem:[#allocation2 + $0x10] sm:$0xff]
          %v2102 = vld [vmem:[#allocation2 + $0x18] sm:$0xff]
          %v2103 = vld [vmem:[#allocation2 + $0x20] sm:$0xff]
          %v2104 = vld [vmem:[#allocation2 + $0x28] sm:$0xff]
          %v2105 = vld [vmem:[#allocation2 + $0x30] sm:$0xff]
          %v2106 = vld [vmem:[#allocation2 + $0x38] sm:$0xff]
          %v2203 = vunpack.c.l.b16 %v2003
          %v2204 = vunpack.c.h.b16 %v2003
          %v2205 = vunpack.c.l.b16 %v2004
          %v2206 = vunpack.c.h.b16 %v2004
          %v2207 = vunpack.c.l.b16 %v2005
          %v2208 = vunpack.c.h.b16 %v2005
          %v2209 = vunpack.c.l.b16 %v2006
          %v2210 = vunpack.c.h.b16 %v2006
          %v2211 = vunpack.c.l.b16 %v2007
          %v2212 = vunpack.c.h.b16 %v2007
          %v2213 = vunpack.c.l.b16 %v2008
          %v2214 = vunpack.c.h.b16 %v2008
          %v2215 = vunpack.c.l.b16 %v2009
          %v2216 = vunpack.c.h.b16 %v2009
          %v2217 = vunpack.c.l.b16 %v2010
          %v2218 = vunpack.c.h.b16 %v2010
          %v2219 = vunpack.c.l.b16 %v2011
          %v2220 = vunpack.c.h.b16 %v2011
          %v2221 = vunpack.c.l.b16 %v2012
          %v2222 = vunpack.c.h.b16 %v2012
          %v2223 = vunpack.c.l.b16 %v2013
          %v2224 = vunpack.c.h.b16 %v2013
          %v2225 = vunpack.c.l.b16 %v2014
          %v2226 = vunpack.c.l.b16 %v2015
          %v2227 = vunpack.c.h.b16 %v2015
          %v2228 = vunpack.c.l.b16 %v2016
          %v2229 = vunpack.c.h.b16 %v2016
          %v2230 = vunpack.c.l.b16 %v2017
          %v2231 = vunpack.c.h.b16 %v2017
          %v2232 = vunpack.c.l.b16 %v2018
          %v2233 = vunpack.c.h.b16 %v2018
          %v2234 = vunpack.c.l.b16 %v2019
          %v2235 = vunpack.c.h.b16 %v2019
          %v2236 = vunpack.c.l.b16 %v2020
          %v2237 = vunpack.c.h.b16 %v2020
          %v2238 = vunpack.c.l.b16 %v2021
          %v2239 = vunpack.c.h.b16 %v2021
          %v2240 = vunpack.c.l.b16 %v2022
          %v2241 = vunpack.c.h.b16 %v2022
          %v2242 = vunpack.c.l.b16 %v2023
          %v2243 = vunpack.c.h.b16 %v2023
          %v2244 = vunpack.c.l.b16 %v2024
          %v2245 = vunpack.c.h.b16 %v2024
          %v2246 = vunpack.c.l.b16 %v2025
          %v2247 = vunpack.c.h.b16 %v2025
          %v2248 = vunpack.c.l.b16 %v2026
          %v2249 = vunpack.c.l.b16 %v2027
          %v2250 = vunpack.c.h.b16 %v2027
          %v2251 = vunpack.c.l.b16 %v2028
          %v2252 = vunpack.c.h.b16 %v2028
          %v2253 = vunpack.c.l.b16 %v2029
          %v2254 = vunpack.c.h.b16 %v2029
          %v2255 = vunpack.c.l.b16 %v2030
          %v2256 = vunpack.c.h.b16 %v2030
          %v2257 = vunpack.c.l.b16 %v2031
          %v2258 = vunpack.c.h.b16 %v2031
          %v2259 = vunpack.c.l.b16 %v2032
          %v2260 = vunpack.c.h.b16 %v2032
          %v2261 = vunpack.c.l.b16 %v2033
          %v2262 = vunpack.c.h.b16 %v2033
          %v2263 = vunpack.c.l.b16 %v2034
          %v2264 = vunpack.c.h.b16 %v2034
          %v2265 = vunpack.c.l.b16 %v2035
          %v2266 = vunpack.c.h.b16 %v2035
          %v2267 = vunpack.c.l.b16 %v2036
          %v2268 = vunpack.c.h.b16 %v2036
          %v2269 = vunpack.c.l.b16 %v2037
          %v2270 = vunpack.c.h.b16 %v2037
          %v2271 = vunpack.c.l.b16 %v2038
          %v2272 = vunpack.c.l.b16 %v2039
          %v2273 = vunpack.c.h.b16 %v2039
          %v2274 = vunpack.c.l.b16 %v2040
          %v2275 = vunpack.c.h.b16 %v2040
          %v2276 = vunpack.c.l.b16 %v2041
          %v2277 = vunpack.c.h.b16 %v2041
          %v2278 = vunpack.c.l.b16 %v2042
          %v2279 = vunpack.c.h.b16 %v2042
          %v2280 = vunpack.c.l.b16 %v2043
          %v2281 = vunpack.c.h.b16 %v2043
          %v2282 = vunpack.c.l.b16 %v2044
          %v2283 = vunpack.c.h.b16 %v2044
          %v2284 = vunpack.c.l.b16 %v2045
          %v2285 = vunpack.c.h.b16 %v2045
          %v2286 = vunpack.c.l.b16 %v2046
          %v2287 = vunpack.c.h.b16 %v2046
          %v2288 = vunpack.c.l.b16 %v2047
          %v2289 = vunpack.c.h.b16 %v2047
          %v2290 = vunpack.c.l.b16 %v2048
          %v2291 = vunpack.c.h.b16 %v2048
          %v2292 = vunpack.c.l.b16 %v2049
          %v2293 = vunpack.c.h.b16 %v2049
          %v2294 = vunpack.c.l.b16 %v2050
          %v2295 = vunpack.c.l.b16 %v2051
          %v2296 = vunpack.c.h.b16 %v2051
          %v2297 = vunpack.c.l.b16 %v2052
          %v2298 = vunpack.c.h.b16 %v2052
          %v2299 = vunpack.c.l.b16 %v2053
          %v2300 = vunpack.c.h.b16 %v2053
          %v2301 = vunpack.c.l.b16 %v2054
          %v2302 = vunpack.c.h.b16 %v2054
          %v2303 = vunpack.c.l.b16 %v2055
          %v2304 = vunpack.c.h.b16 %v2055
          %v2305 = vunpack.c.l.b16 %v2056
          %v2306 = vunpack.c.h.b16 %v2056
          %v2307 = vunpack.c.l.b16 %v2057
          %v2308 = vunpack.c.h.b16 %v2057
          %v2309 = vunpack.c.l.b16 %v2058
          %v2310 = vunpack.c.h.b16 %v2058
          %v2311 = vunpack.c.l.b16 %v2059
          %v2312 = vunpack.c.h.b16 %v2059
          %v2313 = vunpack.c.l.b16 %v2060
          %v2314 = vunpack.c.h.b16 %v2060
          %v2315 = vunpack.c.l.b16 %v2061
          %v2316 = vunpack.c.h.b16 %v2061
          %v2317 = vunpack.c.l.b16 %v2062
          %v2318 = vunpack.c.l.b16 %v2063
          %v2319 = vunpack.c.h.b16 %v2063
          %v2320 = vunpack.c.l.b16 %v2064
          %v2321 = vunpack.c.h.b16 %v2064
          %v2322 = vunpack.c.l.b16 %v2065
          %v2323 = vunpack.c.h.b16 %v2065
          %v2324 = vunpack.c.l.b16 %v2066
          %v2325 = vunpack.c.h.b16 %v2066
          %v2326 = vunpack.c.l.b16 %v2067
          %v2327 = vunpack.c.h.b16 %v2067
          %v2328 = vunpack.c.l.b16 %v2068
          %v2329 = vunpack.c.h.b16 %v2068
          %v2330 = vunpack.c.l.b16 %v2069
          %v2331 = vunpack.c.h.b16 %v2069
          %v2332 = vunpack.c.l.b16 %v2070
          %v2333 = vunpack.c.h.b16 %v2070
          %v2334 = vunpack.c.l.b16 %v2071
          %v2335 = vunpack.c.h.b16 %v2071
          %v2336 = vunpack.c.l.b16 %v2072
          %v2337 = vunpack.c.h.b16 %v2072
          %v2338 = vunpack.c.l.b16 %v2073
          %v2339 = vunpack.c.h.b16 %v2073
          %v2340 = vunpack.c.l.b16 %v2074
          %v2341 = vunpack.c.l.b16 %v2075
          %v2342 = vunpack.c.h.b16 %v2075
          %v2343 = vunpack.c.l.b16 %v2076
          %v2344 = vunpack.c.h.b16 %v2076
          %v2345 = vunpack.c.l.b16 %v2077
          %v2346 = vunpack.c.h.b16 %v2077
          %v2347 = vunpack.c.l.b16 %v2078
          %v2348 = vunpack.c.h.b16 %v2078
          %v2349 = vunpack.c.l.b16 %v2079
          %v2350 = vunpack.c.h.b16 %v2079
          %v2351 = vunpack.c.l.b16 %v2080
          %v2352 = vunpack.c.h.b16 %v2080
          %v2353 = vunpack.c.l.b16 %v2081
          %v2354 = vunpack.c.h.b16 %v2081
          %v2355 = vunpack.c.l.b16 %v2082
          %v2356 = vunpack.c.h.b16 %v2082
          %v2357 = vunpack.c.l.b16 %v2083
          %v2358 = vunpack.c.h.b16 %v2083
          %v2359 = vunpack.c.l.b16 %v2084
          %v2360 = vunpack.c.h.b16 %v2084
          %v2361 = vunpack.c.l.b16 %v2085
          %v2362 = vunpack.c.h.b16 %v2085
          %v2363 = vunpack.c.l.b16 %v2086
          %v2364 = vunpack.c.l.b16 %v2087
          %v2365 = vunpack.c.h.b16 %v2087
          %v2366 = vunpack.c.l.b16 %v2088
          %v2367 = vunpack.c.h.b16 %v2088
          %v2368 = vunpack.c.l.b16 %v2089
          %v2369 = vunpack.c.h.b16 %v2089
          %v2370 = vunpack.c.l.b16 %v2090
          %v2371 = vunpack.c.h.b16 %v2090
          %v2372 = vunpack.c.l.b16 %v2091
          %v2373 = vunpack.c.h.b16 %v2091
          %v2374 = vunpack.c.l.b16 %v2092
          %v2375 = vunpack.c.h.b16 %v2092
          %v2376 = vunpack.c.l.b16 %v2093
          %v2377 = vunpack.c.h.b16 %v2093
          %v2378 = vunpack.c.l.b16 %v2094
          %v2379 = vunpack.c.h.b16 %v2094
          %v2380 = vunpack.c.l.b16 %v2095
          %v2381 = vunpack.c.h.b16 %v2095
          %v2382 = vunpack.c.l.b16 %v2096
          %v2383 = vunpack.c.h.b16 %v2096
          %v2384 = vunpack.c.l.b16 %v2097
          %v2385 = vunpack.c.h.b16 %v2097
          %v2386 = vunpack.c.l.b16 %v2098
          %v2387 = vpack.c.b16 %v2226, %v2203
          %v2388 = vpack.c.b16 %v2227, %v2204
          %v2389 = vpack.c.b16 %v2228, %v2205
          %v2390 = vpack.c.b16 %v2229, %v2206
          %v2391 = vpack.c.b16 %v2230, %v2207
          %v2392 = vpack.c.b16 %v2231, %v2208
          %v2393 = vpack.c.b16 %v2232, %v2209
          %v2394 = vpack.c.b16 %v2233, %v2210
          %v2395 = vpack.c.b16 %v2234, %v2211
          %v2396 = vpack.c.b16 %v2235, %v2212
          %v2397 = vpack.c.b16 %v2236, %v2213
          %v2398 = vpack.c.b16 %v2237, %v2214
          %v2399 = vpack.c.b16 %v2238, %v2215
          %v2400 = vpack.c.b16 %v2239, %v2216
          %v2401 = vpack.c.b16 %v2240, %v2217
          %v2402 = vpack.c.b16 %v2241, %v2218
          %v2403 = vpack.c.b16 %v2242, %v2219
          %v2404 = vpack.c.b16 %v2243, %v2220
          %v2405 = vpack.c.b16 %v2244, %v2221
          %v2406 = vpack.c.b16 %v2245, %v2222
          %v2407 = vpack.c.b16 %v2246, %v2223
          %v2408 = vpack.c.b16 %v2247, %v2224
          %v2409 = vpack.c.b16 %v2248, %v2225
          %v2410 = vpack.c.b16 %v2272, %v2249
          %v2411 = vpack.c.b16 %v2273, %v2250
          %v2412 = vpack.c.b16 %v2274, %v2251
          %v2413 = vpack.c.b16 %v2275, %v2252
          %v2414 = vpack.c.b16 %v2276, %v2253
          %v2415 = vpack.c.b16 %v2277, %v2254
          %v2416 = vpack.c.b16 %v2278, %v2255
          %v2417 = vpack.c.b16 %v2279, %v2256
          %v2418 = vpack.c.b16 %v2280, %v2257
          %v2419 = vpack.c.b16 %v2281, %v2258
          %v2420 = vpack.c.b16 %v2282, %v2259
          %v2421 = vpack.c.b16 %v2283, %v2260
          %v2422 = vpack.c.b16 %v2284, %v2261
          %v2423 = vpack.c.b16 %v2285, %v2262
          %v2424 = vpack.c.b16 %v2286, %v2263
          %v2425 = vpack.c.b16 %v2287, %v2264
          %v2426 = vpack.c.b16 %v2288, %v2265
          %v2427 = vpack.c.b16 %v2289, %v2266
          %v2428 = vpack.c.b16 %v2290, %v2267
          %v2429 = vpack.c.b16 %v2291, %v2268
          %v2430 = vpack.c.b16 %v2292, %v2269
          %v2431 = vpack.c.b16 %v2293, %v2270
          %v2432 = vpack.c.b16 %v2294, %v2271
          %v2433 = vpack.c.b16 %v2318, %v2295
          %v2434 = vpack.c.b16 %v2319, %v2296
          %v2435 = vpack.c.b16 %v2320, %v2297
          %v2436 = vpack.c.b16 %v2321, %v2298
          %v2437 = vpack.c.b16 %v2322, %v2299
          %v2438 = vpack.c.b16 %v2323, %v2300
          %v2439 = vpack.c.b16 %v2324, %v2301
          %v2440 = vpack.c.b16 %v2325, %v2302
          %v2441 = vpack.c.b16 %v2326, %v2303
          %v2442 = vpack.c.b16 %v2327, %v2304
          %v2443 = vpack.c.b16 %v2328, %v2305
          %v2444 = vpack.c.b16 %v2329, %v2306
          %v2445 = vpack.c.b16 %v2330, %v2307
          %v2446 = vpack.c.b16 %v2331, %v2308
          %v2447 = vpack.c.b16 %v2332, %v2309
          %v2448 = vpack.c.b16 %v2333, %v2310
          %v2449 = vpack.c.b16 %v2334, %v2311
          %v2450 = vpack.c.b16 %v2335, %v2312
          %v2451 = vpack.c.b16 %v2336, %v2313
          %v2452 = vpack.c.b16 %v2337, %v2314
          %v2453 = vpack.c.b16 %v2338, %v2315
          %v2454 = vpack.c.b16 %v2339, %v2316
          %v2455 = vpack.c.b16 %v2340, %v2317
          %v2456 = vpack.c.b16 %v2364, %v2341
          %v2457 = vpack.c.b16 %v2365, %v2342
          %v2458 = vpack.c.b16 %v2366, %v2343
          %v2459 = vpack.c.b16 %v2367, %v2344
          %v2460 = vpack.c.b16 %v2368, %v2345
          %v2461 = vpack.c.b16 %v2369, %v2346
          %v2462 = vpack.c.b16 %v2370, %v2347
          %v2463 = vpack.c.b16 %v2371, %v2348
          %v2464 = vpack.c.b16 %v2372, %v2349
          %v2465 = vpack.c.b16 %v2373, %v2350
          %v2466 = vpack.c.b16 %v2374, %v2351
          %v2467 = vpack.c.b16 %v2375, %v2352
          %v2468 = vpack.c.b16 %v2376, %v2353
          %v2469 = vpack.c.b16 %v2377, %v2354
          %v2470 = vpack.c.b16 %v2378, %v2355
          %v2471 = vpack.c.b16 %v2379, %v2356
          %v2472 = vpack.c.b16 %v2380, %v2357
          %v2473 = vpack.c.b16 %v2381, %v2358
          %v2474 = vpack.c.b16 %v2382, %v2359
          %v2475 = vpack.c.b16 %v2383, %v2360
          %v2476 = vpack.c.b16 %v2384, %v2361
          %v2477 = vpack.c.b16 %v2385, %v2362
          %v2478 = vpack.c.b16 %v2386, %v2363
          %2571 = vmatprep.subr.bf16.mxu0 %v1873
          %2572 = vmatpush1.bf16.xpose.msra.mxu0 %v1872
          %2573 = vmatprep.subr.bf16.mxu0 0
          %2574 = vmatpush1.bf16.xpose.msra.mxu0 0
          %2575 = vmatprep.subr.bf16.mxu0 0
          %2576 = vmatpush1.bf16.xpose.msra.mxu0 0
          %2577 = vmatprep.subr.bf16.mxu0 0
          %2578 = vmatpush1.bf16.xpose.msra.mxu0 0
          %2579 = vmatprep.subr.bf16.mxu0 0
          %2580 = vmatpush1.bf16.xpose.msra.mxu0 0
          %2581 = vmatprep.subr.bf16.mxu0 0
          %2582 = vmatpush1.bf16.xpose.msra.mxu0 0
          %2583 = vmatprep.subr.bf16.mxu0 0
          %2584 = vmatpush1.bf16.xpose.msra.mxu0 0
          %2585 = vmatprep.subr.bf16.mxu0 0
          %2586 = vmatpush1.bf16.xpose.msra.mxu0 0
          %2587 = vmatprep.subr.bf16.mxu0 0
          %2588 = vmatpush1.bf16.xpose.msra.mxu0 0
          %2589 = vmatprep.subr.bf16.mxu0 0
          %2590 = vmatpush1.bf16.xpose.msra.mxu0 0
          %2591 = vmatprep.subr.bf16.mxu0 0
          %2592 = vmatpush1.bf16.xpose.msra.mxu0 0
          %2593 = vmatprep.subr.bf16.mxu0 0
          %2594 = vmatpush1.bf16.xpose.msra.mxu0 0
          %2595 = vmatprep.subr.bf16.mxu0 0
          %2596 = vmatpush1.bf16.xpose.msra.mxu0 0
          %2597 = vmatprep.subr.bf16.mxu0 0
          %2598 = vmatpush1.bf16.xpose.msra.mxu0 0
          %2599 = vmatprep.subr.bf16.mxu0 0
          %2600 = vmatpush1.bf16.xpose.msra.mxu0 0
          %2601 = vmatprep.subr.bf16.mxu0 0
          %2602 = vmatpush1.bf16.xpose.msra.mxu0 0
          %2603 = vmatprep.mubr.bf16.mxu0 %v2388
          %2604 = vmatmul.mubr.bf16.gmra.mrb[0].mxu0 %v2387
          %v2605 = vpop.f32.mrb[0].mxu0
          %v2606 = vadd.f32 0.0, %v2605
          %v2607 = vpop.f32.mrb[0].mxu0
          %v2608 = vpop.f32.mrb[0].mxu0
          %v2609 = vadd.f32 0.0, %v2608
          %v2610 = vpop.f32.mrb[0].mxu0
          %2611 = vmatprep.mubr.bf16.mxu0 %v2411
          %2612 = vmatmul.mubr.bf16.gmra.mrb[0].mxu0 %v2410
          %v2613 = vpop.f32.mrb[0].mxu0
          %v2614 = vadd.f32 0.0, %v2613
          %v2615 = vpop.f32.mrb[0].mxu0
          %v2616 = vpop.f32.mrb[0].mxu0
          %v2617 = vadd.f32 0.0, %v2616
          %v2618 = vpop.f32.mrb[0].mxu0
          %2619 = vmatprep.mubr.bf16.mxu0 %v2434
          %2620 = vmatmul.mubr.bf16.gmra.mrb[0].mxu0 %v2433
          %v2621 = vpop.f32.mrb[0].mxu0
          %v2622 = vadd.f32 0.0, %v2621
          %v2623 = vpop.f32.mrb[0].mxu0
          %v2624 = vpop.f32.mrb[0].mxu0
          %v2625 = vadd.f32 0.0, %v2624
          %v2626 = vpop.f32.mrb[0].mxu0
          %2627 = vmatprep.mubr.bf16.mxu0 %v2457
          %2628 = vmatmul.mubr.bf16.gmra.mrb[0].mxu0 %v2456
          %v2629 = vpop.f32.mrb[0].mxu0
          %v2630 = vadd.f32 0.0, %v2629
          %v2631 = vpop.f32.mrb[0].mxu0
          %v2632 = vpop.f32.mrb[0].mxu0
          %v2633 = vadd.f32 0.0, %v2632
          %v2634 = vpop.f32.mrb[0].mxu0
          %2635 = vdwg.mxu0
          %2636 = vmatprep.subr.bf16.mxu0 %v1875
          %2637 = vmatpush1.bf16.xpose.msra.mxu0 %v1874
          %2638 = vmatprep.subr.bf16.mxu0 0
          %2639 = vmatpush1.bf16.xpose.msra.mxu0 0
          %2640 = vmatprep.subr.bf16.mxu0 0
          %2641 = vmatpush1.bf16.xpose.msra.mxu0 0
          %2642 = vmatprep.subr.bf16.mxu0 0
          %2643 = vmatpush1.bf16.xpose.msra.mxu0 0
          %2644 = vmatprep.subr.bf16.mxu0 0
          %2645 = vmatpush1.bf16.xpose.msra.mxu0 0
          %2646 = vmatprep.subr.bf16.mxu0 0
          %2647 = vmatpush1.bf16.xpose.msra.mxu0 0
          %2648 = vmatprep.subr.bf16.mxu0 0
          %2649 = vmatpush1.bf16.xpose.msra.mxu0 0
          %2650 = vmatprep.subr.bf16.mxu0 0
          %2651 = vmatpush1.bf16.xpose.msra.mxu0 0
          %2652 = vmatprep.subr.bf16.mxu0 0
          %2653 = vmatpush1.bf16.xpose.msra.mxu0 0
          %2654 = vmatprep.subr.bf16.mxu0 0
          %2655 = vmatpush1.bf16.xpose.msra.mxu0 0
          %2656 = vmatprep.subr.bf16.mxu0 0
          %2657 = vmatpush1.bf16.xpose.msra.mxu0 0
          %2658 = vmatprep.subr.bf16.mxu0 0
          %2659 = vmatpush1.bf16.xpose.msra.mxu0 0
          %2660 = vmatprep.subr.bf16.mxu0 0
          %2661 = vmatpush1.bf16.xpose.msra.mxu0 0
          %2662 = vmatprep.subr.bf16.mxu0 0
          %2663 = vmatpush1.bf16.xpose.msra.mxu0 0
          %2664 = vmatprep.subr.bf16.mxu0 0
          %2665 = vmatpush1.bf16.xpose.msra.mxu0 0
          %2666 = vmatprep.subr.bf16.mxu0 0
          %2667 = vmatpush1.bf16.xpose.msra.mxu0 0
          %2668 = vmatprep.mubr.bf16.mxu0 %v2390
          %2669 = vmatmul.mubr.bf16.gmra.mrb[0].mxu0 %v2389
          %v2670 = vpop.f32.mrb[0].mxu0
          %v2671 = vadd.f32 %v2606, %v2670
          %v2672 = vpop.f32.mrb[0].mxu0
          %v2673 = vpop.f32.mrb[0].mxu0
          %v2674 = vadd.f32 %v2609, %v2673
          %v2675 = vpop.f32.mrb[0].mxu0
          %2676 = vmatprep.mubr.bf16.mxu0 %v2413
          %2677 = vmatmul.mubr.bf16.gmra.mrb[0].mxu0 %v2412
          %v2678 = vpop.f32.mrb[0].mxu0
          %v2679 = vadd.f32 %v2614, %v2678
          %v2680 = vpop.f32.mrb[0].mxu0
          %v2681 = vpop.f32.mrb[0].mxu0
          %v2682 = vadd.f32 %v2617, %v2681
          %v2683 = vpop.f32.mrb[0].mxu0
          %2684 = vmatprep.mubr.bf16.mxu0 %v2436
          %2685 = vmatmul.mubr.bf16.gmra.mrb[0].mxu0 %v2435
          %v2686 = vpop.f32.mrb[0].mxu0
          %v2687 = vadd.f32 %v2622, %v2686
          %v2688 = vpop.f32.mrb[0].mxu0
          %v2689 = vpop.f32.mrb[0].mxu0
          %v2690 = vadd.f32 %v2625, %v2689
          %v2691 = vpop.f32.mrb[0].mxu0
          %2692 = vmatprep.mubr.bf16.mxu0 %v2459
          %2693 = vmatmul.mubr.bf16.gmra.mrb[0].mxu0 %v2458
          %v2694 = vpop.f32.mrb[0].mxu0
          %v2695 = vadd.f32 %v2630, %v2694
          %v2696 = vpop.f32.mrb[0].mxu0
          %v2697 = vpop.f32.mrb[0].mxu0
          %v2698 = vadd.f32 %v2633, %v2697
          %v2699 = vpop.f32.mrb[0].mxu0
          %2700 = vdwg.mxu0
          %2701 = vmatprep.subr.bf16.mxu0 %v1877
          %2702 = vmatpush1.bf16.xpose.msra.mxu0 %v1876
          %2703 = vmatprep.subr.bf16.mxu0 0
          %2704 = vmatpush1.bf16.xpose.msra.mxu0 0
          %2705 = vmatprep.subr.bf16.mxu0 0
          %2706 = vmatpush1.bf16.xpose.msra.mxu0 0
          %2707 = vmatprep.subr.bf16.mxu0 0
          %2708 = vmatpush1.bf16.xpose.msra.mxu0 0
          %2709 = vmatprep.subr.bf16.mxu0 0
          %2710 = vmatpush1.bf16.xpose.msra.mxu0 0
          %2711 = vmatprep.subr.bf16.mxu0 0
          %2712 = vmatpush1.bf16.xpose.msra.mxu0 0
          %2713 = vmatprep.subr.bf16.mxu0 0
          %2714 = vmatpush1.bf16.xpose.msra.mxu0 0
          %2715 = vmatprep.subr.bf16.mxu0 0
          %2716 = vmatpush1.bf16.xpose.msra.mxu0 0
          %2717 = vmatprep.subr.bf16.mxu0 0
          %2718 = vmatpush1.bf16.xpose.msra.mxu0 0
          %2719 = vmatprep.subr.bf16.mxu0 0
          %2720 = vmatpush1.bf16.xpose.msra.mxu0 0
          %2721 = vmatprep.subr.bf16.mxu0 0
          %2722 = vmatpush1.bf16.xpose.msra.mxu0 0
          %2723 = vmatprep.subr.bf16.mxu0 0
          %2724 = vmatpush1.bf16.xpose.msra.mxu0 0
          %2725 = vmatprep.subr.bf16.mxu0 0
          %2726 = vmatpush1.bf16.xpose.msra.mxu0 0
          %2727 = vmatprep.subr.bf16.mxu0 0
          %2728 = vmatpush1.bf16.xpose.msra.mxu0 0
          %2729 = vmatprep.subr.bf16.mxu0 0
          %2730 = vmatpush1.bf16.xpose.msra.mxu0 0
          %2731 = vmatprep.subr.bf16.mxu0 0
          %2732 = vmatpush1.bf16.xpose.msra.mxu0 0
          %2733 = vmatprep.mubr.bf16.mxu0 %v2392
          %2734 = vmatmul.mubr.bf16.gmra.mrb[0].mxu0 %v2391
          %v2735 = vpop.f32.mrb[0].mxu0
          %v2736 = vadd.f32 %v2671, %v2735
          %v2737 = vpop.f32.mrb[0].mxu0
          %v2738 = vpop.f32.mrb[0].mxu0
          %v2739 = vadd.f32 %v2674, %v2738
          %v2740 = vpop.f32.mrb[0].mxu0
          %2741 = vmatprep.mubr.bf16.mxu0 %v2415
          %2742 = vmatmul.mubr.bf16.gmra.mrb[0].mxu0 %v2414
          %v2743 = vpop.f32.mrb[0].mxu0
          %v2744 = vadd.f32 %v2679, %v2743
          %v2745 = vpop.f32.mrb[0].mxu0
          %v2746 = vpop.f32.mrb[0].mxu0
          %v2747 = vadd.f32 %v2682, %v2746
          %v2748 = vpop.f32.mrb[0].mxu0
          %2749 = vmatprep.mubr.bf16.mxu0 %v2438
          %2750 = vmatmul.mubr.bf16.gmra.mrb[0].mxu0 %v2437
          %v2751 = vpop.f32.mrb[0].mxu0
          %v2752 = vadd.f32 %v2687, %v2751
          %v2753 = vpop.f32.mrb[0].mxu0
          %v2754 = vpop.f32.mrb[0].mxu0
          %v2755 = vadd.f32 %v2690, %v2754
          %v2756 = vpop.f32.mrb[0].mxu0
          %2757 = vmatprep.mubr.bf16.mxu0 %v2461
          %2758 = vmatmul.mubr.bf16.gmra.mrb[0].mxu0 %v2460
          %v2759 = vpop.f32.mrb[0].mxu0
          %v2760 = vadd.f32 %v2695, %v2759
          %v2761 = vpop.f32.mrb[0].mxu0
          %v2762 = vpop.f32.mrb[0].mxu0
          %v2763 = vadd.f32 %v2698, %v2762
          %v2764 = vpop.f32.mrb[0].mxu0
          %2765 = vdwg.mxu0
          %2766 = vmatprep.subr.bf16.mxu0 %v1879
          %2767 = vmatpush1.bf16.xpose.msra.mxu0 %v1878
          %2768 = vmatprep.subr.bf16.mxu0 0
          %2769 = vmatpush1.bf16.xpose.msra.mxu0 0
          %2770 = vmatprep.subr.bf16.mxu0 0
          %2771 = vmatpush1.bf16.xpose.msra.mxu0 0
          %2772 = vmatprep.subr.bf16.mxu0 0
          %2773 = vmatpush1.bf16.xpose.msra.mxu0 0
          %2774 = vmatprep.subr.bf16.mxu0 0
          %2775 = vmatpush1.bf16.xpose.msra.mxu0 0
          %2776 = vmatprep.subr.bf16.mxu0 0
          %2777 = vmatpush1.bf16.xpose.msra.mxu0 0
          %2778 = vmatprep.subr.bf16.mxu0 0
          %2779 = vmatpush1.bf16.xpose.msra.mxu0 0
          %2780 = vmatprep.subr.bf16.mxu0 0
          %2781 = vmatpush1.bf16.xpose.msra.mxu0 0
          %2782 = vmatprep.subr.bf16.mxu0 0
          %2783 = vmatpush1.bf16.xpose.msra.mxu0 0
          %2784 = vmatprep.subr.bf16.mxu0 0
          %2785 = vmatpush1.bf16.xpose.msra.mxu0 0
          %2786 = vmatprep.subr.bf16.mxu0 0
          %2787 = vmatpush1.bf16.xpose.msra.mxu0 0
          %2788 = vmatprep.subr.bf16.mxu0 0
          %2789 = vmatpush1.bf16.xpose.msra.mxu0 0
          %2790 = vmatprep.subr.bf16.mxu0 0
          %2791 = vmatpush1.bf16.xpose.msra.mxu0 0
          %2792 = vmatprep.subr.bf16.mxu0 0
          %2793 = vmatpush1.bf16.xpose.msra.mxu0 0
          %2794 = vmatprep.subr.bf16.mxu0 0
          %2795 = vmatpush1.bf16.xpose.msra.mxu0 0
          %2796 = vmatprep.subr.bf16.mxu0 0
          %2797 = vmatpush1.bf16.xpose.msra.mxu0 0
          %2798 = vmatprep.mubr.bf16.mxu0 %v2394
          %2799 = vmatmul.mubr.bf16.gmra.mrb[0].mxu0 %v2393
          %v2800 = vpop.f32.mrb[0].mxu0
          %v2801 = vadd.f32 %v2736, %v2800
          %v2802 = vpop.f32.mrb[0].mxu0
          %v2803 = vpop.f32.mrb[0].mxu0
          %v2804 = vadd.f32 %v2739, %v2803
          %v2805 = vpop.f32.mrb[0].mxu0
          %2806 = vmatprep.mubr.bf16.mxu0 %v2417
          %2807 = vmatmul.mubr.bf16.gmra.mrb[0].mxu0 %v2416
          %v2808 = vpop.f32.mrb[0].mxu0
          %v2809 = vadd.f32 %v2744, %v2808
          %v2810 = vpop.f32.mrb[0].mxu0
          %v2811 = vpop.f32.mrb[0].mxu0
          %v2812 = vadd.f32 %v2747, %v2811
          %v2813 = vpop.f32.mrb[0].mxu0
          %2814 = vmatprep.mubr.bf16.mxu0 %v2440
          %2815 = vmatmul.mubr.bf16.gmra.mrb[0].mxu0 %v2439
          %v2816 = vpop.f32.mrb[0].mxu0
          %v2817 = vadd.f32 %v2752, %v2816
          %v2818 = vpop.f32.mrb[0].mxu0
          %v2819 = vpop.f32.mrb[0].mxu0
          %v2820 = vadd.f32 %v2755, %v2819
          %v2821 = vpop.f32.mrb[0].mxu0
          %2822 = vmatprep.mubr.bf16.mxu0 %v2463
          %2823 = vmatmul.mubr.bf16.gmra.mrb[0].mxu0 %v2462
          %v2824 = vpop.f32.mrb[0].mxu0
          %v2825 = vadd.f32 %v2760, %v2824
          %v2826 = vpop.f32.mrb[0].mxu0
          %v2827 = vpop.f32.mrb[0].mxu0
          %v2828 = vadd.f32 %v2763, %v2827
          %v2829 = vpop.f32.mrb[0].mxu0
          %2830 = vdwg.mxu0
          %2831 = vmatprep.subr.bf16.mxu0 %v1881
          %2832 = vmatpush1.bf16.xpose.msra.mxu0 %v1880
          %2833 = vmatprep.subr.bf16.mxu0 0
          %2834 = vmatpush1.bf16.xpose.msra.mxu0 0
          %2835 = vmatprep.subr.bf16.mxu0 0
          %2836 = vmatpush1.bf16.xpose.msra.mxu0 0
          %2837 = vmatprep.subr.bf16.mxu0 0
          %2838 = vmatpush1.bf16.xpose.msra.mxu0 0
          %2839 = vmatprep.subr.bf16.mxu0 0
          %2840 = vmatpush1.bf16.xpose.msra.mxu0 0
          %2841 = vmatprep.subr.bf16.mxu0 0
          %2842 = vmatpush1.bf16.xpose.msra.mxu0 0
          %2843 = vmatprep.subr.bf16.mxu0 0
          %2844 = vmatpush1.bf16.xpose.msra.mxu0 0
          %2845 = vmatprep.subr.bf16.mxu0 0
          %2846 = vmatpush1.bf16.xpose.msra.mxu0 0
          %2847 = vmatprep.subr.bf16.mxu0 0
          %2848 = vmatpush1.bf16.xpose.msra.mxu0 0
          %2849 = vmatprep.subr.bf16.mxu0 0
          %2850 = vmatpush1.bf16.xpose.msra.mxu0 0
          %2851 = vmatprep.subr.bf16.mxu0 0
          %2852 = vmatpush1.bf16.xpose.msra.mxu0 0
          %2853 = vmatprep.subr.bf16.mxu0 0
          %2854 = vmatpush1.bf16.xpose.msra.mxu0 0
          %2855 = vmatprep.subr.bf16.mxu0 0
          %2856 = vmatpush1.bf16.xpose.msra.mxu0 0
          %2857 = vmatprep.subr.bf16.mxu0 0
          %2858 = vmatpush1.bf16.xpose.msra.mxu0 0
          %2859 = vmatprep.subr.bf16.mxu0 0
          %2860 = vmatpush1.bf16.xpose.msra.mxu0 0
          %2861 = vmatprep.subr.bf16.mxu0 0
          %2862 = vmatpush1.bf16.xpose.msra.mxu0 0
          %2863 = vmatprep.mubr.bf16.mxu0 %v2396
          %2864 = vmatmul.mubr.bf16.gmra.mrb[0].mxu0 %v2395
          %v2865 = vpop.f32.mrb[0].mxu0
          %v2866 = vadd.f32 %v2801, %v2865
          %v2867 = vpop.f32.mrb[0].mxu0
          %v2868 = vpop.f32.mrb[0].mxu0
          %v2869 = vadd.f32 %v2804, %v2868
          %v2870 = vpop.f32.mrb[0].mxu0
          %2871 = vmatprep.mubr.bf16.mxu0 %v2419
          %2872 = vmatmul.mubr.bf16.gmra.mrb[0].mxu0 %v2418
          %v2873 = vpop.f32.mrb[0].mxu0
          %v2874 = vadd.f32 %v2809, %v2873
          %v2875 = vpop.f32.mrb[0].mxu0
          %v2876 = vpop.f32.mrb[0].mxu0
          %v2877 = vadd.f32 %v2812, %v2876
          %v2878 = vpop.f32.mrb[0].mxu0
          %2879 = vmatprep.mubr.bf16.mxu0 %v2442
          %2880 = vmatmul.mubr.bf16.gmra.mrb[0].mxu0 %v2441
          %v2881 = vpop.f32.mrb[0].mxu0
          %v2882 = vadd.f32 %v2817, %v2881
          %v2883 = vpop.f32.mrb[0].mxu0
          %v2884 = vpop.f32.mrb[0].mxu0
          %v2885 = vadd.f32 %v2820, %v2884
          %v2886 = vpop.f32.mrb[0].mxu0
          %2887 = vmatprep.mubr.bf16.mxu0 %v2465
          %2888 = vmatmul.mubr.bf16.gmra.mrb[0].mxu0 %v2464
          %v2889 = vpop.f32.mrb[0].mxu0
          %v2890 = vadd.f32 %v2825, %v2889
          %v2891 = vpop.f32.mrb[0].mxu0
          %v2892 = vpop.f32.mrb[0].mxu0
          %v2893 = vadd.f32 %v2828, %v2892
          %v2894 = vpop.f32.mrb[0].mxu0
          %2895 = vdwg.mxu0
          %2896 = vmatprep.subr.bf16.mxu0 %v1883
          %2897 = vmatpush1.bf16.xpose.msra.mxu0 %v1882
          %2898 = vmatprep.subr.bf16.mxu0 0
          %2899 = vmatpush1.bf16.xpose.msra.mxu0 0
          %2900 = vmatprep.subr.bf16.mxu0 0
          %2901 = vmatpush1.bf16.xpose.msra.mxu0 0
          %2902 = vmatprep.subr.bf16.mxu0 0
          %2903 = vmatpush1.bf16.xpose.msra.mxu0 0
          %2904 = vmatprep.subr.bf16.mxu0 0
          %2905 = vmatpush1.bf16.xpose.msra.mxu0 0
          %2906 = vmatprep.subr.bf16.mxu0 0
          %2907 = vmatpush1.bf16.xpose.msra.mxu0 0
          %2908 = vmatprep.subr.bf16.mxu0 0
          %2909 = vmatpush1.bf16.xpose.msra.mxu0 0
          %2910 = vmatprep.subr.bf16.mxu0 0
          %2911 = vmatpush1.bf16.xpose.msra.mxu0 0
          %2912 = vmatprep.subr.bf16.mxu0 0
          %2913 = vmatpush1.bf16.xpose.msra.mxu0 0
          %2914 = vmatprep.subr.bf16.mxu0 0
          %2915 = vmatpush1.bf16.xpose.msra.mxu0 0
          %2916 = vmatprep.subr.bf16.mxu0 0
          %2917 = vmatpush1.bf16.xpose.msra.mxu0 0
          %2918 = vmatprep.subr.bf16.mxu0 0
          %2919 = vmatpush1.bf16.xpose.msra.mxu0 0
          %2920 = vmatprep.subr.bf16.mxu0 0
          %2921 = vmatpush1.bf16.xpose.msra.mxu0 0
          %2922 = vmatprep.subr.bf16.mxu0 0
          %2923 = vmatpush1.bf16.xpose.msra.mxu0 0
          %2924 = vmatprep.subr.bf16.mxu0 0
          %2925 = vmatpush1.bf16.xpose.msra.mxu0 0
          %2926 = vmatprep.subr.bf16.mxu0 0
          %2927 = vmatpush1.bf16.xpose.msra.mxu0 0
          %2928 = vmatprep.mubr.bf16.mxu0 %v2398
          %2929 = vmatmul.mubr.bf16.gmra.mrb[0].mxu0 %v2397
          %v2930 = vpop.f32.mrb[0].mxu0
          %v2931 = vadd.f32 %v2866, %v2930
          %v2932 = vpop.f32.mrb[0].mxu0
          %v2933 = vpop.f32.mrb[0].mxu0
          %v2934 = vadd.f32 %v2869, %v2933
          %v2935 = vpop.f32.mrb[0].mxu0
          %2936 = vmatprep.mubr.bf16.mxu0 %v2421
          %2937 = vmatmul.mubr.bf16.gmra.mrb[0].mxu0 %v2420
          %v2938 = vpop.f32.mrb[0].mxu0
          %v2939 = vadd.f32 %v2874, %v2938
          %v2940 = vpop.f32.mrb[0].mxu0
          %v2941 = vpop.f32.mrb[0].mxu0
          %v2942 = vadd.f32 %v2877, %v2941
          %v2943 = vpop.f32.mrb[0].mxu0
          %2944 = vmatprep.mubr.bf16.mxu0 %v2444
          %2945 = vmatmul.mubr.bf16.gmra.mrb[0].mxu0 %v2443
          %v2946 = vpop.f32.mrb[0].mxu0
          %v2947 = vadd.f32 %v2882, %v2946
          %v2948 = vpop.f32.mrb[0].mxu0
          %v2949 = vpop.f32.mrb[0].mxu0
          %v2950 = vadd.f32 %v2885, %v2949
          %v2951 = vpop.f32.mrb[0].mxu0
          %2952 = vmatprep.mubr.bf16.mxu0 %v2467
          %2953 = vmatmul.mubr.bf16.gmra.mrb[0].mxu0 %v2466
          %v2954 = vpop.f32.mrb[0].mxu0
          %v2955 = vadd.f32 %v2890, %v2954
          %v2956 = vpop.f32.mrb[0].mxu0
          %v2957 = vpop.f32.mrb[0].mxu0
          %v2958 = vadd.f32 %v2893, %v2957
          %v2959 = vpop.f32.mrb[0].mxu0
          %2960 = vdwg.mxu0
          %2961 = vmatprep.subr.bf16.mxu0 %v1885
          %2962 = vmatpush1.bf16.xpose.msra.mxu0 %v1884
          %2963 = vmatprep.subr.bf16.mxu0 0
          %2964 = vmatpush1.bf16.xpose.msra.mxu0 0
          %2965 = vmatprep.subr.bf16.mxu0 0
          %2966 = vmatpush1.bf16.xpose.msra.mxu0 0
          %2967 = vmatprep.subr.bf16.mxu0 0
          %2968 = vmatpush1.bf16.xpose.msra.mxu0 0
          %2969 = vmatprep.subr.bf16.mxu0 0
          %2970 = vmatpush1.bf16.xpose.msra.mxu0 0
          %2971 = vmatprep.subr.bf16.mxu0 0
          %2972 = vmatpush1.bf16.xpose.msra.mxu0 0
          %2973 = vmatprep.subr.bf16.mxu0 0
          %2974 = vmatpush1.bf16.xpose.msra.mxu0 0
          %2975 = vmatprep.subr.bf16.mxu0 0
          %2976 = vmatpush1.bf16.xpose.msra.mxu0 0
          %2977 = vmatprep.subr.bf16.mxu0 0
          %2978 = vmatpush1.bf16.xpose.msra.mxu0 0
          %2979 = vmatprep.subr.bf16.mxu0 0
          %2980 = vmatpush1.bf16.xpose.msra.mxu0 0
          %2981 = vmatprep.subr.bf16.mxu0 0
          %2982 = vmatpush1.bf16.xpose.msra.mxu0 0
          %2983 = vmatprep.subr.bf16.mxu0 0
          %2984 = vmatpush1.bf16.xpose.msra.mxu0 0
          %2985 = vmatprep.subr.bf16.mxu0 0
          %2986 = vmatpush1.bf16.xpose.msra.mxu0 0
          %2987 = vmatprep.subr.bf16.mxu0 0
          %2988 = vmatpush1.bf16.xpose.msra.mxu0 0
          %2989 = vmatprep.subr.bf16.mxu0 0
          %2990 = vmatpush1.bf16.xpose.msra.mxu0 0
          %2991 = vmatprep.subr.bf16.mxu0 0
          %2992 = vmatpush1.bf16.xpose.msra.mxu0 0
          %2993 = vmatprep.mubr.bf16.mxu0 %v2400
          %2994 = vmatmul.mubr.bf16.gmra.mrb[0].mxu0 %v2399
          %v2995 = vpop.f32.mrb[0].mxu0
          %v2996 = vadd.f32 %v2931, %v2995
          %v2997 = vpop.f32.mrb[0].mxu0
          %v2998 = vpop.f32.mrb[0].mxu0
          %v2999 = vadd.f32 %v2934, %v2998
          %v3000 = vpop.f32.mrb[0].mxu0
          %3001 = vmatprep.mubr.bf16.mxu0 %v2423
          %3002 = vmatmul.mubr.bf16.gmra.mrb[0].mxu0 %v2422
          %v3003 = vpop.f32.mrb[0].mxu0
          %v3004 = vadd.f32 %v2939, %v3003
          %v3005 = vpop.f32.mrb[0].mxu0
          %v3006 = vpop.f32.mrb[0].mxu0
          %v3007 = vadd.f32 %v2942, %v3006
          %v3008 = vpop.f32.mrb[0].mxu0
          %3009 = vmatprep.mubr.bf16.mxu0 %v2446
          %3010 = vmatmul.mubr.bf16.gmra.mrb[0].mxu0 %v2445
          %v3011 = vpop.f32.mrb[0].mxu0
          %v3012 = vadd.f32 %v2947, %v3011
          %v3013 = vpop.f32.mrb[0].mxu0
          %v3014 = vpop.f32.mrb[0].mxu0
          %v3015 = vadd.f32 %v2950, %v3014
          %v3016 = vpop.f32.mrb[0].mxu0
          %3017 = vmatprep.mubr.bf16.mxu0 %v2469
          %3018 = vmatmul.mubr.bf16.gmra.mrb[0].mxu0 %v2468
          %v3019 = vpop.f32.mrb[0].mxu0
          %v3020 = vadd.f32 %v2955, %v3019
          %v3021 = vpop.f32.mrb[0].mxu0
          %v3022 = vpop.f32.mrb[0].mxu0
          %v3023 = vadd.f32 %v2958, %v3022
          %v3024 = vpop.f32.mrb[0].mxu0
          %3025 = vdwg.mxu0
          %3026 = vmatprep.subr.bf16.mxu0 %v1887
          %3027 = vmatpush1.bf16.xpose.msra.mxu0 %v1886
          %3028 = vmatprep.subr.bf16.mxu0 0
          %3029 = vmatpush1.bf16.xpose.msra.mxu0 0
          %3030 = vmatprep.subr.bf16.mxu0 0
          %3031 = vmatpush1.bf16.xpose.msra.mxu0 0
          %3032 = vmatprep.subr.bf16.mxu0 0
          %3033 = vmatpush1.bf16.xpose.msra.mxu0 0
          %3034 = vmatprep.subr.bf16.mxu0 0
          %3035 = vmatpush1.bf16.xpose.msra.mxu0 0
          %3036 = vmatprep.subr.bf16.mxu0 0
          %3037 = vmatpush1.bf16.xpose.msra.mxu0 0
          %3038 = vmatprep.subr.bf16.mxu0 0
          %3039 = vmatpush1.bf16.xpose.msra.mxu0 0
          %3040 = vmatprep.subr.bf16.mxu0 0
          %3041 = vmatpush1.bf16.xpose.msra.mxu0 0
          %3042 = vmatprep.subr.bf16.mxu0 0
          %3043 = vmatpush1.bf16.xpose.msra.mxu0 0
          %3044 = vmatprep.subr.bf16.mxu0 0
          %3045 = vmatpush1.bf16.xpose.msra.mxu0 0
          %3046 = vmatprep.subr.bf16.mxu0 0
          %3047 = vmatpush1.bf16.xpose.msra.mxu0 0
          %3048 = vmatprep.subr.bf16.mxu0 0
          %3049 = vmatpush1.bf16.xpose.msra.mxu0 0
          %3050 = vmatprep.subr.bf16.mxu0 0
          %3051 = vmatpush1.bf16.xpose.msra.mxu0 0
          %3052 = vmatprep.subr.bf16.mxu0 0
          %3053 = vmatpush1.bf16.xpose.msra.mxu0 0
          %3054 = vmatprep.subr.bf16.mxu0 0
          %3055 = vmatpush1.bf16.xpose.msra.mxu0 0
          %3056 = vmatprep.subr.bf16.mxu0 0
          %3057 = vmatpush1.bf16.xpose.msra.mxu0 0
          %3058 = vmatprep.mubr.bf16.mxu0 %v2402
          %3059 = vmatmul.mubr.bf16.gmra.mrb[0].mxu0 %v2401
          %v3060 = vpop.f32.mrb[0].mxu0
          %v3061 = vadd.f32 %v2996, %v3060
          %v3062 = vpop.f32.mrb[0].mxu0
          %v3063 = vpop.f32.mrb[0].mxu0
          %v3064 = vadd.f32 %v2999, %v3063
          %v3065 = vpop.f32.mrb[0].mxu0
          %3066 = vmatprep.mubr.bf16.mxu0 %v2425
          %3067 = vmatmul.mubr.bf16.gmra.mrb[0].mxu0 %v2424
          %v3068 = vpop.f32.mrb[0].mxu0
          %v3069 = vadd.f32 %v3004, %v3068
          %v3070 = vpop.f32.mrb[0].mxu0
          %v3071 = vpop.f32.mrb[0].mxu0
          %v3072 = vadd.f32 %v3007, %v3071
          %v3073 = vpop.f32.mrb[0].mxu0
          %3074 = vmatprep.mubr.bf16.mxu0 %v2448
          %3075 = vmatmul.mubr.bf16.gmra.mrb[0].mxu0 %v2447
          %v3076 = vpop.f32.mrb[0].mxu0
          %v3077 = vadd.f32 %v3012, %v3076
          %v3078 = vpop.f32.mrb[0].mxu0
          %v3079 = vpop.f32.mrb[0].mxu0
          %v3080 = vadd.f32 %v3015, %v3079
          %v3081 = vpop.f32.mrb[0].mxu0
          %3082 = vmatprep.mubr.bf16.mxu0 %v2471
          %3083 = vmatmul.mubr.bf16.gmra.mrb[0].mxu0 %v2470
          %v3084 = vpop.f32.mrb[0].mxu0
          %v3085 = vadd.f32 %v3020, %v3084
          %v3086 = vpop.f32.mrb[0].mxu0
          %v3087 = vpop.f32.mrb[0].mxu0
          %v3088 = vadd.f32 %v3023, %v3087
          %v3089 = vpop.f32.mrb[0].mxu0
          %3090 = vdwg.mxu0
          %3091 = vmatprep.subr.bf16.mxu0 %v1889
          %3092 = vmatpush1.bf16.xpose.msra.mxu0 %v1888
          %3093 = vmatprep.subr.bf16.mxu0 0
          %3094 = vmatpush1.bf16.xpose.msra.mxu0 0
          %3095 = vmatprep.subr.bf16.mxu0 0
          %3096 = vmatpush1.bf16.xpose.msra.mxu0 0
          %3097 = vmatprep.subr.bf16.mxu0 0
          %3098 = vmatpush1.bf16.xpose.msra.mxu0 0
          %3099 = vmatprep.subr.bf16.mxu0 0
          %3100 = vmatpush1.bf16.xpose.msra.mxu0 0
          %3101 = vmatprep.subr.bf16.mxu0 0
          %3102 = vmatpush1.bf16.xpose.msra.mxu0 0
          %3103 = vmatprep.subr.bf16.mxu0 0
          %3104 = vmatpush1.bf16.xpose.msra.mxu0 0
          %3105 = vmatprep.subr.bf16.mxu0 0
          %3106 = vmatpush1.bf16.xpose.msra.mxu0 0
          %3107 = vmatprep.subr.bf16.mxu0 0
          %3108 = vmatpush1.bf16.xpose.msra.mxu0 0
          %3109 = vmatprep.subr.bf16.mxu0 0
          %3110 = vmatpush1.bf16.xpose.msra.mxu0 0
          %3111 = vmatprep.subr.bf16.mxu0 0
          %3112 = vmatpush1.bf16.xpose.msra.mxu0 0
          %3113 = vmatprep.subr.bf16.mxu0 0
          %3114 = vmatpush1.bf16.xpose.msra.mxu0 0
          %3115 = vmatprep.subr.bf16.mxu0 0
          %3116 = vmatpush1.bf16.xpose.msra.mxu0 0
          %3117 = vmatprep.subr.bf16.mxu0 0
          %3118 = vmatpush1.bf16.xpose.msra.mxu0 0
          %3119 = vmatprep.subr.bf16.mxu0 0
          %3120 = vmatpush1.bf16.xpose.msra.mxu0 0
          %3121 = vmatprep.subr.bf16.mxu0 0
          %3122 = vmatpush1.bf16.xpose.msra.mxu0 0
          %3123 = vmatprep.mubr.bf16.mxu0 %v2404
          %3124 = vmatmul.mubr.bf16.gmra.mrb[0].mxu0 %v2403
          %v3125 = vpop.f32.mrb[0].mxu0
          %v3126 = vadd.f32 %v3061, %v3125
          %v3127 = vpop.f32.mrb[0].mxu0
          %v3128 = vpop.f32.mrb[0].mxu0
          %v3129 = vadd.f32 %v3064, %v3128
          %v3130 = vpop.f32.mrb[0].mxu0
          %3131 = vmatprep.mubr.bf16.mxu0 %v2427
          %3132 = vmatmul.mubr.bf16.gmra.mrb[0].mxu0 %v2426
          %v3133 = vpop.f32.mrb[0].mxu0
          %v3134 = vadd.f32 %v3069, %v3133
          %v3135 = vpop.f32.mrb[0].mxu0
          %v3136 = vpop.f32.mrb[0].mxu0
          %v3137 = vadd.f32 %v3072, %v3136
          %v3138 = vpop.f32.mrb[0].mxu0
          %3139 = vmatprep.mubr.bf16.mxu0 %v2450
          %3140 = vmatmul.mubr.bf16.gmra.mrb[0].mxu0 %v2449
          %v3141 = vpop.f32.mrb[0].mxu0
          %v3142 = vadd.f32 %v3077, %v3141
          %v3143 = vpop.f32.mrb[0].mxu0
          %v3144 = vpop.f32.mrb[0].mxu0
          %v3145 = vadd.f32 %v3080, %v3144
          %v3146 = vpop.f32.mrb[0].mxu0
          %3147 = vmatprep.mubr.bf16.mxu0 %v2473
          %3148 = vmatmul.mubr.bf16.gmra.mrb[0].mxu0 %v2472
          %v3149 = vpop.f32.mrb[0].mxu0
          %v3150 = vadd.f32 %v3085, %v3149
          %v3151 = vpop.f32.mrb[0].mxu0
          %v3152 = vpop.f32.mrb[0].mxu0
          %v3153 = vadd.f32 %v3088, %v3152
          %v3154 = vpop.f32.mrb[0].mxu0
          %3155 = vdwg.mxu0
          %3156 = vmatprep.subr.bf16.mxu0 %v1891
          %3157 = vmatpush1.bf16.xpose.msra.mxu0 %v1890
          %3158 = vmatprep.subr.bf16.mxu0 0
          %3159 = vmatpush1.bf16.xpose.msra.mxu0 0
          %3160 = vmatprep.subr.bf16.mxu0 0
          %3161 = vmatpush1.bf16.xpose.msra.mxu0 0
          %3162 = vmatprep.subr.bf16.mxu0 0
          %3163 = vmatpush1.bf16.xpose.msra.mxu0 0
          %3164 = vmatprep.subr.bf16.mxu0 0
          %3165 = vmatpush1.bf16.xpose.msra.mxu0 0
          %3166 = vmatprep.subr.bf16.mxu0 0
          %3167 = vmatpush1.bf16.xpose.msra.mxu0 0
          %3168 = vmatprep.subr.bf16.mxu0 0
          %3169 = vmatpush1.bf16.xpose.msra.mxu0 0
          %3170 = vmatprep.subr.bf16.mxu0 0
          %3171 = vmatpush1.bf16.xpose.msra.mxu0 0
          %3172 = vmatprep.subr.bf16.mxu0 0
          %3173 = vmatpush1.bf16.xpose.msra.mxu0 0
          %3174 = vmatprep.subr.bf16.mxu0 0
          %3175 = vmatpush1.bf16.xpose.msra.mxu0 0
          %3176 = vmatprep.subr.bf16.mxu0 0
          %3177 = vmatpush1.bf16.xpose.msra.mxu0 0
          %3178 = vmatprep.subr.bf16.mxu0 0
          %3179 = vmatpush1.bf16.xpose.msra.mxu0 0
          %3180 = vmatprep.subr.bf16.mxu0 0
          %3181 = vmatpush1.bf16.xpose.msra.mxu0 0
          %3182 = vmatprep.subr.bf16.mxu0 0
          %3183 = vmatpush1.bf16.xpose.msra.mxu0 0
          %3184 = vmatprep.subr.bf16.mxu0 0
          %3185 = vmatpush1.bf16.xpose.msra.mxu0 0
          %3186 = vmatprep.subr.bf16.mxu0 0
          %3187 = vmatpush1.bf16.xpose.msra.mxu0 0
          %3188 = vmatprep.mubr.bf16.mxu0 %v2406
          %3189 = vmatmul.mubr.bf16.gmra.mrb[0].mxu0 %v2405
          %v3190 = vpop.f32.mrb[0].mxu0
          %v3191 = vadd.f32 %v3126, %v3190
          %v3192 = vpop.f32.mrb[0].mxu0
          %v3193 = vpop.f32.mrb[0].mxu0
          %v3194 = vadd.f32 %v3129, %v3193
          %v3195 = vpop.f32.mrb[0].mxu0
          %3196 = vmatprep.mubr.bf16.mxu0 %v2429
          %3197 = vmatmul.mubr.bf16.gmra.mrb[0].mxu0 %v2428
          %v3198 = vpop.f32.mrb[0].mxu0
          %v3199 = vadd.f32 %v3134, %v3198
          %v3200 = vpop.f32.mrb[0].mxu0
          %v3201 = vpop.f32.mrb[0].mxu0
          %v3202 = vadd.f32 %v3137, %v3201
          %v3203 = vpop.f32.mrb[0].mxu0
          %3204 = vmatprep.mubr.bf16.mxu0 %v2452
          %3205 = vmatmul.mubr.bf16.gmra.mrb[0].mxu0 %v2451
          %v3206 = vpop.f32.mrb[0].mxu0
          %v3207 = vadd.f32 %v3142, %v3206
          %v3208 = vpop.f32.mrb[0].mxu0
          %v3209 = vpop.f32.mrb[0].mxu0
          %v3210 = vadd.f32 %v3145, %v3209
          %v3211 = vpop.f32.mrb[0].mxu0
          %3212 = vmatprep.mubr.bf16.mxu0 %v2475
          %3213 = vmatmul.mubr.bf16.gmra.mrb[0].mxu0 %v2474
          %v3214 = vpop.f32.mrb[0].mxu0
          %v3215 = vadd.f32 %v3150, %v3214
          %v3216 = vpop.f32.mrb[0].mxu0
          %v3217 = vpop.f32.mrb[0].mxu0
          %v3218 = vadd.f32 %v3153, %v3217
          %v3219 = vpop.f32.mrb[0].mxu0
          %3220 = vdwg.mxu0
          %3221 = vmatprep.subr.bf16.mxu0 %v1893
          %3222 = vmatpush1.bf16.xpose.msra.mxu0 %v1892
          %3223 = vmatprep.subr.bf16.mxu0 0
          %3224 = vmatpush1.bf16.xpose.msra.mxu0 0
          %3225 = vmatprep.subr.bf16.mxu0 0
          %3226 = vmatpush1.bf16.xpose.msra.mxu0 0
          %3227 = vmatprep.subr.bf16.mxu0 0
          %3228 = vmatpush1.bf16.xpose.msra.mxu0 0
          %3229 = vmatprep.subr.bf16.mxu0 0
          %3230 = vmatpush1.bf16.xpose.msra.mxu0 0
          %3231 = vmatprep.subr.bf16.mxu0 0
          %3232 = vmatpush1.bf16.xpose.msra.mxu0 0
          %3233 = vmatprep.subr.bf16.mxu0 0
          %3234 = vmatpush1.bf16.xpose.msra.mxu0 0
          %3235 = vmatprep.subr.bf16.mxu0 0
          %3236 = vmatpush1.bf16.xpose.msra.mxu0 0
          %3237 = vmatprep.subr.bf16.mxu0 0
          %3238 = vmatpush1.bf16.xpose.msra.mxu0 0
          %3239 = vmatprep.subr.bf16.mxu0 0
          %3240 = vmatpush1.bf16.xpose.msra.mxu0 0
          %3241 = vmatprep.subr.bf16.mxu0 0
          %3242 = vmatpush1.bf16.xpose.msra.mxu0 0
          %3243 = vmatprep.subr.bf16.mxu0 0
          %3244 = vmatpush1.bf16.xpose.msra.mxu0 0
          %3245 = vmatprep.subr.bf16.mxu0 0
          %3246 = vmatpush1.bf16.xpose.msra.mxu0 0
          %3247 = vmatprep.subr.bf16.mxu0 0
          %3248 = vmatpush1.bf16.xpose.msra.mxu0 0
          %3249 = vmatprep.subr.bf16.mxu0 0
          %3250 = vmatpush1.bf16.xpose.msra.mxu0 0
          %3251 = vmatprep.subr.bf16.mxu0 0
          %3252 = vmatpush1.bf16.xpose.msra.mxu0 0
          %3253 = vmatprep.mubr.bf16.mxu0 %v2408
          %3254 = vmatmul.mubr.bf16.gmra.mrb[0].mxu0 %v2407
          %v3255 = vpop.f32.mrb[0].mxu0
          %v3256 = vadd.f32 %v3191, %v3255
          %v3257 = vpop.f32.mrb[0].mxu0
          %v3258 = vpop.f32.mrb[0].mxu0
          %v3259 = vadd.f32 %v3194, %v3258
          %v3260 = vpop.f32.mrb[0].mxu0
          %3261 = vmatprep.mubr.bf16.mxu0 %v2431
          %3262 = vmatmul.mubr.bf16.gmra.mrb[0].mxu0 %v2430
          %v3263 = vpop.f32.mrb[0].mxu0
          %v3264 = vadd.f32 %v3199, %v3263
          %v3265 = vpop.f32.mrb[0].mxu0
          %v3266 = vpop.f32.mrb[0].mxu0
          %v3267 = vadd.f32 %v3202, %v3266
          %v3268 = vpop.f32.mrb[0].mxu0
          %3269 = vmatprep.mubr.bf16.mxu0 %v2454
          %3270 = vmatmul.mubr.bf16.gmra.mrb[0].mxu0 %v2453
          %v3271 = vpop.f32.mrb[0].mxu0
          %v3272 = vadd.f32 %v3207, %v3271
          %v3273 = vpop.f32.mrb[0].mxu0
          %v3274 = vpop.f32.mrb[0].mxu0
          %v3275 = vadd.f32 %v3210, %v3274
          %v3276 = vpop.f32.mrb[0].mxu0
          %3277 = vmatprep.mubr.bf16.mxu0 %v2477
          %3278 = vmatmul.mubr.bf16.gmra.mrb[0].mxu0 %v2476
          %v3279 = vpop.f32.mrb[0].mxu0
          %v3280 = vadd.f32 %v3215, %v3279
          %v3281 = vpop.f32.mrb[0].mxu0
          %v3282 = vpop.f32.mrb[0].mxu0
          %v3283 = vadd.f32 %v3218, %v3282
          %v3284 = vpop.f32.mrb[0].mxu0
          %3285 = vdwg.mxu0
          %3286 = vmatprep.subr.bf16.mxu0 0
          %3287 = vmatpush1.bf16.xpose.msra.mxu0 %v1894
          %3288 = vmatprep.subr.bf16.mxu0 0
          %3289 = vmatpush1.bf16.xpose.msra.mxu0 0
          %3290 = vmatprep.subr.bf16.mxu0 0
          %3291 = vmatpush1.bf16.xpose.msra.mxu0 0
          %3292 = vmatprep.subr.bf16.mxu0 0
          %3293 = vmatpush1.bf16.xpose.msra.mxu0 0
          %3294 = vmatprep.subr.bf16.mxu0 0
          %3295 = vmatpush1.bf16.xpose.msra.mxu0 0
          %3296 = vmatprep.subr.bf16.mxu0 0
          %3297 = vmatpush1.bf16.xpose.msra.mxu0 0
          %3298 = vmatprep.subr.bf16.mxu0 0
          %3299 = vmatpush1.bf16.xpose.msra.mxu0 0
          %3300 = vmatprep.subr.bf16.mxu0 0
          %3301 = vmatpush1.bf16.xpose.msra.mxu0 0
          %3302 = vmatprep.subr.bf16.mxu0 0
          %3303 = vmatpush1.bf16.xpose.msra.mxu0 0
          %3304 = vmatprep.subr.bf16.mxu0 0
          %3305 = vmatpush1.bf16.xpose.msra.mxu0 0
          %3306 = vmatprep.subr.bf16.mxu0 0
          %3307 = vmatpush1.bf16.xpose.msra.mxu0 0
          %3308 = vmatprep.subr.bf16.mxu0 0
          %3309 = vmatpush1.bf16.xpose.msra.mxu0 0
          %3310 = vmatprep.subr.bf16.mxu0 0
          %3311 = vmatpush1.bf16.xpose.msra.mxu0 0
          %3312 = vmatprep.subr.bf16.mxu0 0
          %3313 = vmatpush1.bf16.xpose.msra.mxu0 0
          %3314 = vmatprep.subr.bf16.mxu0 0
          %3315 = vmatpush1.bf16.xpose.msra.mxu0 0
          %3316 = vmatprep.subr.bf16.mxu0 0
          %3317 = vmatpush1.bf16.xpose.msra.mxu0 0
          %3318 = vmatprep.mubr.bf16.mxu0 0
          %3319 = vmatmul.mubr.bf16.gmra.mrb[0].mxu0 %v2409
          %v3320 = vpop.f32.mrb[0].mxu0
          %v3321 = vadd.f32 %v3256, %v3320
          %v3322 = vpop.f32.mrb[0].mxu0
          %v3323 = vpop.f32.mrb[0].mxu0
          %v3324 = vadd.f32 %v3259, %v3323
          %v3325 = vpop.f32.mrb[0].mxu0
          %3326 = vmatprep.mubr.bf16.mxu0 0
          %3327 = vmatmul.mubr.bf16.gmra.mrb[0].mxu0 %v2432
          %v3328 = vpop.f32.mrb[0].mxu0
          %v3329 = vadd.f32 %v3264, %v3328
          %v3330 = vpop.f32.mrb[0].mxu0
          %v3331 = vpop.f32.mrb[0].mxu0
          %v3332 = vadd.f32 %v3267, %v3331
          %v3333 = vpop.f32.mrb[0].mxu0
          %3334 = vmatprep.mubr.bf16.mxu0 0
          %3335 = vmatmul.mubr.bf16.gmra.mrb[0].mxu0 %v2455
          %v3336 = vpop.f32.mrb[0].mxu0
          %v3337 = vadd.f32 %v3272, %v3336
          %v3338 = vpop.f32.mrb[0].mxu0
          %v3339 = vpop.f32.mrb[0].mxu0
          %v3340 = vadd.f32 %v3275, %v3339
          %v3341 = vpop.f32.mrb[0].mxu0
          %3342 = vmatprep.mubr.bf16.mxu0 0
          %3343 = vmatmul.mubr.bf16.gmra.mrb[0].mxu0 %v2478
          %v3344 = vpop.f32.mrb[0].mxu0
          %v3345 = vadd.f32 %v3280, %v3344
          %v3346 = vpop.f32.mrb[0].mxu0
          %v3347 = vpop.f32.mrb[0].mxu0
          %v3348 = vadd.f32 %v3283, %v3347
          %v3349 = vpop.f32.mrb[0].mxu0
          %3350 = vdwg.mxu0
          %v3351 = vadd.f32 %v2099, %v3321
          %v3352 = vadd.f32 %v2100, %v3324
          %v3353 = vadd.f32 %v2101, %v3329
          %v3354 = vadd.f32 %v2102, %v3332
          %v3355 = vadd.f32 %v2103, %v3337
          %v3356 = vadd.f32 %v2104, %v3340
          %v3357 = vadd.f32 %v2105, %v3345
          %v3358 = vadd.f32 %v2106, %v3348
          %vm3359 = vcmask 64512
          %3360 = vst.msk [vmem:[#allocation2] sm:$0xff] %vm3359, %v3351
          %3361 = vst.msk [vmem:[#allocation2 + $0x8] sm:$0xff] %vm3359, %v3352
          %3362 = vst.msk [vmem:[#allocation2 + $0x10] sm:$0xff] %vm3359, %v3353
          %3363 = vst.msk [vmem:[#allocation2 + $0x18] sm:$0xff] %vm3359, %v3354
          %3364 = vst.msk [vmem:[#allocation2 + $0x20] sm:$0xff] %vm3359, %v3355
          %3365 = vst.msk [vmem:[#allocation2 + $0x28] sm:$0xff] %vm3359, %v3356
          %3366 = vst.msk [vmem:[#allocation2 + $0x30] sm:$0xff] %vm3359, %v3357
          %3367 = vst.msk [vmem:[#allocation2 + $0x38] sm:$0xff] %vm3359, %v3358
          %v3368 = vld [vmem:[#allocation2] sm:$0xff]
          %v3369 = vld [vmem:[#allocation2 + $0x8] sm:$0xff]
          %v3370 = vld [vmem:[#allocation2 + $0x10] sm:$0xff]
          %v3371 = vld [vmem:[#allocation2 + $0x18] sm:$0xff]
          %v3372 = vld [vmem:[#allocation2 + $0x20] sm:$0xff]
          %v3373 = vld [vmem:[#allocation2 + $0x28] sm:$0xff]
          %v3374 = vld [vmem:[#allocation2 + $0x30] sm:$0xff]
          %v3375 = vld [vmem:[#allocation2 + $0x38] sm:$0xff]
          %v3376 = vld [vmem:[%s2] sm:$0xff]
          %v3377 = vld [vmem:[%s2 + $0x8] sm:$0xff]
          %v3378 = vld [vmem:[%s2 + $0x10] sm:$0xff]
          %v3379 = vld [vmem:[%s2 + $0x18] sm:$0xff]
          %v3380 = vld [vmem:[%s2 + $0x20] sm:$0xff]
          %v3381 = vld [vmem:[%s2 + $0x28] sm:$0xff]
          %v3382 = vld [vmem:[%s2 + $0x30] sm:$0xff]
          %v3383 = vld [vmem:[%s2 + $0x38] sm:$0xff]
          %3385 = vset.pattern.permute.xlu0 0
          %3386 = vperm.xlu0 %3385, %v3376
          %v3387 = vpop.permute.xlu0 %3386
          %3390 = vset.pattern.permute.xlu0 0
          %3391 = vperm.xlu0 %3390, %v3377
          %v3392 = vpop.permute.xlu0 %3391
          %3395 = vset.pattern.permute.xlu0 0
          %3396 = vperm.xlu0 %3395, %v3378
          %v3397 = vpop.permute.xlu0 %3396
          %3400 = vset.pattern.permute.xlu0 0
          %3401 = vperm.xlu0 %3400, %v3379
          %v3402 = vpop.permute.xlu0 %3401
          %3405 = vset.pattern.permute.xlu0 0
          %3406 = vperm.xlu0 %3405, %v3380
          %v3407 = vpop.permute.xlu0 %3406
          %3410 = vset.pattern.permute.xlu0 0
          %3411 = vperm.xlu0 %3410, %v3381
          %v3412 = vpop.permute.xlu0 %3411
          %3415 = vset.pattern.permute.xlu0 0
          %3416 = vperm.xlu0 %3415, %v3382
          %v3417 = vpop.permute.xlu0 %3416
          %3420 = vset.pattern.permute.xlu0 0
          %3421 = vperm.xlu0 %3420, %v3383
          %v3422 = vpop.permute.xlu0 %3421
          %v3424 = vadd.f32 %v3368, %v3387
          %v3425 = vadd.f32 %v3369, %v3392
          %v3426 = vadd.f32 %v3370, %v3397
          %v3427 = vadd.f32 %v3371, %v3402
          %v3428 = vadd.f32 %v3372, %v3407
          %v3429 = vadd.f32 %v3373, %v3412
          %v3430 = vadd.f32 %v3374, %v3417
          %v3431 = vadd.f32 %v3375, %v3422
          %v3432 = vmax.f32 %v3424, 0.0
          %v3433 = vmax.f32 %v3425, 0.0
          %v3434 = vmax.f32 %v3426, 0.0
          %v3435 = vmax.f32 %v3427, 0.0
          %v3436 = vmax.f32 %v3428, 0.0
          %v3437 = vmax.f32 %v3429, 0.0
          %v3438 = vmax.f32 %v3430, 0.0
          %v3439 = vmax.f32 %v3431, 0.0
          %v3440 = vld [vmem:[%s3] sm:$0xff]
          %v3441 = vld [vmem:[%s3 + $0x8] sm:$0xff]
          %v3442 = vld [vmem:[%s3 + $0x10] sm:$0xff]
          %v3443 = vld [vmem:[%s3 + $0x18] sm:$0xff]
          %v3444 = vld [vmem:[%s3 + $0x20] sm:$0xff]
          %v3445 = vld [vmem:[%s3 + $0x28] sm:$0xff]
          %v3446 = vld [vmem:[%s3 + $0x30] sm:$0xff]
          %v3447 = vld [vmem:[%s3 + $0x38] sm:$0xff]
          %v3448 = vld [vmem:[%s4] sm:$0xff]
          %v3449 = vld [vmem:[%s4 + $0x8] sm:$0xff]
          %v3450 = vld [vmem:[%s4 + $0x10] sm:$0xff]
          %v3451 = vld [vmem:[%s4 + $0x18] sm:$0xff]
          %v3452 = vld [vmem:[%s4 + $0x20] sm:$0xff]
          %v3453 = vld [vmem:[%s4 + $0x28] sm:$0xff]
          %v3454 = vld [vmem:[%s4 + $0x30] sm:$0xff]
          %v3455 = vld [vmem:[%s4 + $0x38] sm:$0xff]
          %3457 = vset.pattern.permute.xlu0 0
          %3458 = vperm.xlu0 %3457, %v3448
          %v3459 = vpop.permute.xlu0 %3458
          %3462 = vset.pattern.permute.xlu0 0
          %3463 = vperm.xlu0 %3462, %v3449
          %v3464 = vpop.permute.xlu0 %3463
          %3467 = vset.pattern.permute.xlu0 0
          %3468 = vperm.xlu0 %3467, %v3450
          %v3469 = vpop.permute.xlu0 %3468
          %3472 = vset.pattern.permute.xlu0 0
          %3473 = vperm.xlu0 %3472, %v3451
          %v3474 = vpop.permute.xlu0 %3473
          %3477 = vset.pattern.permute.xlu0 0
          %3478 = vperm.xlu0 %3477, %v3452
          %v3479 = vpop.permute.xlu0 %3478
          %3482 = vset.pattern.permute.xlu0 0
          %3483 = vperm.xlu0 %3482, %v3453
          %v3484 = vpop.permute.xlu0 %3483
          %3487 = vset.pattern.permute.xlu0 0
          %3488 = vperm.xlu0 %3487, %v3454
          %v3489 = vpop.permute.xlu0 %3488
          %3492 = vset.pattern.permute.xlu0 0
          %3493 = vperm.xlu0 %3492, %v3455
          %v3494 = vpop.permute.xlu0 %3493
          %vm3496 = vcmask 523264
          %v3498 = vsel %vm3496, %v3440, 0
          %v3501 = vsel %vm3496, %v3441, 0
          %v3504 = vsel %vm3496, %v3442, 0
          %v3507 = vsel %vm3496, %v3443, 0
          %v3510 = vsel %vm3496, %v3444, 0
          %v3513 = vsel %vm3496, %v3445, 0
          %v3516 = vsel %vm3496, %v3446, 0
          %v3519 = vsel %vm3496, %v3447, 0
          %3521 = vmatprep.subr.mxu0 0.0
          %3522 = vmatpush1.msra.mxu0 %v3432
          %3523 = vmatprep.subr.mxu0 0.0
          %3524 = vmatpush1.msra.mxu0 %v3433
          %3525 = vmatprep.subr.mxu0 0.0
          %3526 = vmatpush1.msra.mxu0 %v3434
          %3527 = vmatprep.subr.mxu0 0.0
          %3528 = vmatpush1.msra.mxu0 %v3435
          %3529 = vmatprep.subr.mxu0 0.0
          %3530 = vmatpush1.msra.mxu0 %v3436
          %3531 = vmatprep.subr.mxu0 0.0
          %3532 = vmatpush1.msra.mxu0 %v3437
          %3533 = vmatprep.subr.mxu0 0.0
          %3534 = vmatpush1.msra.mxu0 %v3438
          %3535 = vmatprep.subr.mxu0 0.0
          %3536 = vmatpush1.msra.mxu0 %v3439
          %3537 = vmatprep.subr.mxu0 0.0
          %3538 = vmatpush1.msra.mxu0 0.0
          %3539 = vmatprep.subr.mxu0 0.0
          %3540 = vmatpush1.msra.mxu0 0.0
          %3541 = vmatprep.subr.mxu0 0.0
          %3542 = vmatpush1.msra.mxu0 0.0
          %3543 = vmatprep.subr.mxu0 0.0
          %3544 = vmatpush1.msra.mxu0 0.0
          %3545 = vmatprep.subr.mxu0 0.0
          %3546 = vmatpush1.msra.mxu0 0.0
          %3547 = vmatprep.subr.mxu0 0.0
          %3548 = vmatpush1.msra.mxu0 0.0
          %3549 = vmatprep.subr.mxu0 0.0
          %3550 = vmatpush1.msra.mxu0 0.0
          %3551 = vmatprep.subr.mxu0 0.0
          %3552 = vmatpush1.msra.mxu0 0.0
          %3553 = vmatprep.subr.mxu0 0.0
          %3554 = vmatpush1.msra.mxu0 0.0
          %3555 = vmatprep.subr.mxu0 0.0
          %3556 = vmatpush1.msra.mxu0 0.0
          %3557 = vmatprep.subr.mxu0 0.0
          %3558 = vmatpush1.msra.mxu0 0.0
          %3559 = vmatprep.subr.mxu0 0.0
          %3560 = vmatpush1.msra.mxu0 0.0
          %3561 = vmatprep.subr.mxu0 0.0
          %3562 = vmatpush1.msra.mxu0 0.0
          %3563 = vmatprep.subr.mxu0 0.0
          %3564 = vmatpush1.msra.mxu0 0.0
          %3565 = vmatprep.subr.mxu0 0.0
          %3566 = vmatpush1.msra.mxu0 0.0
          %3567 = vmatprep.subr.mxu0 0.0
          %3568 = vmatpush1.msra.mxu0 0.0
          %3569 = vmatprep.subr.mxu0 0.0
          %3570 = vmatpush1.msra.mxu0 0.0
          %3571 = vmatprep.subr.mxu0 0.0
          %3572 = vmatpush1.msra.mxu0 0.0
          %3573 = vmatprep.subr.mxu0 0.0
          %3574 = vmatpush1.msra.mxu0 0.0
          %3575 = vmatprep.subr.mxu0 0.0
          %3576 = vmatpush1.msra.mxu0 0.0
          %3577 = vmatprep.subr.mxu0 0.0
          %3578 = vmatpush1.msra.mxu0 0.0
          %3579 = vmatprep.subr.mxu0 0.0
          %3580 = vmatpush1.msra.mxu0 0.0
          %3581 = vmatprep.subr.mxu0 0.0
          %3582 = vmatpush1.msra.mxu0 0.0
          %3583 = vmatprep.subr.mxu0 0.0
          %3584 = vmatpush1.msra.mxu0 0.0
          %3585 = vmatprep.mubr.f32.mxu0 0.0
          %3586 = vmatmul.mubr.f32.gmra.mrb[0].mxu0 %v3498
          %v3587 = vpop.f32.mrb[0].mxu0
          %v3588 = vadd.f32 %v3459, %v3587
          %v3589 = vpop.f32.mrb[0].mxu0
          %3590 = vmatprep.mubr.f32.mxu0 0.0
          %3591 = vmatmul.mubr.f32.gmra.mrb[0].mxu0 %v3501
          %v3592 = vpop.f32.mrb[0].mxu0
          %v3593 = vadd.f32 %v3464, %v3592
          %v3594 = vpop.f32.mrb[0].mxu0
          %3595 = vmatprep.mubr.f32.mxu0 0.0
          %3596 = vmatmul.mubr.f32.gmra.mrb[0].mxu0 %v3504
          %v3597 = vpop.f32.mrb[0].mxu0
          %v3598 = vadd.f32 %v3469, %v3597
          %v3599 = vpop.f32.mrb[0].mxu0
          %3600 = vmatprep.mubr.f32.mxu0 0.0
          %3601 = vmatmul.mubr.f32.gmra.mrb[0].mxu0 %v3507
          %v3602 = vpop.f32.mrb[0].mxu0
          %v3603 = vadd.f32 %v3474, %v3602
          %v3604 = vpop.f32.mrb[0].mxu0
          %3605 = vmatprep.mubr.f32.mxu0 0.0
          %3606 = vmatmul.mubr.f32.gmra.mrb[0].mxu0 %v3510
          %v3607 = vpop.f32.mrb[0].mxu0
          %v3608 = vadd.f32 %v3479, %v3607
          %v3609 = vpop.f32.mrb[0].mxu0
          %3610 = vmatprep.mubr.f32.mxu0 0.0
          %3611 = vmatmul.mubr.f32.gmra.mrb[0].mxu0 %v3513
          %v3612 = vpop.f32.mrb[0].mxu0
          %v3613 = vadd.f32 %v3484, %v3612
          %v3614 = vpop.f32.mrb[0].mxu0
          %3615 = vmatprep.mubr.f32.mxu0 0.0
          %3616 = vmatmul.mubr.f32.gmra.mrb[0].mxu0 %v3516
          %v3617 = vpop.f32.mrb[0].mxu0
          %v3618 = vadd.f32 %v3489, %v3617
          %v3619 = vpop.f32.mrb[0].mxu0
          %3620 = vmatprep.mubr.f32.mxu0 0.0
          %3621 = vmatmul.mubr.f32.gmra.mrb[0].mxu0 %v3519
          %v3622 = vpop.f32.mrb[0].mxu0
          %v3623 = vadd.f32 %v3494, %v3622
          %v3624 = vpop.f32.mrb[0].mxu0
          %3625 = vdwg.mxu0
          %v3626 = vmax.f32 %v3588, 0.0
          %v3627 = vmax.f32 %v3593, 0.0
          %v3628 = vmax.f32 %v3598, 0.0
          %v3629 = vmax.f32 %v3603, 0.0
          %v3630 = vmax.f32 %v3608, 0.0
          %v3631 = vmax.f32 %v3613, 0.0
          %v3632 = vmax.f32 %v3618, 0.0
          %v3633 = vmax.f32 %v3623, 0.0
          %v3634 = vld [vmem:[%s5] sm:$0x3]
          %v3635 = vld [vmem:[%s6] sm:$0x3]
          %3637 = vset.pattern.permute.xlu0 0
          %3638 = vperm.xlu0 %3637, %v3635
          %v3639 = vpop.permute.xlu0 %3638
          %v3642 = vsel %vm3496, %v3634, 0
          %3644 = vmatprep.subr.mxu0 0.0
          %3645 = vmatpush1.msra.mxu0 %v3626
          %3646 = vmatprep.subr.mxu0 0.0
          %3647 = vmatpush1.msra.mxu0 %v3627
          %3648 = vmatprep.subr.mxu0 0.0
          %3649 = vmatpush1.msra.mxu0 %v3628
          %3650 = vmatprep.subr.mxu0 0.0
          %3651 = vmatpush1.msra.mxu0 %v3629
          %3652 = vmatprep.subr.mxu0 0.0
          %3653 = vmatpush1.msra.mxu0 %v3630
          %3654 = vmatprep.subr.mxu0 0.0
          %3655 = vmatpush1.msra.mxu0 %v3631
          %3656 = vmatprep.subr.mxu0 0.0
          %3657 = vmatpush1.msra.mxu0 %v3632
          %3658 = vmatprep.subr.mxu0 0.0
          %3659 = vmatpush1.msra.mxu0 %v3633
          %3660 = vmatprep.subr.mxu0 0.0
          %3661 = vmatpush1.msra.mxu0 0.0
          %3662 = vmatprep.subr.mxu0 0.0
          %3663 = vmatpush1.msra.mxu0 0.0
          %3664 = vmatprep.subr.mxu0 0.0
          %3665 = vmatpush1.msra.mxu0 0.0
          %3666 = vmatprep.subr.mxu0 0.0
          %3667 = vmatpush1.msra.mxu0 0.0
          %3668 = vmatprep.subr.mxu0 0.0
          %3669 = vmatpush1.msra.mxu0 0.0
          %3670 = vmatprep.subr.mxu0 0.0
          %3671 = vmatpush1.msra.mxu0 0.0
          %3672 = vmatprep.subr.mxu0 0.0
          %3673 = vmatpush1.msra.mxu0 0.0
          %3674 = vmatprep.subr.mxu0 0.0
          %3675 = vmatpush1.msra.mxu0 0.0
          %3676 = vmatprep.subr.mxu0 0.0
          %3677 = vmatpush1.msra.mxu0 0.0
          %3678 = vmatprep.subr.mxu0 0.0
          %3679 = vmatpush1.msra.mxu0 0.0
          %3680 = vmatprep.subr.mxu0 0.0
          %3681 = vmatpush1.msra.mxu0 0.0
          %3682 = vmatprep.subr.mxu0 0.0
          %3683 = vmatpush1.msra.mxu0 0.0
          %3684 = vmatprep.subr.mxu0 0.0
          %3685 = vmatpush1.msra.mxu0 0.0
          %3686 = vmatprep.subr.mxu0 0.0
          %3687 = vmatpush1.msra.mxu0 0.0
          %3688 = vmatprep.subr.mxu0 0.0
          %3689 = vmatpush1.msra.mxu0 0.0
          %3690 = vmatprep.subr.mxu0 0.0
          %3691 = vmatpush1.msra.mxu0 0.0
          %3692 = vmatprep.subr.mxu0 0.0
          %3693 = vmatpush1.msra.mxu0 0.0
          %3694 = vmatprep.subr.mxu0 0.0
          %3695 = vmatpush1.msra.mxu0 0.0
          %3696 = vmatprep.subr.mxu0 0.0
          %3697 = vmatpush1.msra.mxu0 0.0
          %3698 = vmatprep.subr.mxu0 0.0
          %3699 = vmatpush1.msra.mxu0 0.0
          %3700 = vmatprep.subr.mxu0 0.0
          %3701 = vmatpush1.msra.mxu0 0.0
          %3702 = vmatprep.subr.mxu0 0.0
          %3703 = vmatpush1.msra.mxu0 0.0
          %3704 = vmatprep.subr.mxu0 0.0
          %3705 = vmatpush1.msra.mxu0 0.0
          %3706 = vmatprep.subr.mxu0 0.0
          %3707 = vmatpush1.msra.mxu0 0.0
          %3708 = vmatprep.mubr.f32.mxu0 0.0
          %3709 = vmatmul.mubr.f32.gmra.mrb[0].mxu0 %v3642
          %v3710 = vpop.f32.mrb[0].mxu0
          %v3711 = vadd.f32 %v3639, %v3710
          %v3712 = vpop.f32.mrb[0].mxu0
          %3713 = vdwg.mxu0
          %v3714 = vxor.u32 %v3711, 2147483648
          %v3715 = vmul.f32 %v3714, 1.442695
          %v3716 = vpow.pop %v3715
          %v3717 = vadd.f32 %v3716, 1.0
          %v3718 = vrcp.pop %v3717
          %v3719 = vmul.f32 1.0, %v3718
          %vm3720 = vcmask 58368
          %3721 = vst.msk [vmem:[#allocation8] sm:$0x3] %vm3720, %v3719
        $region68: #{net_forward.1} parent=47 // pred_fallthru
          _
        // Predicated region
        $region69: #{net_forward.1} parent=47 // pred_check
          %p3722 = pneg %p195
        $region70: #{net_forward.1} parent=47 // pred_check_branch
          %3724 = sbr.rel (%p3722) target = $region72
        $region71: #{net_forward.1} parent=47 // pred_region
          %s3726 = ssub.s32 32, 32
          %3727 = vsyncadd [#allocation5], %s3726
          %s3729 = sshll.u32 [#allocation8], 4
          %s3730 = int_to_ptr.vmem [resolvable:$true] %s3729
          %3732 = dma.vmem_to_hbm [thread:$0]  %s3730, 32, %s7, [#allocation5]
        $region72: #{net_forward.1} parent=47 // pred_fallthru
          _
        // Predicated region
        $region73: #{net_forward.1} parent=47 // pred_check
          %p3733 = pneg %p195
        $region74: #{net_forward.1} parent=47 // pred_check_branch
          %3735 = sbr.rel (%p3733) target = $region76
        $region75: #{net_forward.1} parent=47 // pred_region
          %3736 = dma.done [#allocation5], 32
        $region76: #{net_forward.1} parent=47 // pred_fallthru
          _
      $region48: #{net_forward.1} parent=5 // pred_fallthru
        _
      %p3737 = scmp.le.s32.totalorder 2, %s20
      // Predicated region
      $region77: #{net_forward.1} parent=5 // pred_check
        %p3738 = pneg %p3737
      $region78: #{net_forward.1} parent=5 // pred_check_branch
        %3740 = sbr.rel (%p3738) target = $region80
      $region79: #{net_forward.1} parent=5 // pred_region
        %s3741 = ssub.s32 %s20, 2
      $region80: #{net_forward.1} parent=5 // pred_fallthru
        _
    $region6: #{net_forward.1} parent=1 // loop_footer
      %s24 = sadd.s32 1, %s20
    $region7: #{net_forward.1} parent=1 // loop_footer_branch
      %19 = sbr.rel target = $region3
    $region8: #{net_forward.1} parent=1 // loop_exit
      _
    %3742 = vsyncpa [#allocation4], 1
    %s3743 = scalar_lea.sflag [#allocation4], 1
    %3744 = vsyncpa %s3743, 1
    %3745 = vsyncpa [#allocation7], 1
    %s3746 = scalar_lea.sflag [#allocation7], 1
    %3747 = vsyncpa %s3746, 1
    %3748 = vsyncpa [#allocation5], 1
    %s3749 = scalar_lea.sflag [#allocation5], 1
    %3750 = vsyncpa %s3749, 1

</llo_original>
